<compile_context>
chip_gen: v5e
topology: v5e:2x2
jax: 0.10.0
libtpu: 0.0.40
codegen_flags: <defaults>
</compile_context>

<pallas_src>
import functools

import jax
import jax.numpy as jnp
import numpy as np
from jax.experimental import pallas as pl
from jax.experimental.pallas import tpu as pltpu


def _detect_kernel(x_ref, w_ref, c_ref, g_ref, *out_refs, write_raw):
    # 1x1 conv == channel matmul on the MXU (+ bias from const column 0).
    t = jnp.dot(w_ref[...], x_ref[...],
                preferred_element_type=jnp.float32) + c_ref[:, 0:1]
    if write_raw:
        raw_ref, dec_ref = out_refs
        raw_ref[...] = t                       # raw (pre-sigmoid) conv output
    else:
        (dec_ref,) = out_refs

    s = jax.nn.sigmoid(t)                      # EUP

    gx = g_ref[0:1, :]                         # per-pixel grid x, (1, T)
    gy = g_ref[1:2, :]                         # per-pixel grid y, (1, T)

    m1 = c_ref[:, 1:2]                         # per-channel columns, (Cpad, 1)
    m2 = c_ref[:, 2:3]
    c0 = c_ref[:, 3:4]
    cx = c_ref[:, 4:5]
    cy = c_ref[:, 5:6]

    # Folded decode covering xy / wh / rotated / passthrough channels.
    dec_ref[...] = s * (m1 + s * m2) + (cx * gx + cy * gy + c0)


def _round_up(v, m):
    return (v + m - 1) // m * m


def detect_layer(x_nchw, w, b, anchors_layer, stride, nc, rotated, *,
                 need_raw=True, max_tile_hw=1024):
    """One Detect layer.

    Returns (x_out (bs,na,ny,nx,no) or None, z_i (bs, na*ny*nx, no)).
    """
    rot = 1 if rotated else 0
    no = nc + 5 + rot
    na = anchors_layer.shape[0]
    C = na * no
    Cpad = _round_up(C, 128)                    # 255 -> 256
    bs, cin, ny, nx = x_nchw.shape
    HW = ny * nx
    stride_f = float(stride)

    # NCHW, reshaped (free) to (bs, cin, HW) -- no transpose through HBM.
    x3 = x_nchw.reshape(bs, cin, HW)

    # Weight (C, cin) -> zero-padded (Cpad, cin).
    w2 = jnp.pad(w.reshape(C, cin).astype(jnp.float32), ((0, Cpad - C), (0, 0)))

    # Per-channel decode constants (channel c = a*no + k), folded form.
    k = np.arange(C) % no
    a = np.arange(C) // no
    is_xy = jnp.asarray(k < 2, jnp.float32)
    is_w = jnp.asarray(k == 2, jnp.float32)
    is_h = jnp.asarray(k == 3, jnp.float32)
    is_rt = jnp.asarray((k == 4) & bool(rotated), jnp.float32)
    sel_x = jnp.asarray(k == 0, jnp.float32)
    sel_y = jnp.asarray(k == 1, jnp.float32)
    other = 1.0 - is_xy - is_w - is_h - is_rt

    anch = jnp.asarray(anchors_layer, jnp.float32)      # (na, 2)
    aw = anch[a, 0]                                     # anchor w per channel
    ah = anch[a, 1]                                     # anchor h per channel

    bias = b.reshape(C).astype(jnp.float32)
    m1 = 2.0 * stride_f * is_xy + 4.0 * is_rt + other
    m2 = 4.0 * (is_w * aw + is_h * ah)
    c0 = -0.5 * stride_f * is_xy - 2.0 * is_rt
    cx = stride_f * sel_x
    cy = stride_f * sel_y
    const = jnp.stack([bias, m1, m2, c0, cx, cy], axis=1)       # (C, 6)
    const = jnp.pad(const, ((0, Cpad - C), (0, 0)))             # (Cpad, 6)

    # Tiny batch-independent grid coordinates: row 0 = gx, row 1 = gy.
    hw = np.arange(HW)
    g = jnp.asarray(np.stack([(hw % nx).astype(np.float32),
                              (hw // nx).astype(np.float32)], axis=0))  # (2, HW)

    # Pixel tiling: whole image if it fits, else 128-aligned tiles + cdiv grid.
    tile_hw = HW if HW <= max_tile_hw else max_tile_hw
    grid = (bs, pl.cdiv(HW, tile_hw))

    out_spec = pl.BlockSpec((None, Cpad, tile_hw), lambda bi, j: (bi, 0, j))
    dec_sds = jax.ShapeDtypeStruct((bs, Cpad, HW), jnp.float32)
    raw_sds = jax.ShapeDtypeStruct((bs, Cpad, HW), jnp.float32)
    n_out = 2 if need_raw else 1

    cost = pl.CostEstimate(
        flops=int(2 * bs * HW * cin * Cpad + 8 * bs * HW * Cpad),
        transcendentals=int(bs * HW * Cpad),
        bytes_accessed=int(4 * (bs * cin * HW + Cpad * cin + Cpad * 6 + 2 * HW
                                + n_out * bs * Cpad * HW)),
    )

    outs = pl.pallas_call(
        functools.partial(_detect_kernel, write_raw=need_raw),
        out_shape=(raw_sds, dec_sds) if need_raw else (dec_sds,),
        grid=grid,
        in_specs=[
            pl.BlockSpec((None, cin, tile_hw), lambda bi, j: (bi, 0, j)),  # x
            pl.BlockSpec((Cpad, cin), lambda bi, j: (0, 0)),               # weight
            pl.BlockSpec((Cpad, 6), lambda bi, j: (0, 0)),                 # consts
            pl.BlockSpec((2, tile_hw), lambda bi, j: (0, j)),              # gx/gy
        ],
        out_specs=(out_spec, out_spec) if need_raw else (out_spec,),
        compiler_params=pltpu.CompilerParams(
            dimension_semantics=("parallel", "parallel")),
        cost_estimate=cost,
    )(x3, w2, const, g)

    if need_raw:
        raw_full, dec_full = outs
    else:
        (dec_full,) = outs
        raw_full = None

    # Back to PyTorch conventions (single permute per needed output).
    dec5 = dec_full[:, :C, :].reshape(bs, na, no, ny, nx).transpose(0, 1, 3, 4, 2)
    z_i = dec5.reshape(bs, na * ny * nx, no)
    if need_raw:
        x_out = raw_full[:, :C, :].reshape(bs, na, no, ny, nx).transpose(0, 1, 3, 4, 2)
        return x_out, z_i
    return None, z_i


def detect_forward(xs, ws, bs_, anchors, strides, nc, rotated=False, need_x=True):
    """Inference path of Detect.forward: returns (cat(z, 1), x_list)."""
    x_out, z = [], []
    for i in range(len(xs)):
        xo, zi = detect_layer(xs[i], ws[i], bs_[i], anchors[i], strides[i],
                              nc, rotated, need_raw=need_x)
        x_out.append(xo)
        z.append(zi)
    return jnp.concatenate(z, axis=1), (x_out if need_x else None)


def detect_reference(xs, ws, bs_, anchors, strides, nc, rotated=False):
    """Pure-JAX reference mirroring the PyTorch forward (inference path)."""
    rot = 1 if rotated else 0
    no = nc + 5 + rot
    z, x_out = [], []
    for i, x in enumerate(xs):
        b, cin, ny, nx = x.shape
        na = anchors[i].shape[0]
        conv = jnp.einsum('bchw,oc->bohw', x, ws[i].reshape(na * no, cin)) \
            + bs_[i][None, :, None, None]
        xo = conv.reshape(b, na, no, ny, nx).transpose(0, 1, 3, 4, 2)
        y = jax.nn.sigmoid(xo)
        yv, xv = jnp.meshgrid(jnp.arange(ny), jnp.arange(nx), indexing='ij')
        grid = jnp.stack([xv, yv], -1).reshape(1, 1, ny, nx, 2).astype(jnp.float32)
        xy = (y[..., 0:2] * 2.0 - 0.5 + grid) * strides[i]
        ag = anchors[i].reshape(1, na, 1, 1, 2)
        wh = (y[..., 2:4] * 2.0) ** 2 * ag
        rest = y[..., 4:]
        if rotated:
            rest = jnp.concatenate([y[..., 4:5] * 4.0 - 2.0, y[..., 5:]], -1)
        yy = jnp.concatenate([xy, wh, rest], -1)
        z.append(yy.reshape(b, -1, no))
        x_out.append(xo)
    return jnp.concatenate(z, 1), x_out


if __name__ == "__main__":
    key = jax.random.PRNGKey(0)

    # Module hyper-params (Detect defaults: nc=80, rotated=False)
    nc = 80
    rotated = False
    no = nc + 5 + (1 if rotated else 0)
    anchors_cfg = ((10, 13, 16, 30, 33, 23),
                   (30, 61, 62, 45, 59, 119))          # nl=2, na=3
    nl = len(anchors_cfg)
    na = len(anchors_cfg[0]) // 2
    anchors = [jnp.asarray(a, dtype=jnp.float32).reshape(na, 2) for a in anchors_cfg]
    strides = [8.0, 16.0]
    ch = (8, 16)                                       # input channels per layer
    spatial = [(16, 16), (8, 8)]                       # (ny, nx) per layer
    bs = 2

    # Deterministic parameters (Conv2d(x, no*na, 1): weight (no*na, x, 1, 1), bias (no*na,))
    ws, bs_params, xs = [], [], []
    for i in range(nl):
        key, kw, kb, kx = jax.random.split(key, 4)
        fan_in = ch[i]
        bound = 1.0 / np.sqrt(fan_in)
        ws.append(jax.random.uniform(kw, (no * na, ch[i], 1, 1),
                                     minval=-bound, maxval=bound, dtype=jnp.float32))
        bs_params.append(jax.random.uniform(kb, (no * na,),
                                            minval=-bound, maxval=bound, dtype=jnp.float32))
        ny, nx = spatial[i]
        xs.append(jax.random.normal(kx, (bs, ch[i], ny, nx), dtype=jnp.float32))

    # Full forward (z + x), matching the PyTorch inference return.
    z_cat, x_list = detect_forward(xs, ws, bs_params, anchors, strides, nc, rotated)
    jax.block_until_ready(z_cat)
    for xo in x_list:
        jax.block_until_ready(xo)

    # Optimized z-only path (skips the raw-output store stream).
    z_only, _ = detect_forward(xs, ws, bs_params, anchors, strides, nc, rotated,
                               need_x=False)
    jax.block_until_ready(z_only)

    # Correctness check vs pure-JAX reference.
    z_ref, x_ref = detect_reference(xs, ws, bs_params, anchors, strides, nc, rotated)
    np.testing.assert_allclose(np.asarray(z_cat), np.asarray(z_ref), rtol=2e-3, atol=2e-3)
    np.testing.assert_allclose(np.asarray(z_only), np.asarray(z_ref), rtol=2e-3, atol=2e-3)
    for a_, b_ in zip(x_list, x_ref):
        np.testing.assert_allclose(np.asarray(a_), np.asarray(b_), rtol=2e-3, atol=2e-3)

    assert z_cat.shape == (bs, sum(na * ny * nx for (ny, nx) in spatial), no)
    assert x_list[0].shape == (bs, na, spatial[0][0], spatial[0][1], no)

    print("KERNEL_OK")
</pallas_src>

<mosaic_0001>
module attributes {stable_mosaic.version = 11 : i64} {
  func.func @_detect_kernel(%arg0: i32, %arg1: i32, %arg2: memref<1x8x256xf32, #tpu.memory_space<vmem>>, %arg3: memref<256x8xf32, #tpu.memory_space<vmem>>, %arg4: memref<256x6xf32, #tpu.memory_space<vmem>>, %arg5: memref<2x256xf32, #tpu.memory_space<vmem>>, %arg6: memref<1x256x256xf32, #tpu.memory_space<vmem>>, %arg7: memref<1x256x256xf32, #tpu.memory_space<vmem>>) attributes {dimension_semantics = [#tpu.dimension_semantics<parallel>, #tpu.dimension_semantics<parallel>], iteration_bounds = array<i64: 2, 1>, scalar_prefetch = 0 : i64, scratch_operands = 0 : i64, tpu.core_type = #tpu.core_type<tc>, window_params = [{transform_indices = @transform_0, window_bounds = array<i64: 1, 8, 256>}, {pipeline_mode = #tpu.pipeline_mode<synchronous>, transform_indices = @transform_1, window_bounds = array<i64: 256, 8>}, {pipeline_mode = #tpu.pipeline_mode<synchronous>, transform_indices = @transform_2, window_bounds = array<i64: 256, 6>}, {transform_indices = @transform_3, window_bounds = array<i64: 2, 256>}, {transform_indices = @transform_4, window_bounds = array<i64: 1, 256, 256>}, {transform_indices = @transform_5, window_bounds = array<i64: 1, 256, 256>}]} {
    %c0 = arith.constant 0 : index
    %c0_0 = arith.constant 0 : index
    %0 = vector.load %arg3[%c0, %c0_0] : memref<256x8xf32, #tpu.memory_space<vmem>>, vector<256x8xf32>
    %c0_1 = arith.constant 0 : index
    %c0_2 = arith.constant 0 : index
    %c0_3 = arith.constant 0 : index
    %1 = vector.load %arg2[%c0_1, %c0_2, %c0_3] : memref<1x8x256xf32, #tpu.memory_space<vmem>>, vector<1x8x256xf32>
    %2 = vector.shape_cast %1 : vector<1x8x256xf32> to vector<8x256xf32>
    %cst = arith.constant dense<0.000000e+00> : vector<256x256xf32>
    %3 = tpu.matmul %0, %2, %cst {dimension_numbers = #tpu.dot_dimension_numbers<[1], [0], [0], [1], [0, 0, 1, 1], [], []>} : vector<256x8xf32>, vector<8x256xf32>, vector<256x256xf32> -> vector<256x256xf32>
    %c0_4 = arith.constant 0 : index
    %c0_5 = arith.constant 0 : index
    %4 = vector.load %arg4[%c0_4, %c0_5] : memref<256x6xf32, #tpu.memory_space<vmem>>, vector<256x1xf32>
    %5 = vector.broadcast %4 : vector<256x1xf32> to vector<256x256xf32>
    %6 = arith.addf %3, %5 : vector<256x256xf32>
    %c0_6 = arith.constant 0 : index
    %c0_7 = arith.constant 0 : index
    %c0_8 = arith.constant 0 : index
    %7 = vector.load %arg6[%c0_6, %c0_7, %c0_8] : memref<1x256x256xf32, #tpu.memory_space<vmem>>, vector<1x256x256xf32>
    %8 = vector.shape_cast %7 : vector<1x256x256xf32> to vector<256x256xf32>
    %9 = vector.shape_cast %6 : vector<256x256xf32> to vector<1x256x256xf32>
    tpu.vector_store %arg6[%c0_6, %c0_7, %c0_8], %9 {strides = array<i32>} : memref<1x256x256xf32, #tpu.memory_space<vmem>>, vector<1x256x256xf32>,
    %10 = arith.negf %6 : vector<256x256xf32>
    %11 = math.exp %10 : vector<256x256xf32>
    %cst_9 = arith.constant 1.000000e+00 : f32
    %12 = vector.broadcast %cst_9 : f32 to vector<256x256xf32>
    %13 = arith.addf %12, %11 : vector<256x256xf32>
    %14 = arith.divf %12, %13 : vector<256x256xf32>
    %c0_10 = arith.constant 0 : index
    %c0_11 = arith.constant 0 : index
    %15 = vector.load %arg5[%c0_10, %c0_11] : memref<2x256xf32, #tpu.memory_space<vmem>>, vector<1x256xf32>
    %c1 = arith.constant 1 : index
    %c0_12 = arith.constant 0 : index
    %16 = vector.load %arg5[%c1, %c0_12] : memref<2x256xf32, #tpu.memory_space<vmem>>, vector<1x256xf32>
    %c0_13 = arith.constant 0 : index
    %c1_14 = arith.constant 1 : index
    %17 = vector.load %arg4[%c0_13, %c1_14] : memref<256x6xf32, #tpu.memory_space<vmem>>, vector<256x1xf32>
    %c0_15 = arith.constant 0 : index
    %c2 = arith.constant 2 : index
    %18 = vector.load %arg4[%c0_15, %c2] : memref<256x6xf32, #tpu.memory_space<vmem>>, vector<256x1xf32>
    %c0_16 = arith.constant 0 : index
    %c3 = arith.constant 3 : index
    %19 = vector.load %arg4[%c0_16, %c3] : memref<256x6xf32, #tpu.memory_space<vmem>>, vector<256x1xf32>
    %c0_17 = arith.constant 0 : index
    %c4 = arith.constant 4 : index
    %20 = vector.load %arg4[%c0_17, %c4] : memref<256x6xf32, #tpu.memory_space<vmem>>, vector<256x1xf32>
    %c0_18 = arith.constant 0 : index
    %c5 = arith.constant 5 : index
    %21 = vector.load %arg4[%c0_18, %c5] : memref<256x6xf32, #tpu.memory_space<vmem>>, vector<256x1xf32>
    %22 = vector.broadcast %18 : vector<256x1xf32> to vector<256x256xf32>
    %23 = arith.mulf %14, %22 : vector<256x256xf32>
    %24 = vector.broadcast %17 : vector<256x1xf32> to vector<256x256xf32>
    %25 = arith.addf %24, %23 : vector<256x256xf32>
    %26 = arith.mulf %14, %25 : vector<256x256xf32>
    %27 = vector.broadcast %20 : vector<256x1xf32> to vector<256x256xf32>
    %28 = vector.broadcast %15 : vector<1x256xf32> to vector<256x256xf32>
    %29 = arith.mulf %27, %28 : vector<256x256xf32>
    %30 = vector.broadcast %21 : vector<256x1xf32> to vector<256x256xf32>
    %31 = vector.broadcast %16 : vector<1x256xf32> to vector<256x256xf32>
    %32 = arith.mulf %30, %31 : vector<256x256xf32>
    %33 = arith.addf %29, %32 : vector<256x256xf32>
    %34 = vector.broadcast %19 : vector<256x1xf32> to vector<256x256xf32>
    %35 = arith.addf %33, %34 : vector<256x256xf32>
    %36 = arith.addf %26, %35 : vector<256x256xf32>
    %c0_19 = arith.constant 0 : index
    %c0_20 = arith.constant 0 : index
    %c0_21 = arith.constant 0 : index
    %37 = vector.load %arg7[%c0_19, %c0_20, %c0_21] : memref<1x256x256xf32, #tpu.memory_space<vmem>>, vector<1x256x256xf32>
    %38 = vector.shape_cast %37 : vector<1x256x256xf32> to vector<256x256xf32>
    %39 = vector.shape_cast %36 : vector<256x256xf32> to vector<1x256x256xf32>
    tpu.vector_store %arg7[%c0_19, %c0_20, %c0_21], %39 {strides = array<i32>} : memref<1x256x256xf32, #tpu.memory_space<vmem>>, vector<1x256x256xf32>,
    return
  }
  func.func @transform_0(%arg0: i32, %arg1: i32) -> (i32, i32, i32) {
    %c0_i32 = arith.constant 0 : i32
    %c0_i32_0 = arith.constant 0 : i32
    return %arg0, %c0_i32, %arg1 : i32, i32, i32
  }
  func.func @transform_1(%arg0: i32, %arg1: i32) -> (i32, i32) {
    %c0_i32 = arith.constant 0 : i32
    %c0_i32_0 = arith.constant 0 : i32
    %c0_i32_1 = arith.constant 0 : i32
    return %c0_i32, %c0_i32_0 : i32, i32
  }
  func.func @transform_2(%arg0: i32, %arg1: i32) -> (i32, i32) {
    %c0_i32 = arith.constant 0 : i32
    %c0_i32_0 = arith.constant 0 : i32
    %c0_i32_1 = arith.constant 0 : i32
    return %c0_i32, %c0_i32_0 : i32, i32
  }
  func.func @transform_3(%arg0: i32, %arg1: i32) -> (i32, i32) {
    %c0_i32 = arith.constant 0 : i32
    %c0_i32_0 = arith.constant 0 : i32
    return %c0_i32, %arg1 : i32, i32
  }
  func.func @transform_4(%arg0: i32, %arg1: i32) -> (i32, i32, i32) {
    %c0_i32 = arith.constant 0 : i32
    %c0_i32_0 = arith.constant 0 : i32
    return %arg0, %c0_i32, %arg1 : i32, i32, i32
  }
  func.func @transform_5(%arg0: i32, %arg1: i32) -> (i32, i32, i32) {
    %c0_i32 = arith.constant 0 : i32
    %c0_i32_0 = arith.constant 0 : i32
    return %arg0, %c0_i32, %arg1 : i32, i32, i32
  }
}

</mosaic_0001>

<llo_original>
// kernel: tpu_custom_call.1
$region0: #{tpu_custom_call.1}
  #allocation0 [shape = 'u32[]', space=smem, size = 0x4, offset = 0x4, fixed_abs, tag = 'smem constant byte address 0x4 - core index']
  #allocation1 [shape = 'u32[72,128]{1,0:T(1,128)}', space=vmem, size = 0x9000, scoped, tag = 'internal scratch']
  %s0 = inlined_call_operand.vmem [shape: f32[2,8,256], index: 0, kind: input, shape index: {}]
  %s1 = inlined_call_operand.vmem [shape: f32[256,8], index: 1, kind: input, shape index: {}]
  %s2 = inlined_call_operand.vmem [shape: f32[256,6], index: 2, kind: input, shape index: {}]
  %s3 = inlined_call_operand.vmem [shape: f32[2,256], index: 3, kind: input, shape index: {}]
  %s4 = inlined_call_operand.hbm [shape: f32[2,256,256], index: 4, kind: output, shape index: {0}]
  %s5 = inlined_call_operand.hbm [shape: f32[2,256,256], index: 5, kind: output, shape index: {1}]
  %6 = xla_tuple %s4, %s5
  %s7 = sld [smem:[#allocation0]]
  $region57: #{tpu_custom_call.1} parent=0
    _
  %s9 = ssub.s32 1, %s7
  %s10 = scalar_select 0, %s9, %s7
  $region1: #{tpu_custom_call.1} parent=0
    #allocation2 [shape = 'u8[524288]{0}', space=vmem, size = 0x80000, scoped, tag = 'output window, operand 0']
    #allocation3 [shape = 's32[2]{0}', space=sflag, size = 0x8, scoped, tag = 'scoped memory for tpu_custom_call.1']
    #allocation4 [shape = 'u8[524288]{0}', space=vmem, size = 0x80000, scoped, tag = 'output window, operand 1']
    #allocation5 [shape = 's32[2]{0}', space=sflag, size = 0x8, scoped, tag = 'scoped memory for tpu_custom_call.1']
    %11 = vsyncpa [#allocation3], 0
    %s12 = scalar_lea.sflag [#allocation3], 1
    %13 = vsyncpa %s12, 0
    %14 = vsyncpa [#allocation5], 0
    %s15 = scalar_lea.sflag [#allocation5], 1
    %16 = vsyncpa %s15, 0
    loop: start=0, step=1, limit=4
    $region2: #{tpu_custom_call.1} parent=1 // loop_pre_header
      _
    $region3: #{tpu_custom_call.1} parent=1 // loop_header
      %s18 = sphi 0, %s22
      %p19 = scmp.ge.s32.totalorder %s18, 4
      %s25 = sphi 0, %s37
      %s26 = sphi 0, %s33
      %s27 = sphi 0, %s25
      %s28 = sphi 0, %s26
      %s29 = sphi 0, %s27
      %s30 = sphi 0, %s28
      %s42 = sphi 0, %s44
      %s45 = sphi 0, %s42
      %s46 = sphi 0, %s45
      %s62 = sphi 0, %s46
      %s66 = sphi 0, %s66
      %s68 = sphi 0, %s66
      %s69 = sphi 0, %s68
      %s83 = sphi 0, %s69
      %s87 = sphi 0, %s87
      %s89 = sphi 0, %s87
      %s90 = sphi 0, %s89
      %s104 = sphi 0, %s90
      %s110 = sphi 0, %s112
      %s113 = sphi 0, %s110
      %s114 = sphi 0, %s113
      %s130 = sphi 0, %s114
      %s138 = sphi 0, %s140
      %s141 = sphi 0, %s138
      %s142 = sphi 0, %s141
      %s158 = sphi 0, %s142
      %s166 = sphi 0, %s168
      %s169 = sphi 0, %s166
      %s170 = sphi 0, %s169
      %s186 = sphi 0, %s170
    $region4: #{tpu_custom_call.1} parent=1 // loop_header_branch
      %21 = sbr.rel (%p19) target = $region8
    $region5: #{tpu_custom_call.1} parent=1 // loop_body
      %s23 = ssub.s32 %s18, 1
      %s24 = ssub.s32 %s18, 2
      %s31 = sadd.s32 1, %s26
      %p32 = scmp.ge.s32.totalorder %s31, 1
      %s33 = scalar_select %p32, 0, %s31
      %s34 = sadd.s32 1, %s25
      %s35 = scalar_select %p32, %s34, %s25
      %p36 = scmp.ge.s32.totalorder %s35, 2
      %s37 = scalar_select %p36, 0, %s35
      %s38 = ssub.s32 %s25, %s37
      %s39 = ssub.s32 %s26, %s33
      %s40 = sor.u32 %s38, %s39
      %p41 = scmp.eq.s32.totalorder %s40, 0
      %s43 = sadd.s32 %s42, 1
      %s44 = scalar_select %p41, %s42, %s43
      %p47 = pneg %p41
      %p48 = scmp.eq.s32.totalorder %s18, 1
      %p49 = por %p47, %p48
      %p50 = scmp.ne.s32.totalorder %s42, %s45
      %p51 = scmp.eq.s32.totalorder %s18, 0
      %p52 = por %p50, %p51
      %p53 = scmp.ne.s32.totalorder %s42, %s45
      %p54 = scmp.eq.s32.totalorder %s23, 1
      %p55 = por %p53, %p54
      %p56 = scmp.ne.s32.totalorder %s45, %s46
      %p57 = scmp.eq.s32.totalorder %s23, 0
      %p58 = por %p56, %p57
      %p59 = scmp.ne.s32.totalorder %s45, %s46
      %p60 = scmp.eq.s32.totalorder %s24, 1
      %p61 = por %p59, %p60
      %p63 = scmp.ne.s32.totalorder %s46, %s62
      %p64 = scmp.eq.s32.totalorder %s24, 0
      %p65 = por %p63, %p64
      %s67 = sadd.s32 %s66, 1
      %p70 = scmp.eq.s32.totalorder %s18, 1
      %p71 = scmp.ne.s32.totalorder %s66, %s68
      %p72 = scmp.eq.s32.totalorder %s18, 0
      %p73 = por %p71, %p72
      %p74 = scmp.ne.s32.totalorder %s66, %s68
      %p75 = scmp.eq.s32.totalorder %s23, 1
      %p76 = por %p74, %p75
      %p77 = scmp.ne.s32.totalorder %s68, %s69
      %p78 = scmp.eq.s32.totalorder %s23, 0
      %p79 = por %p77, %p78
      %p80 = scmp.ne.s32.totalorder %s68, %s69
      %p81 = scmp.eq.s32.totalorder %s24, 1
      %p82 = por %p80, %p81
      %p84 = scmp.ne.s32.totalorder %s69, %s83
      %p85 = scmp.eq.s32.totalorder %s24, 0
      %p86 = por %p84, %p85
      %s88 = sadd.s32 %s87, 1
      %p91 = scmp.eq.s32.totalorder %s18, 1
      %p92 = scmp.ne.s32.totalorder %s87, %s89
      %p93 = scmp.eq.s32.totalorder %s18, 0
      %p94 = por %p92, %p93
      %p95 = scmp.ne.s32.totalorder %s87, %s89
      %p96 = scmp.eq.s32.totalorder %s23, 1
      %p97 = por %p95, %p96
      %p98 = scmp.ne.s32.totalorder %s89, %s90
      %p99 = scmp.eq.s32.totalorder %s23, 0
      %p100 = por %p98, %p99
      %p101 = scmp.ne.s32.totalorder %s89, %s90
      %p102 = scmp.eq.s32.totalorder %s24, 1
      %p103 = por %p101, %p102
      %p105 = scmp.ne.s32.totalorder %s90, %s104
      %p106 = scmp.eq.s32.totalorder %s24, 0
      %p107 = por %p105, %p106
      %s108 = ssub.s32 %s26, %s33
      %p109 = scmp.eq.s32.totalorder %s108, 0
      %s111 = sadd.s32 %s110, 1
      %s112 = scalar_select %p109, %s110, %s111
      %p115 = pneg %p109
      %p116 = scmp.eq.s32.totalorder %s18, 1
      %p117 = por %p115, %p116
      %p118 = scmp.ne.s32.totalorder %s110, %s113
      %p119 = scmp.eq.s32.totalorder %s18, 0
      %p120 = por %p118, %p119
      %p121 = scmp.ne.s32.totalorder %s110, %s113
      %p122 = scmp.eq.s32.totalorder %s23, 1
      %p123 = por %p121, %p122
      %p124 = scmp.ne.s32.totalorder %s113, %s114
      %p125 = scmp.eq.s32.totalorder %s23, 0
      %p126 = por %p124, %p125
      %p127 = scmp.ne.s32.totalorder %s113, %s114
      %p128 = scmp.eq.s32.totalorder %s24, 1
      %p129 = por %p127, %p128
      %p131 = scmp.ne.s32.totalorder %s114, %s130
      %p132 = scmp.eq.s32.totalorder %s24, 0
      %p133 = por %p131, %p132
      %s134 = ssub.s32 %s25, %s37
      %s135 = ssub.s32 %s26, %s33
      %s136 = sor.u32 %s134, %s135
      %p137 = scmp.eq.s32.totalorder %s136, 0
      %s139 = sadd.s32 %s138, 1
      %s140 = scalar_select %p137, %s138, %s139
      %p143 = pneg %p137
      %p144 = scmp.eq.s32.totalorder %s18, 1
      %p145 = por %p143, %p144
      %p146 = scmp.ne.s32.totalorder %s138, %s141
      %p147 = scmp.eq.s32.totalorder %s18, 0
      %p148 = por %p146, %p147
      %p149 = scmp.ne.s32.totalorder %s138, %s141
      %p150 = scmp.eq.s32.totalorder %s23, 1
      %p151 = por %p149, %p150
      %p152 = scmp.ne.s32.totalorder %s141, %s142
      %p153 = scmp.eq.s32.totalorder %s23, 0
      %p154 = por %p152, %p153
      %p155 = scmp.ne.s32.totalorder %s141, %s142
      %p156 = scmp.eq.s32.totalorder %s24, 1
      %p157 = por %p155, %p156
      %p159 = scmp.ne.s32.totalorder %s142, %s158
      %p160 = scmp.eq.s32.totalorder %s24, 0
      %p161 = por %p159, %p160
      %s162 = ssub.s32 %s25, %s37
      %s163 = ssub.s32 %s26, %s33
      %s164 = sor.u32 %s162, %s163
      %p165 = scmp.eq.s32.totalorder %s164, 0
      %s167 = sadd.s32 %s166, 1
      %s168 = scalar_select %p165, %s166, %s167
      %p171 = pneg %p165
      %p172 = scmp.eq.s32.totalorder %s18, 1
      %p173 = por %p171, %p172
      %p174 = scmp.ne.s32.totalorder %s166, %s169
      %p175 = scmp.eq.s32.totalorder %s18, 0
      %p176 = por %p174, %p175
      %p177 = scmp.ne.s32.totalorder %s166, %s169
      %p178 = scmp.eq.s32.totalorder %s23, 1
      %p179 = por %p177, %p178
      %p180 = scmp.ne.s32.totalorder %s169, %s170
      %p181 = scmp.eq.s32.totalorder %s23, 0
      %p182 = por %p180, %p181
      %p183 = scmp.ne.s32.totalorder %s169, %s170
      %p184 = scmp.eq.s32.totalorder %s24, 1
      %p185 = por %p183, %p184
      %p187 = scmp.ne.s32.totalorder %s170, %s186
      %p188 = scmp.eq.s32.totalorder %s24, 0
      %p189 = por %p187, %p188
      %p190 = scmp.le.s32.totalorder 1, %s18
      %p191 = scmp.lt.s32.totalorder %s18, 3
      %p192 = pnand %p190, %p191
      %p193 = pneg %p192
      // Predicated region
      $region9: #{tpu_custom_call.1} parent=5 // pred_check
        _
      $region10: #{tpu_custom_call.1} parent=5 // pred_check_branch
        %195 = sbr.rel (%p192) target = $region12
      $region11: #{tpu_custom_call.1} parent=5 // pred_region
        %s196 = ssub.s32 %s18, 1
        // Predicated region
        $region13: #{tpu_custom_call.1} parent=11 // pred_check
          %p197 = pneg %p79
        $region14: #{tpu_custom_call.1} parent=11 // pred_check_branch
          %199 = sbr.rel (%p197) target = $region16
        $region15: #{tpu_custom_call.1} parent=11 // pred_region
          _
        $region16: #{tpu_custom_call.1} parent=11 // pred_fallthru
          _
        // Predicated region
        $region17: #{tpu_custom_call.1} parent=11 // pred_check
          %p200 = pneg %p100
        $region18: #{tpu_custom_call.1} parent=11 // pred_check_branch
          %202 = sbr.rel (%p200) target = $region20
        $region19: #{tpu_custom_call.1} parent=11 // pred_region
          _
        $region20: #{tpu_custom_call.1} parent=11 // pred_fallthru
          _
        // Predicated region
        $region21: #{tpu_custom_call.1} parent=11 // pred_check
          %p203 = pneg %p126
        $region22: #{tpu_custom_call.1} parent=11 // pred_check_branch
          %205 = sbr.rel (%p203) target = $region24
        $region23: #{tpu_custom_call.1} parent=11 // pred_region
          %s206 = smul.u32 2, %s28
          %p207 = scmp.lt.s32.totalorder %s206, 1
          %s208 = scalar_select %p207, %s206, 1
          %s209 = smul.addr %s208, 2
          %s210 = scalar_lea.vmem %s3, %s209
          %s211 = smul.u32 2, %s28
        $region24: #{tpu_custom_call.1} parent=11 // pred_fallthru
          _
      $region12: #{tpu_custom_call.1} parent=5 // pred_fallthru
        _
      %p212 = scmp.lt.s32.totalorder %s18, 2
      // Predicated region
      $region25: #{tpu_custom_call.1} parent=5 // pred_check
        %p213 = pneg %p212
      $region26: #{tpu_custom_call.1} parent=5 // pred_check_branch
        %215 = sbr.rel (%p213) target = $region28
      $region27: #{tpu_custom_call.1} parent=5 // pred_region
        // Predicated region
        $region29: #{tpu_custom_call.1} parent=27 // pred_check
          %p216 = pneg %p52
        $region30: #{tpu_custom_call.1} parent=27 // pred_check_branch
          %218 = sbr.rel (%p216) target = $region32
        $region31: #{tpu_custom_call.1} parent=27 // pred_region
          %s219 = smul.u32 2, %s26
          %p220 = scmp.lt.s32.totalorder %s25, 1
          %s221 = scalar_select %p220, %s25, 1
          %p222 = scmp.lt.s32.totalorder %s219, 1
          %s223 = scalar_select %p222, %s219, 1
          %s224 = smul.addr %s221, 2
          %s225 = sadd.s32 %s223, %s224
          %s226 = smul.addr %s225, 8
          %s227 = scalar_lea.vmem %s0, %s226
          %s228 = smul.u32 2, %s26
        $region32: #{tpu_custom_call.1} parent=27 // pred_fallthru
          _
      $region28: #{tpu_custom_call.1} parent=5 // pred_fallthru
        _
      %p229 = scmp.le.s32.totalorder 1, %s18
      %p230 = scmp.lt.s32.totalorder %s18, 3
      %p231 = pnand %p229, %p230
      %p232 = pneg %p231
      // Predicated region
      $region33: #{tpu_custom_call.1} parent=5 // pred_check
        _
      $region34: #{tpu_custom_call.1} parent=5 // pred_check_branch
        %234 = sbr.rel (%p231) target = $region36
      $region35: #{tpu_custom_call.1} parent=5 // pred_region
        %s235 = ssub.s32 %s18, 1
        %s236 = smul.u32 2, %s28
        %p237 = scmp.lt.s32.totalorder %s27, 1
        %s238 = scalar_select %p237, %s27, 1
        %p239 = scmp.lt.s32.totalorder %s236, 1
        %s240 = scalar_select %p239, %s236, 1
        %s241 = smul.addr %s238, 2
        %s242 = sadd.s32 %s240, %s241
        %s243 = smul.addr %s242, 8
        %s244 = scalar_lea.vmem %s0, %s243
        %p245 = pneg %p58
        %p246 = pneg %p55
        %p247 = pneg %p79
        %p248 = pneg %p76
        %p249 = pneg %p100
        %p250 = pneg %p97
        %s251 = smul.u32 2, %s28
        %p252 = scmp.lt.s32.totalorder %s251, 1
        %s253 = scalar_select %p252, %s251, 1
        %s254 = smul.addr %s253, 2
        %s255 = scalar_lea.vmem %s3, %s254
        %p256 = pneg %p126
        %p257 = pneg %p123
        %p258 = pneg %p154
        %p259 = pneg %p151
        %s260 = sand.u32 %s141, 1
        %s261 = scalar_lea.sflag [#allocation3], %s260
        %s262 = sand.u32 %s141, 1
        %s263 = smul.addr %s262, 512
        %s264 = scalar_lea.vmem [#allocation2], %s263
        %p265 = pneg %p182
        %p266 = pneg %p179
        %s267 = sand.u32 %s169, 1
        %s268 = scalar_lea.sflag [#allocation5], %s267
        %s269 = sand.u32 %s169, 1
        %s270 = smul.addr %s269, 512
        %s271 = scalar_lea.vmem [#allocation4], %s270
        %s272 = smul.u32 2, %s28
        %p273 = scmp.lt.s32.totalorder %s27, 1
        %s274 = scalar_select %p273, %s27, 1
        %p275 = scmp.lt.s32.totalorder %s272, 1
        %s276 = scalar_select %p275, %s272, 1
        %s277 = smul.addr %s274, 2
        %s278 = sadd.s32 %s276, %s277
        %s279 = smul.addr %s278, 8
        %s280 = scalar_lea.vmem %s0, %s279
        %s281 = smul.u32 2, %s28
        %s282 = smul.u32 2, %s28
        %p283 = scmp.lt.s32.totalorder %s282, 1
        %s284 = scalar_select %p283, %s282, 1
        %s285 = smul.addr %s284, 2
        %s286 = scalar_lea.vmem %s3, %s285
        %s287 = smul.u32 2, %s28
        %s288 = smul.u32 2, %s28
        %s289 = smul.u32 2, %s28
        %v290 = vld [vmem:[%s1] sm:$0xff]
        %v291 = vld [vmem:[%s1 + $0x8] sm:$0xff]
        %v292 = vld [vmem:[%s1 + $0x10] sm:$0xff]
        %v293 = vld [vmem:[%s1 + $0x18] sm:$0xff]
        %v294 = vld [vmem:[%s1 + $0x20] sm:$0xff]
        %v295 = vld [vmem:[%s1 + $0x28] sm:$0xff]
        %v296 = vld [vmem:[%s1 + $0x30] sm:$0xff]
        %v297 = vld [vmem:[%s1 + $0x38] sm:$0xff]
        %v298 = vld [vmem:[%s1 + $0x40] sm:$0xff]
        %v299 = vld [vmem:[%s1 + $0x48] sm:$0xff]
        %v300 = vld [vmem:[%s1 + $0x50] sm:$0xff]
        %v301 = vld [vmem:[%s1 + $0x58] sm:$0xff]
        %v302 = vld [vmem:[%s1 + $0x60] sm:$0xff]
        %v303 = vld [vmem:[%s1 + $0x68] sm:$0xff]
        %v304 = vld [vmem:[%s1 + $0x70] sm:$0xff]
        %v305 = vld [vmem:[%s1 + $0x78] sm:$0xff]
        %v306 = vld [vmem:[%s1 + $0x80] sm:$0xff]
        %v307 = vld [vmem:[%s1 + $0x88] sm:$0xff]
        %v308 = vld [vmem:[%s1 + $0x90] sm:$0xff]
        %v309 = vld [vmem:[%s1 + $0x98] sm:$0xff]
        %v310 = vld [vmem:[%s1 + $0xa0] sm:$0xff]
        %v311 = vld [vmem:[%s1 + $0xa8] sm:$0xff]
        %v312 = vld [vmem:[%s1 + $0xb0] sm:$0xff]
        %v313 = vld [vmem:[%s1 + $0xb8] sm:$0xff]
        %v314 = vld [vmem:[%s1 + $0xc0] sm:$0xff]
        %v315 = vld [vmem:[%s1 + $0xc8] sm:$0xff]
        %v316 = vld [vmem:[%s1 + $0xd0] sm:$0xff]
        %v317 = vld [vmem:[%s1 + $0xd8] sm:$0xff]
        %v318 = vld [vmem:[%s1 + $0xe0] sm:$0xff]
        %v319 = vld [vmem:[%s1 + $0xe8] sm:$0xff]
        %v320 = vld [vmem:[%s1 + $0xf0] sm:$0xff]
        %v321 = vld [vmem:[%s1 + $0xf8] sm:$0xff]
        %v322 = vld [vmem:[%s280] sm:$0xff]
        %v323 = vld [vmem:[%s280 + $0x8] sm:$0xff]
        %v324 = vld [vmem:[%s2] sm:$0xff]
        %v325 = vld [vmem:[%s2 + $0x8] sm:$0xff]
        %v326 = vld [vmem:[%s2 + $0x10] sm:$0xff]
        %v327 = vld [vmem:[%s2 + $0x18] sm:$0xff]
        %v328 = vld [vmem:[%s2 + $0x20] sm:$0xff]
        %v329 = vld [vmem:[%s2 + $0x28] sm:$0xff]
        %v330 = vld [vmem:[%s2 + $0x30] sm:$0xff]
        %v331 = vld [vmem:[%s2 + $0x38] sm:$0xff]
        %v332 = vld [vmem:[%s2 + $0x40] sm:$0xff]
        %v333 = vld [vmem:[%s2 + $0x48] sm:$0xff]
        %v334 = vld [vmem:[%s2 + $0x50] sm:$0xff]
        %v335 = vld [vmem:[%s2 + $0x58] sm:$0xff]
        %v336 = vld [vmem:[%s2 + $0x60] sm:$0xff]
        %v337 = vld [vmem:[%s2 + $0x68] sm:$0xff]
        %v338 = vld [vmem:[%s2 + $0x70] sm:$0xff]
        %v339 = vld [vmem:[%s2 + $0x78] sm:$0xff]
        %v340 = vld [vmem:[%s2 + $0x80] sm:$0xff]
        %v341 = vld [vmem:[%s2 + $0x88] sm:$0xff]
        %v342 = vld [vmem:[%s2 + $0x90] sm:$0xff]
        %v343 = vld [vmem:[%s2 + $0x98] sm:$0xff]
        %v344 = vld [vmem:[%s2 + $0xa0] sm:$0xff]
        %v345 = vld [vmem:[%s2 + $0xa8] sm:$0xff]
        %v346 = vld [vmem:[%s2 + $0xb0] sm:$0xff]
        %v347 = vld [vmem:[%s2 + $0xb8] sm:$0xff]
        %v348 = vld [vmem:[%s2 + $0xc0] sm:$0xff]
        %v349 = vld [vmem:[%s2 + $0xc8] sm:$0xff]
        %v350 = vld [vmem:[%s2 + $0xd0] sm:$0xff]
        %v351 = vld [vmem:[%s2 + $0xd8] sm:$0xff]
        %v352 = vld [vmem:[%s2 + $0xe0] sm:$0xff]
        %v353 = vld [vmem:[%s2 + $0xe8] sm:$0xff]
        %v354 = vld [vmem:[%s2 + $0xf0] sm:$0xff]
        %v355 = vld [vmem:[%s2 + $0xf8] sm:$0xff]
        %357 = vset.pattern.permute.xlu0 0
        %358 = vperm.xlu0 %357, %v324
        %v359 = vpop.permute.xlu0 %358
        %362 = vset.pattern.permute.xlu0 0
        %363 = vperm.xlu0 %362, %v325
        %v364 = vpop.permute.xlu0 %363
        %367 = vset.pattern.permute.xlu0 0
        %368 = vperm.xlu0 %367, %v326
        %v369 = vpop.permute.xlu0 %368
        %372 = vset.pattern.permute.xlu0 0
        %373 = vperm.xlu0 %372, %v327
        %v374 = vpop.permute.xlu0 %373
        %377 = vset.pattern.permute.xlu0 0
        %378 = vperm.xlu0 %377, %v328
        %v379 = vpop.permute.xlu0 %378
        %382 = vset.pattern.permute.xlu0 0
        %383 = vperm.xlu0 %382, %v329
        %v384 = vpop.permute.xlu0 %383
        %387 = vset.pattern.permute.xlu0 0
        %388 = vperm.xlu0 %387, %v330
        %v389 = vpop.permute.xlu0 %388
        %392 = vset.pattern.permute.xlu0 0
        %393 = vperm.xlu0 %392, %v331
        %v394 = vpop.permute.xlu0 %393
        %397 = vset.pattern.permute.xlu0 0
        %398 = vperm.xlu0 %397, %v332
        %v399 = vpop.permute.xlu0 %398
        %402 = vset.pattern.permute.xlu0 0
        %403 = vperm.xlu0 %402, %v333
        %v404 = vpop.permute.xlu0 %403
        %407 = vset.pattern.permute.xlu0 0
        %408 = vperm.xlu0 %407, %v334
        %v409 = vpop.permute.xlu0 %408
        %412 = vset.pattern.permute.xlu0 0
        %413 = vperm.xlu0 %412, %v335
        %v414 = vpop.permute.xlu0 %413
        %417 = vset.pattern.permute.xlu0 0
        %418 = vperm.xlu0 %417, %v336
        %v419 = vpop.permute.xlu0 %418
        %422 = vset.pattern.permute.xlu0 0
        %423 = vperm.xlu0 %422, %v337
        %v424 = vpop.permute.xlu0 %423
        %427 = vset.pattern.permute.xlu0 0
        %428 = vperm.xlu0 %427, %v338
        %v429 = vpop.permute.xlu0 %428
        %432 = vset.pattern.permute.xlu0 0
        %433 = vperm.xlu0 %432, %v339
        %v434 = vpop.permute.xlu0 %433
        %437 = vset.pattern.permute.xlu0 0
        %438 = vperm.xlu0 %437, %v340
        %v439 = vpop.permute.xlu0 %438
        %442 = vset.pattern.permute.xlu0 0
        %443 = vperm.xlu0 %442, %v341
        %v444 = vpop.permute.xlu0 %443
        %447 = vset.pattern.permute.xlu0 0
        %448 = vperm.xlu0 %447, %v342
        %v449 = vpop.permute.xlu0 %448
        %452 = vset.pattern.permute.xlu0 0
        %453 = vperm.xlu0 %452, %v343
        %v454 = vpop.permute.xlu0 %453
        %457 = vset.pattern.permute.xlu0 0
        %458 = vperm.xlu0 %457, %v344
        %v459 = vpop.permute.xlu0 %458
        %462 = vset.pattern.permute.xlu0 0
        %463 = vperm.xlu0 %462, %v345
        %v464 = vpop.permute.xlu0 %463
        %467 = vset.pattern.permute.xlu0 0
        %468 = vperm.xlu0 %467, %v346
        %v469 = vpop.permute.xlu0 %468
        %472 = vset.pattern.permute.xlu0 0
        %473 = vperm.xlu0 %472, %v347
        %v474 = vpop.permute.xlu0 %473
        %477 = vset.pattern.permute.xlu0 0
        %478 = vperm.xlu0 %477, %v348
        %v479 = vpop.permute.xlu0 %478
        %482 = vset.pattern.permute.xlu0 0
        %483 = vperm.xlu0 %482, %v349
        %v484 = vpop.permute.xlu0 %483
        %487 = vset.pattern.permute.xlu0 0
        %488 = vperm.xlu0 %487, %v350
        %v489 = vpop.permute.xlu0 %488
        %492 = vset.pattern.permute.xlu0 0
        %493 = vperm.xlu0 %492, %v351
        %v494 = vpop.permute.xlu0 %493
        %497 = vset.pattern.permute.xlu0 0
        %498 = vperm.xlu0 %497, %v352
        %v499 = vpop.permute.xlu0 %498
        %502 = vset.pattern.permute.xlu0 0
        %503 = vperm.xlu0 %502, %v353
        %v504 = vpop.permute.xlu0 %503
        %507 = vset.pattern.permute.xlu0 0
        %508 = vperm.xlu0 %507, %v354
        %v509 = vpop.permute.xlu0 %508
        %512 = vset.pattern.permute.xlu0 0
        %513 = vperm.xlu0 %512, %v355
        %v514 = vpop.permute.xlu0 %513
        %vm516 = vcmask 64512
        %v518 = vsel %vm516, %v290, 0
        %v521 = vsel %vm516, %v291, 0
        %v524 = vsel %vm516, %v292, 0
        %v527 = vsel %vm516, %v293, 0
        %v530 = vsel %vm516, %v294, 0
        %v533 = vsel %vm516, %v295, 0
        %v536 = vsel %vm516, %v296, 0
        %v539 = vsel %vm516, %v297, 0
        %v542 = vsel %vm516, %v298, 0
        %v545 = vsel %vm516, %v299, 0
        %v548 = vsel %vm516, %v300, 0
        %v551 = vsel %vm516, %v301, 0
        %v554 = vsel %vm516, %v302, 0
        %v557 = vsel %vm516, %v303, 0
        %v560 = vsel %vm516, %v304, 0
        %v563 = vsel %vm516, %v305, 0
        %v566 = vsel %vm516, %v306, 0
        %v569 = vsel %vm516, %v307, 0
        %v572 = vsel %vm516, %v308, 0
        %v575 = vsel %vm516, %v309, 0
        %v578 = vsel %vm516, %v310, 0
        %v581 = vsel %vm516, %v311, 0
        %v584 = vsel %vm516, %v312, 0
        %v587 = vsel %vm516, %v313, 0
        %v590 = vsel %vm516, %v314, 0
        %v593 = vsel %vm516, %v315, 0
        %v596 = vsel %vm516, %v316, 0
        %v599 = vsel %vm516, %v317, 0
        %v602 = vsel %vm516, %v318, 0
        %v605 = vsel %vm516, %v319, 0
        %v608 = vsel %vm516, %v320, 0
        %v611 = vsel %vm516, %v321, 0
        %613 = vmatpush.msra.mxu0 0.0
        %614 = vmatpush.msra.mxu0 0.0
        %615 = vmatpush.msra.mxu0 0.0
        %616 = vmatpush.msra.mxu0 0.0
        %617 = vmatpush.msra.mxu0 0.0
        %618 = vmatpush.msra.mxu0 0.0
        %619 = vmatpush.msra.mxu0 0.0
        %620 = vmatpush.msra.mxu0 0.0
        %621 = vmatpush.msra.mxu0 0.0
        %622 = vmatpush.msra.mxu0 0.0
        %623 = vmatpush.msra.mxu0 0.0
        %624 = vmatpush.msra.mxu0 0.0
        %625 = vmatpush.msra.mxu0 0.0
        %626 = vmatpush.msra.mxu0 0.0
        %627 = vmatpush.msra.mxu0 0.0
        %628 = vmatpush.msra.mxu0 %v322
        %629 = vmatmul.f32.gmra.mxu0 %v518
        %v630 = vpop.f32.mrf.mxu0
        %v631 = vadd.f32 %v359, %v630
        %632 = vmatmul.f32.gmra.mxu0 %v521
        %v633 = vpop.f32.mrf.mxu0
        %v634 = vadd.f32 %v364, %v633
        %635 = vmatmul.f32.gmra.mxu0 %v524
        %v636 = vpop.f32.mrf.mxu0
        %v637 = vadd.f32 %v369, %v636
        %638 = vmatmul.f32.gmra.mxu0 %v527
        %v639 = vpop.f32.mrf.mxu0
        %v640 = vadd.f32 %v374, %v639
        %641 = vmatmul.f32.gmra.mxu0 %v530
        %v642 = vpop.f32.mrf.mxu0
        %v643 = vadd.f32 %v379, %v642
        %644 = vmatmul.f32.gmra.mxu0 %v533
        %v645 = vpop.f32.mrf.mxu0
        %v646 = vadd.f32 %v384, %v645
        %647 = vmatmul.f32.gmra.mxu0 %v536
        %v648 = vpop.f32.mrf.mxu0
        %v649 = vadd.f32 %v389, %v648
        %650 = vmatmul.f32.gmra.mxu0 %v539
        %v651 = vpop.f32.mrf.mxu0
        %v652 = vadd.f32 %v394, %v651
        %653 = vmatmul.f32.gmra.mxu0 %v542
        %v654 = vpop.f32.mrf.mxu0
        %v655 = vadd.f32 %v399, %v654
        %656 = vmatmul.f32.gmra.mxu0 %v545
        %v657 = vpop.f32.mrf.mxu0
        %v658 = vadd.f32 %v404, %v657
        %659 = vmatmul.f32.gmra.mxu0 %v548
        %v660 = vpop.f32.mrf.mxu0
        %v661 = vadd.f32 %v409, %v660
        %662 = vmatmul.f32.gmra.mxu0 %v551
        %v663 = vpop.f32.mrf.mxu0
        %v664 = vadd.f32 %v414, %v663
        %665 = vmatmul.f32.gmra.mxu0 %v554
        %v666 = vpop.f32.mrf.mxu0
        %v667 = vadd.f32 %v419, %v666
        %668 = vmatmul.f32.gmra.mxu0 %v557
        %v669 = vpop.f32.mrf.mxu0
        %v670 = vadd.f32 %v424, %v669
        %671 = vmatmul.f32.gmra.mxu0 %v560
        %v672 = vpop.f32.mrf.mxu0
        %v673 = vadd.f32 %v429, %v672
        %674 = vmatmul.f32.gmra.mxu0 %v563
        %v675 = vpop.f32.mrf.mxu0
        %v676 = vadd.f32 %v434, %v675
        %677 = vmatmul.f32.gmra.mxu0 %v566
        %v678 = vpop.f32.mrf.mxu0
        %v679 = vadd.f32 %v439, %v678
        %680 = vmatmul.f32.gmra.mxu0 %v569
        %v681 = vpop.f32.mrf.mxu0
        %v682 = vadd.f32 %v444, %v681
        %683 = vmatmul.f32.gmra.mxu0 %v572
        %v684 = vpop.f32.mrf.mxu0
        %v685 = vadd.f32 %v449, %v684
        %686 = vmatmul.f32.gmra.mxu0 %v575
        %v687 = vpop.f32.mrf.mxu0
        %v688 = vadd.f32 %v454, %v687
        %689 = vmatmul.f32.gmra.mxu0 %v578
        %v690 = vpop.f32.mrf.mxu0
        %v691 = vadd.f32 %v459, %v690
        %692 = vmatmul.f32.gmra.mxu0 %v581
        %v693 = vpop.f32.mrf.mxu0
        %v694 = vadd.f32 %v464, %v693
        %695 = vmatmul.f32.gmra.mxu0 %v584
        %v696 = vpop.f32.mrf.mxu0
        %v697 = vadd.f32 %v469, %v696
        %698 = vmatmul.f32.gmra.mxu0 %v587
        %v699 = vpop.f32.mrf.mxu0
        %v700 = vadd.f32 %v474, %v699
        %701 = vmatmul.f32.gmra.mxu0 %v590
        %v702 = vpop.f32.mrf.mxu0
        %v703 = vadd.f32 %v479, %v702
        %704 = vmatmul.f32.gmra.mxu0 %v593
        %v705 = vpop.f32.mrf.mxu0
        %v706 = vadd.f32 %v484, %v705
        %707 = vmatmul.f32.gmra.mxu0 %v596
        %v708 = vpop.f32.mrf.mxu0
        %v709 = vadd.f32 %v489, %v708
        %710 = vmatmul.f32.gmra.mxu0 %v599
        %v711 = vpop.f32.mrf.mxu0
        %v712 = vadd.f32 %v494, %v711
        %713 = vmatmul.f32.gmra.mxu0 %v602
        %v714 = vpop.f32.mrf.mxu0
        %v715 = vadd.f32 %v499, %v714
        %716 = vmatmul.f32.gmra.mxu0 %v605
        %v717 = vpop.f32.mrf.mxu0
        %v718 = vadd.f32 %v504, %v717
        %719 = vmatmul.f32.gmra.mxu0 %v608
        %v720 = vpop.f32.mrf.mxu0
        %v721 = vadd.f32 %v509, %v720
        %722 = vmatmul.f32.gmra.mxu0 %v611
        %v723 = vpop.f32.mrf.mxu0
        %v724 = vadd.f32 %v514, %v723
        %725 = vdwg.mxu0
        %726 = vmatpush.msra.mxu0 0.0
        %727 = vmatpush.msra.mxu0 0.0
        %728 = vmatpush.msra.mxu0 0.0
        %729 = vmatpush.msra.mxu0 0.0
        %730 = vmatpush.msra.mxu0 0.0
        %731 = vmatpush.msra.mxu0 0.0
        %732 = vmatpush.msra.mxu0 0.0
        %733 = vmatpush.msra.mxu0 0.0
        %734 = vmatpush.msra.mxu0 0.0
        %735 = vmatpush.msra.mxu0 0.0
        %736 = vmatpush.msra.mxu0 0.0
        %737 = vmatpush.msra.mxu0 0.0
        %738 = vmatpush.msra.mxu0 0.0
        %739 = vmatpush.msra.mxu0 0.0
        %740 = vmatpush.msra.mxu0 0.0
        %741 = vmatpush.msra.mxu0 %v323
        %742 = vmatmul.f32.gmra.mxu0 %v518
        %v743 = vpop.f32.mrf.mxu0
        %v744 = vadd.f32 %v359, %v743
        %745 = vmatmul.f32.gmra.mxu0 %v521
        %v746 = vpop.f32.mrf.mxu0
        %v747 = vadd.f32 %v364, %v746
        %748 = vmatmul.f32.gmra.mxu0 %v524
        %v749 = vpop.f32.mrf.mxu0
        %v750 = vadd.f32 %v369, %v749
        %751 = vmatmul.f32.gmra.mxu0 %v527
        %v752 = vpop.f32.mrf.mxu0
        %v753 = vadd.f32 %v374, %v752
        %754 = vmatmul.f32.gmra.mxu0 %v530
        %v755 = vpop.f32.mrf.mxu0
        %v756 = vadd.f32 %v379, %v755
        %757 = vmatmul.f32.gmra.mxu0 %v533
        %v758 = vpop.f32.mrf.mxu0
        %v759 = vadd.f32 %v384, %v758
        %760 = vmatmul.f32.gmra.mxu0 %v536
        %v761 = vpop.f32.mrf.mxu0
        %v762 = vadd.f32 %v389, %v761
        %763 = vmatmul.f32.gmra.mxu0 %v539
        %v764 = vpop.f32.mrf.mxu0
        %v765 = vadd.f32 %v394, %v764
        %766 = vmatmul.f32.gmra.mxu0 %v542
        %v767 = vpop.f32.mrf.mxu0
        %v768 = vadd.f32 %v399, %v767
        %769 = vmatmul.f32.gmra.mxu0 %v545
        %v770 = vpop.f32.mrf.mxu0
        %v771 = vadd.f32 %v404, %v770
        %772 = vmatmul.f32.gmra.mxu0 %v548
        %v773 = vpop.f32.mrf.mxu0
        %v774 = vadd.f32 %v409, %v773
        %775 = vmatmul.f32.gmra.mxu0 %v551
        %v776 = vpop.f32.mrf.mxu0
        %v777 = vadd.f32 %v414, %v776
        %778 = vmatmul.f32.gmra.mxu0 %v554
        %v779 = vpop.f32.mrf.mxu0
        %v780 = vadd.f32 %v419, %v779
        %781 = vmatmul.f32.gmra.mxu0 %v557
        %v782 = vpop.f32.mrf.mxu0
        %v783 = vadd.f32 %v424, %v782
        %784 = vmatmul.f32.gmra.mxu0 %v560
        %v785 = vpop.f32.mrf.mxu0
        %v786 = vadd.f32 %v429, %v785
        %787 = vmatmul.f32.gmra.mxu0 %v563
        %v788 = vpop.f32.mrf.mxu0
        %v789 = vadd.f32 %v434, %v788
        %790 = vmatmul.f32.gmra.mxu0 %v566
        %v791 = vpop.f32.mrf.mxu0
        %v792 = vadd.f32 %v439, %v791
        %793 = vmatmul.f32.gmra.mxu0 %v569
        %v794 = vpop.f32.mrf.mxu0
        %v795 = vadd.f32 %v444, %v794
        %796 = vmatmul.f32.gmra.mxu0 %v572
        %v797 = vpop.f32.mrf.mxu0
        %v798 = vadd.f32 %v449, %v797
        %799 = vmatmul.f32.gmra.mxu0 %v575
        %v800 = vpop.f32.mrf.mxu0
        %v801 = vadd.f32 %v454, %v800
        %802 = vmatmul.f32.gmra.mxu0 %v578
        %v803 = vpop.f32.mrf.mxu0
        %v804 = vadd.f32 %v459, %v803
        %805 = vmatmul.f32.gmra.mxu0 %v581
        %v806 = vpop.f32.mrf.mxu0
        %v807 = vadd.f32 %v464, %v806
        %808 = vmatmul.f32.gmra.mxu0 %v584
        %v809 = vpop.f32.mrf.mxu0
        %v810 = vadd.f32 %v469, %v809
        %811 = vmatmul.f32.gmra.mxu0 %v587
        %v812 = vpop.f32.mrf.mxu0
        %v813 = vadd.f32 %v474, %v812
        %814 = vmatmul.f32.gmra.mxu0 %v590
        %v815 = vpop.f32.mrf.mxu0
        %v816 = vadd.f32 %v479, %v815
        %817 = vmatmul.f32.gmra.mxu0 %v593
        %v818 = vpop.f32.mrf.mxu0
        %v819 = vadd.f32 %v484, %v818
        %820 = vmatmul.f32.gmra.mxu0 %v596
        %v821 = vpop.f32.mrf.mxu0
        %v822 = vadd.f32 %v489, %v821
        %823 = vmatmul.f32.gmra.mxu0 %v599
        %v824 = vpop.f32.mrf.mxu0
        %v825 = vadd.f32 %v494, %v824
        %826 = vmatmul.f32.gmra.mxu0 %v602
        %v827 = vpop.f32.mrf.mxu0
        %v828 = vadd.f32 %v499, %v827
        %829 = vmatmul.f32.gmra.mxu0 %v605
        %v830 = vpop.f32.mrf.mxu0
        %v831 = vadd.f32 %v504, %v830
        %832 = vmatmul.f32.gmra.mxu0 %v608
        %v833 = vpop.f32.mrf.mxu0
        %v834 = vadd.f32 %v509, %v833
        %835 = vmatmul.f32.gmra.mxu0 %v611
        %v836 = vpop.f32.mrf.mxu0
        %v837 = vadd.f32 %v514, %v836
        %838 = vdwg.mxu0
        %839 = vst [vmem:[%s264] sm:$0xff] %v631
        %840 = vst [vmem:[%s264 + $0x8] sm:$0xff] %v744
        %841 = vst [vmem:[%s264 + $0x10] sm:$0xff] %v634
        %842 = vst [vmem:[%s264 + $0x18] sm:$0xff] %v747
        %843 = vst [vmem:[%s264 + $0x20] sm:$0xff] %v637
        %844 = vst [vmem:[%s264 + $0x28] sm:$0xff] %v750
        %845 = vst [vmem:[%s264 + $0x30] sm:$0xff] %v640
        %846 = vst [vmem:[%s264 + $0x38] sm:$0xff] %v753
        %847 = vst [vmem:[%s264 + $0x40] sm:$0xff] %v643
        %848 = vst [vmem:[%s264 + $0x48] sm:$0xff] %v756
        %849 = vst [vmem:[%s264 + $0x50] sm:$0xff] %v646
        %850 = vst [vmem:[%s264 + $0x58] sm:$0xff] %v759
        %851 = vst [vmem:[%s264 + $0x60] sm:$0xff] %v649
        %852 = vst [vmem:[%s264 + $0x68] sm:$0xff] %v762
        %853 = vst [vmem:[%s264 + $0x70] sm:$0xff] %v652
        %854 = vst [vmem:[%s264 + $0x78] sm:$0xff] %v765
        %855 = vst [vmem:[%s264 + $0x80] sm:$0xff] %v655
        %856 = vst [vmem:[%s264 + $0x88] sm:$0xff] %v768
        %857 = vst [vmem:[%s264 + $0x90] sm:$0xff] %v658
        %858 = vst [vmem:[%s264 + $0x98] sm:$0xff] %v771
        %859 = vst [vmem:[%s264 + $0xa0] sm:$0xff] %v661
        %860 = vst [vmem:[%s264 + $0xa8] sm:$0xff] %v774
        %861 = vst [vmem:[%s264 + $0xb0] sm:$0xff] %v664
        %862 = vst [vmem:[%s264 + $0xb8] sm:$0xff] %v777
        %863 = vst [vmem:[%s264 + $0xc0] sm:$0xff] %v667
        %864 = vst [vmem:[%s264 + $0xc8] sm:$0xff] %v780
        %865 = vst [vmem:[%s264 + $0xd0] sm:$0xff] %v670
        %866 = vst [vmem:[%s264 + $0xd8] sm:$0xff] %v783
        %867 = vst [vmem:[%s264 + $0xe0] sm:$0xff] %v673
        %868 = vst [vmem:[%s264 + $0xe8] sm:$0xff] %v786
        %869 = vst [vmem:[%s264 + $0xf0] sm:$0xff] %v676
        %870 = vst [vmem:[%s264 + $0xf8] sm:$0xff] %v789
        %871 = vst [vmem:[%s264 + $0x100] sm:$0xff] %v679
        %872 = vst [vmem:[%s264 + $0x108] sm:$0xff] %v792
        %873 = vst [vmem:[%s264 + $0x110] sm:$0xff] %v682
        %874 = vst [vmem:[%s264 + $0x118] sm:$0xff] %v795
        %875 = vst [vmem:[%s264 + $0x120] sm:$0xff] %v685
        %876 = vst [vmem:[%s264 + $0x128] sm:$0xff] %v798
        %877 = vst [vmem:[%s264 + $0x130] sm:$0xff] %v688
        %878 = vst [vmem:[%s264 + $0x138] sm:$0xff] %v801
        %879 = vst [vmem:[%s264 + $0x140] sm:$0xff] %v691
        %880 = vst [vmem:[%s264 + $0x148] sm:$0xff] %v804
        %881 = vst [vmem:[%s264 + $0x150] sm:$0xff] %v694
        %882 = vst [vmem:[%s264 + $0x158] sm:$0xff] %v807
        %883 = vst [vmem:[%s264 + $0x160] sm:$0xff] %v697
        %884 = vst [vmem:[%s264 + $0x168] sm:$0xff] %v810
        %885 = vst [vmem:[%s264 + $0x170] sm:$0xff] %v700
        %886 = vst [vmem:[%s264 + $0x178] sm:$0xff] %v813
        %887 = vst [vmem:[%s264 + $0x180] sm:$0xff] %v703
        %888 = vst [vmem:[%s264 + $0x188] sm:$0xff] %v816
        %889 = vst [vmem:[%s264 + $0x190] sm:$0xff] %v706
        %890 = vst [vmem:[%s264 + $0x198] sm:$0xff] %v819
        %891 = vst [vmem:[%s264 + $0x1a0] sm:$0xff] %v709
        %892 = vst [vmem:[%s264 + $0x1a8] sm:$0xff] %v822
        %893 = vst [vmem:[%s264 + $0x1b0] sm:$0xff] %v712
        %894 = vst [vmem:[%s264 + $0x1b8] sm:$0xff] %v825
        %895 = vst [vmem:[%s264 + $0x1c0] sm:$0xff] %v715
        %896 = vst [vmem:[%s264 + $0x1c8] sm:$0xff] %v828
        %897 = vst [vmem:[%s264 + $0x1d0] sm:$0xff] %v718
        %898 = vst [vmem:[%s264 + $0x1d8] sm:$0xff] %v831
        %899 = vst [vmem:[%s264 + $0x1e0] sm:$0xff] %v721
        %900 = vst [vmem:[%s264 + $0x1e8] sm:$0xff] %v834
        %901 = vst [vmem:[%s264 + $0x1f0] sm:$0xff] %v724
        %902 = vst [vmem:[%s264 + $0x1f8] sm:$0xff] %v837
        %v903 = vxor.u32 %v631, 2147483648
        %v904 = vxor.u32 %v744, 2147483648
        %v905 = vxor.u32 %v634, 2147483648
        %v906 = vxor.u32 %v747, 2147483648
        %v907 = vxor.u32 %v637, 2147483648
        %v908 = vxor.u32 %v750, 2147483648
        %v909 = vxor.u32 %v640, 2147483648
        %v910 = vxor.u32 %v753, 2147483648
        %v911 = vxor.u32 %v643, 2147483648
        %v912 = vxor.u32 %v756, 2147483648
        %v913 = vxor.u32 %v646, 2147483648
        %v914 = vxor.u32 %v759, 2147483648
        %v915 = vxor.u32 %v649, 2147483648
        %v916 = vxor.u32 %v762, 2147483648
        %v917 = vxor.u32 %v652, 2147483648
        %v918 = vxor.u32 %v765, 2147483648
        %v919 = vxor.u32 %v655, 2147483648
        %v920 = vxor.u32 %v768, 2147483648
        %v921 = vxor.u32 %v658, 2147483648
        %v922 = vxor.u32 %v771, 2147483648
        %v923 = vxor.u32 %v661, 2147483648
        %v924 = vxor.u32 %v774, 2147483648
        %v925 = vxor.u32 %v664, 2147483648
        %v926 = vxor.u32 %v777, 2147483648
        %v927 = vxor.u32 %v667, 2147483648
        %v928 = vxor.u32 %v780, 2147483648
        %v929 = vxor.u32 %v670, 2147483648
        %v930 = vxor.u32 %v783, 2147483648
        %v931 = vxor.u32 %v673, 2147483648
        %v932 = vxor.u32 %v786, 2147483648
        %v933 = vxor.u32 %v676, 2147483648
        %v934 = vxor.u32 %v789, 2147483648
        %v935 = vxor.u32 %v679, 2147483648
        %v936 = vxor.u32 %v792, 2147483648
        %v937 = vxor.u32 %v682, 2147483648
        %v938 = vxor.u32 %v795, 2147483648
        %v939 = vxor.u32 %v685, 2147483648
        %v940 = vxor.u32 %v798, 2147483648
        %v941 = vxor.u32 %v688, 2147483648
        %v942 = vxor.u32 %v801, 2147483648
        %v943 = vxor.u32 %v691, 2147483648
        %v944 = vxor.u32 %v804, 2147483648
        %v945 = vxor.u32 %v694, 2147483648
        %v946 = vxor.u32 %v807, 2147483648
        %v947 = vxor.u32 %v697, 2147483648
        %v948 = vxor.u32 %v810, 2147483648
        %v949 = vxor.u32 %v700, 2147483648
        %v950 = vxor.u32 %v813, 2147483648
        %v951 = vxor.u32 %v703, 2147483648
        %v952 = vxor.u32 %v816, 2147483648
        %v953 = vxor.u32 %v706, 2147483648
        %v954 = vxor.u32 %v819, 2147483648
        %v955 = vxor.u32 %v709, 2147483648
        %v956 = vxor.u32 %v822, 2147483648
        %v957 = vxor.u32 %v712, 2147483648
        %v958 = vxor.u32 %v825, 2147483648
        %v959 = vxor.u32 %v715, 2147483648
        %v960 = vxor.u32 %v828, 2147483648
        %v961 = vxor.u32 %v718, 2147483648
        %v962 = vxor.u32 %v831, 2147483648
        %v963 = vxor.u32 %v721, 2147483648
        %v964 = vxor.u32 %v834, 2147483648
        %v965 = vxor.u32 %v724, 2147483648
        %v966 = vxor.u32 %v837, 2147483648
        %v967 = vmul.f32 %v903, 1.442695
        %v968 = vpow.pop %v967
        %v969 = vmul.f32 %v904, 1.442695
        %v970 = vpow.pop %v969
        %v971 = vmul.f32 %v905, 1.442695
        %v972 = vpow.pop %v971
        %v973 = vmul.f32 %v906, 1.442695
        %v974 = vpow.pop %v973
        %v975 = vmul.f32 %v907, 1.442695
        %v976 = vpow.pop %v975
        %v977 = vmul.f32 %v908, 1.442695
        %v978 = vpow.pop %v977
        %v979 = vmul.f32 %v909, 1.442695
        %v980 = vpow.pop %v979
        %v981 = vmul.f32 %v910, 1.442695
        %v982 = vpow.pop %v981
        %v983 = vmul.f32 %v911, 1.442695
        %v984 = vpow.pop %v983
        %v985 = vmul.f32 %v912, 1.442695
        %v986 = vpow.pop %v985
        %v987 = vmul.f32 %v913, 1.442695
        %v988 = vpow.pop %v987
        %v989 = vmul.f32 %v914, 1.442695
        %v990 = vpow.pop %v989
        %v991 = vmul.f32 %v915, 1.442695
        %v992 = vpow.pop %v991
        %v993 = vmul.f32 %v916, 1.442695
        %v994 = vpow.pop %v993
        %v995 = vmul.f32 %v917, 1.442695
        %v996 = vpow.pop %v995
        %v997 = vmul.f32 %v918, 1.442695
        %v998 = vpow.pop %v997
        %v999 = vmul.f32 %v919, 1.442695
        %v1000 = vpow.pop %v999
        %v1001 = vmul.f32 %v920, 1.442695
        %v1002 = vpow.pop %v1001
        %v1003 = vmul.f32 %v921, 1.442695
        %v1004 = vpow.pop %v1003
        %v1005 = vmul.f32 %v922, 1.442695
        %v1006 = vpow.pop %v1005
        %v1007 = vmul.f32 %v923, 1.442695
        %v1008 = vpow.pop %v1007
        %v1009 = vmul.f32 %v924, 1.442695
        %v1010 = vpow.pop %v1009
        %v1011 = vmul.f32 %v925, 1.442695
        %v1012 = vpow.pop %v1011
        %v1013 = vmul.f32 %v926, 1.442695
        %v1014 = vpow.pop %v1013
        %v1015 = vmul.f32 %v927, 1.442695
        %v1016 = vpow.pop %v1015
        %v1017 = vmul.f32 %v928, 1.442695
        %v1018 = vpow.pop %v1017
        %v1019 = vmul.f32 %v929, 1.442695
        %v1020 = vpow.pop %v1019
        %v1021 = vmul.f32 %v930, 1.442695
        %v1022 = vpow.pop %v1021
        %v1023 = vmul.f32 %v931, 1.442695
        %v1024 = vpow.pop %v1023
        %v1025 = vmul.f32 %v932, 1.442695
        %v1026 = vpow.pop %v1025
        %v1027 = vmul.f32 %v933, 1.442695
        %v1028 = vpow.pop %v1027
        %v1029 = vmul.f32 %v934, 1.442695
        %v1030 = vpow.pop %v1029
        %v1031 = vmul.f32 %v935, 1.442695
        %v1032 = vpow.pop %v1031
        %v1033 = vmul.f32 %v936, 1.442695
        %v1034 = vpow.pop %v1033
        %v1035 = vmul.f32 %v937, 1.442695
        %v1036 = vpow.pop %v1035
        %v1037 = vmul.f32 %v938, 1.442695
        %v1038 = vpow.pop %v1037
        %v1039 = vmul.f32 %v939, 1.442695
        %v1040 = vpow.pop %v1039
        %v1041 = vmul.f32 %v940, 1.442695
        %v1042 = vpow.pop %v1041
        %v1043 = vmul.f32 %v941, 1.442695
        %v1044 = vpow.pop %v1043
        %v1045 = vmul.f32 %v942, 1.442695
        %v1046 = vpow.pop %v1045
        %v1047 = vmul.f32 %v943, 1.442695
        %v1048 = vpow.pop %v1047
        %v1049 = vmul.f32 %v944, 1.442695
        %v1050 = vpow.pop %v1049
        %v1051 = vmul.f32 %v945, 1.442695
        %v1052 = vpow.pop %v1051
        %v1053 = vmul.f32 %v946, 1.442695
        %v1054 = vpow.pop %v1053
        %v1055 = vmul.f32 %v947, 1.442695
        %v1056 = vpow.pop %v1055
        %v1057 = vmul.f32 %v948, 1.442695
        %v1058 = vpow.pop %v1057
        %v1059 = vmul.f32 %v949, 1.442695
        %v1060 = vpow.pop %v1059
        %v1061 = vmul.f32 %v950, 1.442695
        %v1062 = vpow.pop %v1061
        %v1063 = vmul.f32 %v951, 1.442695
        %v1064 = vpow.pop %v1063
        %v1065 = vmul.f32 %v952, 1.442695
        %v1066 = vpow.pop %v1065
        %v1067 = vmul.f32 %v953, 1.442695
        %v1068 = vpow.pop %v1067
        %v1069 = vmul.f32 %v954, 1.442695
        %v1070 = vpow.pop %v1069
        %v1071 = vmul.f32 %v955, 1.442695
        %v1072 = vpow.pop %v1071
        %v1073 = vmul.f32 %v956, 1.442695
        %v1074 = vpow.pop %v1073
        %v1075 = vmul.f32 %v957, 1.442695
        %v1076 = vpow.pop %v1075
        %v1077 = vmul.f32 %v958, 1.442695
        %v1078 = vpow.pop %v1077
        %v1079 = vmul.f32 %v959, 1.442695
        %v1080 = vpow.pop %v1079
        %v1081 = vmul.f32 %v960, 1.442695
        %v1082 = vpow.pop %v1081
        %v1083 = vmul.f32 %v961, 1.442695
        %v1084 = vpow.pop %v1083
        %v1085 = vmul.f32 %v962, 1.442695
        %v1086 = vpow.pop %v1085
        %v1087 = vmul.f32 %v963, 1.442695
        %v1088 = vpow.pop %v1087
        %v1089 = vmul.f32 %v964, 1.442695
        %v1090 = vpow.pop %v1089
        %v1091 = vmul.f32 %v965, 1.442695
        %v1092 = vpow.pop %v1091
        %v1093 = vmul.f32 %v966, 1.442695
        %v1094 = vpow.pop %v1093
        %v1095 = vadd.f32 %v968, 1.0
        %v1096 = vadd.f32 %v970, 1.0
        %v1097 = vadd.f32 %v972, 1.0
        %v1098 = vadd.f32 %v974, 1.0
        %v1099 = vadd.f32 %v976, 1.0
        %v1100 = vadd.f32 %v978, 1.0
        %v1101 = vadd.f32 %v980, 1.0
        %v1102 = vadd.f32 %v982, 1.0
        %v1103 = vadd.f32 %v984, 1.0
        %v1104 = vadd.f32 %v986, 1.0
        %v1105 = vadd.f32 %v988, 1.0
        %v1106 = vadd.f32 %v990, 1.0
        %v1107 = vadd.f32 %v992, 1.0
        %v1108 = vadd.f32 %v994, 1.0
        %v1109 = vadd.f32 %v996, 1.0
        %v1110 = vadd.f32 %v998, 1.0
        %v1111 = vadd.f32 %v1000, 1.0
        %v1112 = vadd.f32 %v1002, 1.0
        %v1113 = vadd.f32 %v1004, 1.0
        %v1114 = vadd.f32 %v1006, 1.0
        %v1115 = vadd.f32 %v1008, 1.0
        %v1116 = vadd.f32 %v1010, 1.0
        %v1117 = vadd.f32 %v1012, 1.0
        %v1118 = vadd.f32 %v1014, 1.0
        %v1119 = vadd.f32 %v1016, 1.0
        %v1120 = vadd.f32 %v1018, 1.0
        %v1121 = vadd.f32 %v1020, 1.0
        %v1122 = vadd.f32 %v1022, 1.0
        %v1123 = vadd.f32 %v1024, 1.0
        %v1124 = vadd.f32 %v1026, 1.0
        %v1125 = vadd.f32 %v1028, 1.0
        %v1126 = vadd.f32 %v1030, 1.0
        %v1127 = vadd.f32 %v1032, 1.0
        %v1128 = vadd.f32 %v1034, 1.0
        %v1129 = vadd.f32 %v1036, 1.0
        %v1130 = vadd.f32 %v1038, 1.0
        %v1131 = vadd.f32 %v1040, 1.0
        %v1132 = vadd.f32 %v1042, 1.0
        %v1133 = vadd.f32 %v1044, 1.0
        %v1134 = vadd.f32 %v1046, 1.0
        %v1135 = vadd.f32 %v1048, 1.0
        %v1136 = vadd.f32 %v1050, 1.0
        %v1137 = vadd.f32 %v1052, 1.0
        %v1138 = vadd.f32 %v1054, 1.0
        %v1139 = vadd.f32 %v1056, 1.0
        %v1140 = vadd.f32 %v1058, 1.0
        %v1141 = vadd.f32 %v1060, 1.0
        %v1142 = vadd.f32 %v1062, 1.0
        %v1143 = vadd.f32 %v1064, 1.0
        %v1144 = vadd.f32 %v1066, 1.0
        %v1145 = vadd.f32 %v1068, 1.0
        %v1146 = vadd.f32 %v1070, 1.0
        %v1147 = vadd.f32 %v1072, 1.0
        %v1148 = vadd.f32 %v1074, 1.0
        %v1149 = vadd.f32 %v1076, 1.0
        %v1150 = vadd.f32 %v1078, 1.0
        %v1151 = vadd.f32 %v1080, 1.0
        %v1152 = vadd.f32 %v1082, 1.0
        %v1153 = vadd.f32 %v1084, 1.0
        %v1154 = vadd.f32 %v1086, 1.0
        %v1155 = vadd.f32 %v1088, 1.0
        %v1156 = vadd.f32 %v1090, 1.0
        %v1157 = vadd.f32 %v1092, 1.0
        %v1158 = vadd.f32 %v1094, 1.0
        %v1159 = vrcp.pop %v1095
        %v1160 = vmul.f32 %v1095, %v1159
        %v1161 = vsub.f32 1.0, %v1160
        %v1162 = vmul.f32 %v1159, %v1161
        %v1163 = vadd.f32 %v1159, %v1162
        %vm1164 = vweird.f32 %v1095
        %vm1165 = vweird.f32 %v1159
        %vm1166 = vmor %vm1164, %vm1165
        %v1167 = vsel %vm1166, %v1159, %v1163
        %v1168 = vand.u32 2147483647, %v1095
        %vm1169 = vcmp.eq.f32.partialorder %v1168, 8.507059e+37
        %v1170 = vand.u32 %v1095, 2147483648
        %v1171 = vor.u32 1.1754944e-38, %v1170
        %v1172 = vsel %vm1169, %v1171, %v1167
        %v1173 = vmul.f32 1.0, %v1172
        %v1174 = vrcp.pop %v1096
        %v1175 = vmul.f32 %v1096, %v1174
        %v1176 = vsub.f32 1.0, %v1175
        %v1177 = vmul.f32 %v1174, %v1176
        %v1178 = vadd.f32 %v1174, %v1177
        %vm1179 = vweird.f32 %v1096
        %vm1180 = vweird.f32 %v1174
        %vm1181 = vmor %vm1179, %vm1180
        %v1182 = vsel %vm1181, %v1174, %v1178
        %v1183 = vand.u32 2147483647, %v1096
        %vm1184 = vcmp.eq.f32.partialorder %v1183, 8.507059e+37
        %v1185 = vand.u32 %v1096, 2147483648
        %v1186 = vor.u32 1.1754944e-38, %v1185
        %v1187 = vsel %vm1184, %v1186, %v1182
        %v1188 = vmul.f32 1.0, %v1187
        %v1189 = vrcp.pop %v1097
        %v1190 = vmul.f32 %v1097, %v1189
        %v1191 = vsub.f32 1.0, %v1190
        %v1192 = vmul.f32 %v1189, %v1191
        %v1193 = vadd.f32 %v1189, %v1192
        %vm1194 = vweird.f32 %v1097
        %vm1195 = vweird.f32 %v1189
        %vm1196 = vmor %vm1194, %vm1195
        %v1197 = vsel %vm1196, %v1189, %v1193
        %v1198 = vand.u32 2147483647, %v1097
        %vm1199 = vcmp.eq.f32.partialorder %v1198, 8.507059e+37
        %v1200 = vand.u32 %v1097, 2147483648
        %v1201 = vor.u32 1.1754944e-38, %v1200
        %v1202 = vsel %vm1199, %v1201, %v1197
        %v1203 = vmul.f32 1.0, %v1202
        %v1204 = vrcp.pop %v1098
        %v1205 = vmul.f32 %v1098, %v1204
        %v1206 = vsub.f32 1.0, %v1205
        %v1207 = vmul.f32 %v1204, %v1206
        %v1208 = vadd.f32 %v1204, %v1207
        %vm1209 = vweird.f32 %v1098
        %vm1210 = vweird.f32 %v1204
        %vm1211 = vmor %vm1209, %vm1210
        %v1212 = vsel %vm1211, %v1204, %v1208
        %v1213 = vand.u32 2147483647, %v1098
        %vm1214 = vcmp.eq.f32.partialorder %v1213, 8.507059e+37
        %v1215 = vand.u32 %v1098, 2147483648
        %v1216 = vor.u32 1.1754944e-38, %v1215
        %v1217 = vsel %vm1214, %v1216, %v1212
        %v1218 = vmul.f32 1.0, %v1217
        %v1219 = vrcp.pop %v1099
        %v1220 = vmul.f32 %v1099, %v1219
        %v1221 = vsub.f32 1.0, %v1220
        %v1222 = vmul.f32 %v1219, %v1221
        %v1223 = vadd.f32 %v1219, %v1222
        %vm1224 = vweird.f32 %v1099
        %vm1225 = vweird.f32 %v1219
        %vm1226 = vmor %vm1224, %vm1225
        %v1227 = vsel %vm1226, %v1219, %v1223
        %v1228 = vand.u32 2147483647, %v1099
        %vm1229 = vcmp.eq.f32.partialorder %v1228, 8.507059e+37
        %v1230 = vand.u32 %v1099, 2147483648
        %v1231 = vor.u32 1.1754944e-38, %v1230
        %v1232 = vsel %vm1229, %v1231, %v1227
        %v1233 = vmul.f32 1.0, %v1232
        %v1234 = vrcp.pop %v1100
        %v1235 = vmul.f32 %v1100, %v1234
        %v1236 = vsub.f32 1.0, %v1235
        %v1237 = vmul.f32 %v1234, %v1236
        %v1238 = vadd.f32 %v1234, %v1237
        %vm1239 = vweird.f32 %v1100
        %vm1240 = vweird.f32 %v1234
        %vm1241 = vmor %vm1239, %vm1240
        %v1242 = vsel %vm1241, %v1234, %v1238
        %v1243 = vand.u32 2147483647, %v1100
        %vm1244 = vcmp.eq.f32.partialorder %v1243, 8.507059e+37
        %v1245 = vand.u32 %v1100, 2147483648
        %v1246 = vor.u32 1.1754944e-38, %v1245
        %v1247 = vsel %vm1244, %v1246, %v1242
        %v1248 = vmul.f32 1.0, %v1247
        %v1249 = vrcp.pop %v1101
        %v1250 = vmul.f32 %v1101, %v1249
        %v1251 = vsub.f32 1.0, %v1250
        %v1252 = vmul.f32 %v1249, %v1251
        %v1253 = vadd.f32 %v1249, %v1252
        %vm1254 = vweird.f32 %v1101
        %vm1255 = vweird.f32 %v1249
        %vm1256 = vmor %vm1254, %vm1255
        %v1257 = vsel %vm1256, %v1249, %v1253
        %v1258 = vand.u32 2147483647, %v1101
        %vm1259 = vcmp.eq.f32.partialorder %v1258, 8.507059e+37
        %v1260 = vand.u32 %v1101, 2147483648
        %v1261 = vor.u32 1.1754944e-38, %v1260
        %v1262 = vsel %vm1259, %v1261, %v1257
        %v1263 = vmul.f32 1.0, %v1262
        %v1264 = vrcp.pop %v1102
        %v1265 = vmul.f32 %v1102, %v1264
        %v1266 = vsub.f32 1.0, %v1265
        %v1267 = vmul.f32 %v1264, %v1266
        %v1268 = vadd.f32 %v1264, %v1267
        %vm1269 = vweird.f32 %v1102
        %vm1270 = vweird.f32 %v1264
        %vm1271 = vmor %vm1269, %vm1270
        %v1272 = vsel %vm1271, %v1264, %v1268
        %v1273 = vand.u32 2147483647, %v1102
        %vm1274 = vcmp.eq.f32.partialorder %v1273, 8.507059e+37
        %v1275 = vand.u32 %v1102, 2147483648
        %v1276 = vor.u32 1.1754944e-38, %v1275
        %v1277 = vsel %vm1274, %v1276, %v1272
        %v1278 = vmul.f32 1.0, %v1277
        %v1279 = vrcp.pop %v1103
        %v1280 = vmul.f32 %v1103, %v1279
        %v1281 = vsub.f32 1.0, %v1280
        %v1282 = vmul.f32 %v1279, %v1281
        %v1283 = vadd.f32 %v1279, %v1282
        %vm1284 = vweird.f32 %v1103
        %vm1285 = vweird.f32 %v1279
        %vm1286 = vmor %vm1284, %vm1285
        %v1287 = vsel %vm1286, %v1279, %v1283
        %v1288 = vand.u32 2147483647, %v1103
        %vm1289 = vcmp.eq.f32.partialorder %v1288, 8.507059e+37
        %v1290 = vand.u32 %v1103, 2147483648
        %v1291 = vor.u32 1.1754944e-38, %v1290
        %v1292 = vsel %vm1289, %v1291, %v1287
        %v1293 = vmul.f32 1.0, %v1292
        %v1294 = vrcp.pop %v1104
        %v1295 = vmul.f32 %v1104, %v1294
        %v1296 = vsub.f32 1.0, %v1295
        %v1297 = vmul.f32 %v1294, %v1296
        %v1298 = vadd.f32 %v1294, %v1297
        %vm1299 = vweird.f32 %v1104
        %vm1300 = vweird.f32 %v1294
        %vm1301 = vmor %vm1299, %vm1300
        %v1302 = vsel %vm1301, %v1294, %v1298
        %v1303 = vand.u32 2147483647, %v1104
        %vm1304 = vcmp.eq.f32.partialorder %v1303, 8.507059e+37
        %v1305 = vand.u32 %v1104, 2147483648
        %v1306 = vor.u32 1.1754944e-38, %v1305
        %v1307 = vsel %vm1304, %v1306, %v1302
        %v1308 = vmul.f32 1.0, %v1307
        %v1309 = vrcp.pop %v1105
        %v1310 = vmul.f32 %v1105, %v1309
        %v1311 = vsub.f32 1.0, %v1310
        %v1312 = vmul.f32 %v1309, %v1311
        %v1313 = vadd.f32 %v1309, %v1312
        %vm1314 = vweird.f32 %v1105
        %vm1315 = vweird.f32 %v1309
        %vm1316 = vmor %vm1314, %vm1315
        %v1317 = vsel %vm1316, %v1309, %v1313
        %v1318 = vand.u32 2147483647, %v1105
        %vm1319 = vcmp.eq.f32.partialorder %v1318, 8.507059e+37
        %v1320 = vand.u32 %v1105, 2147483648
        %v1321 = vor.u32 1.1754944e-38, %v1320
        %v1322 = vsel %vm1319, %v1321, %v1317
        %v1323 = vmul.f32 1.0, %v1322
        %v1324 = vrcp.pop %v1106
        %v1325 = vmul.f32 %v1106, %v1324
        %v1326 = vsub.f32 1.0, %v1325
        %v1327 = vmul.f32 %v1324, %v1326
        %v1328 = vadd.f32 %v1324, %v1327
        %vm1329 = vweird.f32 %v1106
        %vm1330 = vweird.f32 %v1324
        %vm1331 = vmor %vm1329, %vm1330
        %v1332 = vsel %vm1331, %v1324, %v1328
        %v1333 = vand.u32 2147483647, %v1106
        %vm1334 = vcmp.eq.f32.partialorder %v1333, 8.507059e+37
        %v1335 = vand.u32 %v1106, 2147483648
        %v1336 = vor.u32 1.1754944e-38, %v1335
        %v1337 = vsel %vm1334, %v1336, %v1332
        %v1338 = vmul.f32 1.0, %v1337
        %v1339 = vrcp.pop %v1107
        %v1340 = vmul.f32 %v1107, %v1339
        %v1341 = vsub.f32 1.0, %v1340
        %v1342 = vmul.f32 %v1339, %v1341
        %v1343 = vadd.f32 %v1339, %v1342
        %vm1344 = vweird.f32 %v1107
        %vm1345 = vweird.f32 %v1339
        %vm1346 = vmor %vm1344, %vm1345
        %v1347 = vsel %vm1346, %v1339, %v1343
        %v1348 = vand.u32 2147483647, %v1107
        %vm1349 = vcmp.eq.f32.partialorder %v1348, 8.507059e+37
        %v1350 = vand.u32 %v1107, 2147483648
        %v1351 = vor.u32 1.1754944e-38, %v1350
        %v1352 = vsel %vm1349, %v1351, %v1347
        %v1353 = vmul.f32 1.0, %v1352
        %v1354 = vrcp.pop %v1108
        %v1355 = vmul.f32 %v1108, %v1354
        %v1356 = vsub.f32 1.0, %v1355
        %v1357 = vmul.f32 %v1354, %v1356
        %v1358 = vadd.f32 %v1354, %v1357
        %vm1359 = vweird.f32 %v1108
        %vm1360 = vweird.f32 %v1354
        %vm1361 = vmor %vm1359, %vm1360
        %v1362 = vsel %vm1361, %v1354, %v1358
        %v1363 = vand.u32 2147483647, %v1108
        %vm1364 = vcmp.eq.f32.partialorder %v1363, 8.507059e+37
        %v1365 = vand.u32 %v1108, 2147483648
        %v1366 = vor.u32 1.1754944e-38, %v1365
        %v1367 = vsel %vm1364, %v1366, %v1362
        %v1368 = vmul.f32 1.0, %v1367
        %v1369 = vrcp.pop %v1109
        %v1370 = vmul.f32 %v1109, %v1369
        %v1371 = vsub.f32 1.0, %v1370
        %v1372 = vmul.f32 %v1369, %v1371
        %v1373 = vadd.f32 %v1369, %v1372
        %vm1374 = vweird.f32 %v1109
        %vm1375 = vweird.f32 %v1369
        %vm1376 = vmor %vm1374, %vm1375
        %v1377 = vsel %vm1376, %v1369, %v1373
        %v1378 = vand.u32 2147483647, %v1109
        %vm1379 = vcmp.eq.f32.partialorder %v1378, 8.507059e+37
        %v1380 = vand.u32 %v1109, 2147483648
        %v1381 = vor.u32 1.1754944e-38, %v1380
        %v1382 = vsel %vm1379, %v1381, %v1377
        %v1383 = vmul.f32 1.0, %v1382
        %v1384 = vrcp.pop %v1110
        %v1385 = vmul.f32 %v1110, %v1384
        %v1386 = vsub.f32 1.0, %v1385
        %v1387 = vmul.f32 %v1384, %v1386
        %v1388 = vadd.f32 %v1384, %v1387
        %vm1389 = vweird.f32 %v1110
        %vm1390 = vweird.f32 %v1384
        %vm1391 = vmor %vm1389, %vm1390
        %v1392 = vsel %vm1391, %v1384, %v1388
        %v1393 = vand.u32 2147483647, %v1110
        %vm1394 = vcmp.eq.f32.partialorder %v1393, 8.507059e+37
        %v1395 = vand.u32 %v1110, 2147483648
        %v1396 = vor.u32 1.1754944e-38, %v1395
        %v1397 = vsel %vm1394, %v1396, %v1392
        %v1398 = vmul.f32 1.0, %v1397
        %v1399 = vrcp.pop %v1111
        %v1400 = vmul.f32 %v1111, %v1399
        %v1401 = vsub.f32 1.0, %v1400
        %v1402 = vmul.f32 %v1399, %v1401
        %v1403 = vadd.f32 %v1399, %v1402
        %vm1404 = vweird.f32 %v1111
        %vm1405 = vweird.f32 %v1399
        %vm1406 = vmor %vm1404, %vm1405
        %v1407 = vsel %vm1406, %v1399, %v1403
        %v1408 = vand.u32 2147483647, %v1111
        %vm1409 = vcmp.eq.f32.partialorder %v1408, 8.507059e+37
        %v1410 = vand.u32 %v1111, 2147483648
        %v1411 = vor.u32 1.1754944e-38, %v1410
        %v1412 = vsel %vm1409, %v1411, %v1407
        %v1413 = vmul.f32 1.0, %v1412
        %v1414 = vrcp.pop %v1112
        %v1415 = vmul.f32 %v1112, %v1414
        %v1416 = vsub.f32 1.0, %v1415
        %v1417 = vmul.f32 %v1414, %v1416
        %v1418 = vadd.f32 %v1414, %v1417
        %vm1419 = vweird.f32 %v1112
        %vm1420 = vweird.f32 %v1414
        %vm1421 = vmor %vm1419, %vm1420
        %v1422 = vsel %vm1421, %v1414, %v1418
        %v1423 = vand.u32 2147483647, %v1112
        %vm1424 = vcmp.eq.f32.partialorder %v1423, 8.507059e+37
        %v1425 = vand.u32 %v1112, 2147483648
        %v1426 = vor.u32 1.1754944e-38, %v1425
        %v1427 = vsel %vm1424, %v1426, %v1422
        %v1428 = vmul.f32 1.0, %v1427
        %v1429 = vrcp.pop %v1113
        %v1430 = vmul.f32 %v1113, %v1429
        %v1431 = vsub.f32 1.0, %v1430
        %v1432 = vmul.f32 %v1429, %v1431
        %v1433 = vadd.f32 %v1429, %v1432
        %vm1434 = vweird.f32 %v1113
        %vm1435 = vweird.f32 %v1429
        %vm1436 = vmor %vm1434, %vm1435
        %v1437 = vsel %vm1436, %v1429, %v1433
        %v1438 = vand.u32 2147483647, %v1113
        %vm1439 = vcmp.eq.f32.partialorder %v1438, 8.507059e+37
        %v1440 = vand.u32 %v1113, 2147483648
        %v1441 = vor.u32 1.1754944e-38, %v1440
        %v1442 = vsel %vm1439, %v1441, %v1437
        %v1443 = vmul.f32 1.0, %v1442
        %v1444 = vrcp.pop %v1114
        %v1445 = vmul.f32 %v1114, %v1444
        %v1446 = vsub.f32 1.0, %v1445
        %v1447 = vmul.f32 %v1444, %v1446
        %v1448 = vadd.f32 %v1444, %v1447
        %vm1449 = vweird.f32 %v1114
        %vm1450 = vweird.f32 %v1444
        %vm1451 = vmor %vm1449, %vm1450
        %v1452 = vsel %vm1451, %v1444, %v1448
        %v1453 = vand.u32 2147483647, %v1114
        %vm1454 = vcmp.eq.f32.partialorder %v1453, 8.507059e+37
        %v1455 = vand.u32 %v1114, 2147483648
        %v1456 = vor.u32 1.1754944e-38, %v1455
        %v1457 = vsel %vm1454, %v1456, %v1452
        %v1458 = vmul.f32 1.0, %v1457
        %v1459 = vrcp.pop %v1115
        %v1460 = vmul.f32 %v1115, %v1459
        %v1461 = vsub.f32 1.0, %v1460
        %v1462 = vmul.f32 %v1459, %v1461
        %v1463 = vadd.f32 %v1459, %v1462
        %vm1464 = vweird.f32 %v1115
        %vm1465 = vweird.f32 %v1459
        %vm1466 = vmor %vm1464, %vm1465
        %v1467 = vsel %vm1466, %v1459, %v1463
        %v1468 = vand.u32 2147483647, %v1115
        %vm1469 = vcmp.eq.f32.partialorder %v1468, 8.507059e+37
        %v1470 = vand.u32 %v1115, 2147483648
        %v1471 = vor.u32 1.1754944e-38, %v1470
        %v1472 = vsel %vm1469, %v1471, %v1467
        %v1473 = vmul.f32 1.0, %v1472
        %v1474 = vrcp.pop %v1116
        %v1475 = vmul.f32 %v1116, %v1474
        %v1476 = vsub.f32 1.0, %v1475
        %v1477 = vmul.f32 %v1474, %v1476
        %v1478 = vadd.f32 %v1474, %v1477
        %vm1479 = vweird.f32 %v1116
        %vm1480 = vweird.f32 %v1474
        %vm1481 = vmor %vm1479, %vm1480
        %v1482 = vsel %vm1481, %v1474, %v1478
        %v1483 = vand.u32 2147483647, %v1116
        %vm1484 = vcmp.eq.f32.partialorder %v1483, 8.507059e+37
        %v1485 = vand.u32 %v1116, 2147483648
        %v1486 = vor.u32 1.1754944e-38, %v1485
        %v1487 = vsel %vm1484, %v1486, %v1482
        %v1488 = vmul.f32 1.0, %v1487
        %v1489 = vrcp.pop %v1117
        %v1490 = vmul.f32 %v1117, %v1489
        %v1491 = vsub.f32 1.0, %v1490
        %v1492 = vmul.f32 %v1489, %v1491
        %v1493 = vadd.f32 %v1489, %v1492
        %vm1494 = vweird.f32 %v1117
        %vm1495 = vweird.f32 %v1489
        %vm1496 = vmor %vm1494, %vm1495
        %v1497 = vsel %vm1496, %v1489, %v1493
        %v1498 = vand.u32 2147483647, %v1117
        %vm1499 = vcmp.eq.f32.partialorder %v1498, 8.507059e+37
        %v1500 = vand.u32 %v1117, 2147483648
        %v1501 = vor.u32 1.1754944e-38, %v1500
        %v1502 = vsel %vm1499, %v1501, %v1497
        %v1503 = vmul.f32 1.0, %v1502
        %v1504 = vrcp.pop %v1118
        %v1505 = vmul.f32 %v1118, %v1504
        %v1506 = vsub.f32 1.0, %v1505
        %v1507 = vmul.f32 %v1504, %v1506
        %v1508 = vadd.f32 %v1504, %v1507
        %vm1509 = vweird.f32 %v1118
        %vm1510 = vweird.f32 %v1504
        %vm1511 = vmor %vm1509, %vm1510
        %v1512 = vsel %vm1511, %v1504, %v1508
        %v1513 = vand.u32 2147483647, %v1118
        %vm1514 = vcmp.eq.f32.partialorder %v1513, 8.507059e+37
        %v1515 = vand.u32 %v1118, 2147483648
        %v1516 = vor.u32 1.1754944e-38, %v1515
        %v1517 = vsel %vm1514, %v1516, %v1512
        %v1518 = vmul.f32 1.0, %v1517
        %v1519 = vrcp.pop %v1119
        %v1520 = vmul.f32 %v1119, %v1519
        %v1521 = vsub.f32 1.0, %v1520
        %v1522 = vmul.f32 %v1519, %v1521
        %v1523 = vadd.f32 %v1519, %v1522
        %vm1524 = vweird.f32 %v1119
        %vm1525 = vweird.f32 %v1519
        %vm1526 = vmor %vm1524, %vm1525
        %v1527 = vsel %vm1526, %v1519, %v1523
        %v1528 = vand.u32 2147483647, %v1119
        %vm1529 = vcmp.eq.f32.partialorder %v1528, 8.507059e+37
        %v1530 = vand.u32 %v1119, 2147483648
        %v1531 = vor.u32 1.1754944e-38, %v1530
        %v1532 = vsel %vm1529, %v1531, %v1527
        %v1533 = vmul.f32 1.0, %v1532
        %v1534 = vrcp.pop %v1120
        %v1535 = vmul.f32 %v1120, %v1534
        %v1536 = vsub.f32 1.0, %v1535
        %v1537 = vmul.f32 %v1534, %v1536
        %v1538 = vadd.f32 %v1534, %v1537
        %vm1539 = vweird.f32 %v1120
        %vm1540 = vweird.f32 %v1534
        %vm1541 = vmor %vm1539, %vm1540
        %v1542 = vsel %vm1541, %v1534, %v1538
        %v1543 = vand.u32 2147483647, %v1120
        %vm1544 = vcmp.eq.f32.partialorder %v1543, 8.507059e+37
        %v1545 = vand.u32 %v1120, 2147483648
        %v1546 = vor.u32 1.1754944e-38, %v1545
        %v1547 = vsel %vm1544, %v1546, %v1542
        %v1548 = vmul.f32 1.0, %v1547
        %v1549 = vrcp.pop %v1121
        %v1550 = vmul.f32 %v1121, %v1549
        %v1551 = vsub.f32 1.0, %v1550
        %v1552 = vmul.f32 %v1549, %v1551
        %v1553 = vadd.f32 %v1549, %v1552
        %vm1554 = vweird.f32 %v1121
        %vm1555 = vweird.f32 %v1549
        %vm1556 = vmor %vm1554, %vm1555
        %v1557 = vsel %vm1556, %v1549, %v1553
        %v1558 = vand.u32 2147483647, %v1121
        %vm1559 = vcmp.eq.f32.partialorder %v1558, 8.507059e+37
        %v1560 = vand.u32 %v1121, 2147483648
        %v1561 = vor.u32 1.1754944e-38, %v1560
        %v1562 = vsel %vm1559, %v1561, %v1557
        %v1563 = vmul.f32 1.0, %v1562
        %v1564 = vrcp.pop %v1122
        %v1565 = vmul.f32 %v1122, %v1564
        %v1566 = vsub.f32 1.0, %v1565
        %v1567 = vmul.f32 %v1564, %v1566
        %v1568 = vadd.f32 %v1564, %v1567
        %vm1569 = vweird.f32 %v1122
        %vm1570 = vweird.f32 %v1564
        %vm1571 = vmor %vm1569, %vm1570
        %v1572 = vsel %vm1571, %v1564, %v1568
        %v1573 = vand.u32 2147483647, %v1122
        %vm1574 = vcmp.eq.f32.partialorder %v1573, 8.507059e+37
        %v1575 = vand.u32 %v1122, 2147483648
        %v1576 = vor.u32 1.1754944e-38, %v1575
        %v1577 = vsel %vm1574, %v1576, %v1572
        %v1578 = vmul.f32 1.0, %v1577
        %v1579 = vrcp.pop %v1123
        %v1580 = vmul.f32 %v1123, %v1579
        %v1581 = vsub.f32 1.0, %v1580
        %v1582 = vmul.f32 %v1579, %v1581
        %v1583 = vadd.f32 %v1579, %v1582
        %vm1584 = vweird.f32 %v1123
        %vm1585 = vweird.f32 %v1579
        %vm1586 = vmor %vm1584, %vm1585
        %v1587 = vsel %vm1586, %v1579, %v1583
        %v1588 = vand.u32 2147483647, %v1123
        %vm1589 = vcmp.eq.f32.partialorder %v1588, 8.507059e+37
        %v1590 = vand.u32 %v1123, 2147483648
        %v1591 = vor.u32 1.1754944e-38, %v1590
        %v1592 = vsel %vm1589, %v1591, %v1587
        %v1593 = vmul.f32 1.0, %v1592
        %v1594 = vrcp.pop %v1124
        %v1595 = vmul.f32 %v1124, %v1594
        %v1596 = vsub.f32 1.0, %v1595
        %v1597 = vmul.f32 %v1594, %v1596
        %v1598 = vadd.f32 %v1594, %v1597
        %vm1599 = vweird.f32 %v1124
        %vm1600 = vweird.f32 %v1594
        %vm1601 = vmor %vm1599, %vm1600
        %v1602 = vsel %vm1601, %v1594, %v1598
        %v1603 = vand.u32 2147483647, %v1124
        %vm1604 = vcmp.eq.f32.partialorder %v1603, 8.507059e+37
        %v1605 = vand.u32 %v1124, 2147483648
        %v1606 = vor.u32 1.1754944e-38, %v1605
        %v1607 = vsel %vm1604, %v1606, %v1602
        %v1608 = vmul.f32 1.0, %v1607
        %v1609 = vrcp.pop %v1125
        %v1610 = vmul.f32 %v1125, %v1609
        %v1611 = vsub.f32 1.0, %v1610
        %v1612 = vmul.f32 %v1609, %v1611
        %v1613 = vadd.f32 %v1609, %v1612
        %vm1614 = vweird.f32 %v1125
        %vm1615 = vweird.f32 %v1609
        %vm1616 = vmor %vm1614, %vm1615
        %v1617 = vsel %vm1616, %v1609, %v1613
        %v1618 = vand.u32 2147483647, %v1125
        %vm1619 = vcmp.eq.f32.partialorder %v1618, 8.507059e+37
        %v1620 = vand.u32 %v1125, 2147483648
        %v1621 = vor.u32 1.1754944e-38, %v1620
        %v1622 = vsel %vm1619, %v1621, %v1617
        %v1623 = vmul.f32 1.0, %v1622
        %v1624 = vrcp.pop %v1126
        %v1625 = vmul.f32 %v1126, %v1624
        %v1626 = vsub.f32 1.0, %v1625
        %v1627 = vmul.f32 %v1624, %v1626
        %v1628 = vadd.f32 %v1624, %v1627
        %vm1629 = vweird.f32 %v1126
        %vm1630 = vweird.f32 %v1624
        %vm1631 = vmor %vm1629, %vm1630
        %v1632 = vsel %vm1631, %v1624, %v1628
        %v1633 = vand.u32 2147483647, %v1126
        %vm1634 = vcmp.eq.f32.partialorder %v1633, 8.507059e+37
        %v1635 = vand.u32 %v1126, 2147483648
        %v1636 = vor.u32 1.1754944e-38, %v1635
        %v1637 = vsel %vm1634, %v1636, %v1632
        %v1638 = vmul.f32 1.0, %v1637
        %v1639 = vrcp.pop %v1127
        %v1640 = vmul.f32 %v1127, %v1639
        %v1641 = vsub.f32 1.0, %v1640
        %v1642 = vmul.f32 %v1639, %v1641
        %v1643 = vadd.f32 %v1639, %v1642
        %vm1644 = vweird.f32 %v1127
        %vm1645 = vweird.f32 %v1639
        %vm1646 = vmor %vm1644, %vm1645
        %v1647 = vsel %vm1646, %v1639, %v1643
        %v1648 = vand.u32 2147483647, %v1127
        %vm1649 = vcmp.eq.f32.partialorder %v1648, 8.507059e+37
        %v1650 = vand.u32 %v1127, 2147483648
        %v1651 = vor.u32 1.1754944e-38, %v1650
        %v1652 = vsel %vm1649, %v1651, %v1647
        %v1653 = vmul.f32 1.0, %v1652
        %v1654 = vrcp.pop %v1128
        %v1655 = vmul.f32 %v1128, %v1654
        %v1656 = vsub.f32 1.0, %v1655
        %v1657 = vmul.f32 %v1654, %v1656
        %v1658 = vadd.f32 %v1654, %v1657
        %vm1659 = vweird.f32 %v1128
        %vm1660 = vweird.f32 %v1654
        %vm1661 = vmor %vm1659, %vm1660
        %v1662 = vsel %vm1661, %v1654, %v1658
        %v1663 = vand.u32 2147483647, %v1128
        %vm1664 = vcmp.eq.f32.partialorder %v1663, 8.507059e+37
        %v1665 = vand.u32 %v1128, 2147483648
        %v1666 = vor.u32 1.1754944e-38, %v1665
        %v1667 = vsel %vm1664, %v1666, %v1662
        %v1668 = vmul.f32 1.0, %v1667
        %v1669 = vrcp.pop %v1129
        %v1670 = vmul.f32 %v1129, %v1669
        %v1671 = vsub.f32 1.0, %v1670
        %v1672 = vmul.f32 %v1669, %v1671
        %v1673 = vadd.f32 %v1669, %v1672
        %vm1674 = vweird.f32 %v1129
        %vm1675 = vweird.f32 %v1669
        %vm1676 = vmor %vm1674, %vm1675
        %v1677 = vsel %vm1676, %v1669, %v1673
        %v1678 = vand.u32 2147483647, %v1129
        %vm1679 = vcmp.eq.f32.partialorder %v1678, 8.507059e+37
        %v1680 = vand.u32 %v1129, 2147483648
        %v1681 = vor.u32 1.1754944e-38, %v1680
        %v1682 = vsel %vm1679, %v1681, %v1677
        %v1683 = vmul.f32 1.0, %v1682
        %v1684 = vrcp.pop %v1130
        %v1685 = vmul.f32 %v1130, %v1684
        %v1686 = vsub.f32 1.0, %v1685
        %v1687 = vmul.f32 %v1684, %v1686
        %v1688 = vadd.f32 %v1684, %v1687
        %vm1689 = vweird.f32 %v1130
        %vm1690 = vweird.f32 %v1684
        %vm1691 = vmor %vm1689, %vm1690
        %v1692 = vsel %vm1691, %v1684, %v1688
        %v1693 = vand.u32 2147483647, %v1130
        %vm1694 = vcmp.eq.f32.partialorder %v1693, 8.507059e+37
        %v1695 = vand.u32 %v1130, 2147483648
        %v1696 = vor.u32 1.1754944e-38, %v1695
        %v1697 = vsel %vm1694, %v1696, %v1692
        %v1698 = vmul.f32 1.0, %v1697
        %v1699 = vrcp.pop %v1131
        %v1700 = vmul.f32 %v1131, %v1699
        %v1701 = vsub.f32 1.0, %v1700
        %v1702 = vmul.f32 %v1699, %v1701
        %v1703 = vadd.f32 %v1699, %v1702
        %vm1704 = vweird.f32 %v1131
        %vm1705 = vweird.f32 %v1699
        %vm1706 = vmor %vm1704, %vm1705
        %v1707 = vsel %vm1706, %v1699, %v1703
        %v1708 = vand.u32 2147483647, %v1131
        %vm1709 = vcmp.eq.f32.partialorder %v1708, 8.507059e+37
        %v1710 = vand.u32 %v1131, 2147483648
        %v1711 = vor.u32 1.1754944e-38, %v1710
        %v1712 = vsel %vm1709, %v1711, %v1707
        %v1713 = vmul.f32 1.0, %v1712
        %v1714 = vrcp.pop %v1132
        %v1715 = vmul.f32 %v1132, %v1714
        %v1716 = vsub.f32 1.0, %v1715
        %v1717 = vmul.f32 %v1714, %v1716
        %v1718 = vadd.f32 %v1714, %v1717
        %vm1719 = vweird.f32 %v1132
        %vm1720 = vweird.f32 %v1714
        %vm1721 = vmor %vm1719, %vm1720
        %v1722 = vsel %vm1721, %v1714, %v1718
        %v1723 = vand.u32 2147483647, %v1132
        %vm1724 = vcmp.eq.f32.partialorder %v1723, 8.507059e+37
        %v1725 = vand.u32 %v1132, 2147483648
        %v1726 = vor.u32 1.1754944e-38, %v1725
        %v1727 = vsel %vm1724, %v1726, %v1722
        %v1728 = vmul.f32 1.0, %v1727
        %v1729 = vrcp.pop %v1133
        %v1730 = vmul.f32 %v1133, %v1729
        %v1731 = vsub.f32 1.0, %v1730
        %v1732 = vmul.f32 %v1729, %v1731
        %v1733 = vadd.f32 %v1729, %v1732
        %vm1734 = vweird.f32 %v1133
        %vm1735 = vweird.f32 %v1729
        %vm1736 = vmor %vm1734, %vm1735
        %v1737 = vsel %vm1736, %v1729, %v1733
        %v1738 = vand.u32 2147483647, %v1133
        %vm1739 = vcmp.eq.f32.partialorder %v1738, 8.507059e+37
        %v1740 = vand.u32 %v1133, 2147483648
        %v1741 = vor.u32 1.1754944e-38, %v1740
        %v1742 = vsel %vm1739, %v1741, %v1737
        %v1743 = vmul.f32 1.0, %v1742
        %v1744 = vrcp.pop %v1134
        %v1745 = vmul.f32 %v1134, %v1744
        %v1746 = vsub.f32 1.0, %v1745
        %v1747 = vmul.f32 %v1744, %v1746
        %v1748 = vadd.f32 %v1744, %v1747
        %vm1749 = vweird.f32 %v1134
        %vm1750 = vweird.f32 %v1744
        %vm1751 = vmor %vm1749, %vm1750
        %v1752 = vsel %vm1751, %v1744, %v1748
        %v1753 = vand.u32 2147483647, %v1134
        %vm1754 = vcmp.eq.f32.partialorder %v1753, 8.507059e+37
        %v1755 = vand.u32 %v1134, 2147483648
        %v1756 = vor.u32 1.1754944e-38, %v1755
        %v1757 = vsel %vm1754, %v1756, %v1752
        %v1758 = vmul.f32 1.0, %v1757
        %v1759 = vrcp.pop %v1135
        %v1760 = vmul.f32 %v1135, %v1759
        %v1761 = vsub.f32 1.0, %v1760
        %v1762 = vmul.f32 %v1759, %v1761
        %v1763 = vadd.f32 %v1759, %v1762
        %vm1764 = vweird.f32 %v1135
        %vm1765 = vweird.f32 %v1759
        %vm1766 = vmor %vm1764, %vm1765
        %v1767 = vsel %vm1766, %v1759, %v1763
        %v1768 = vand.u32 2147483647, %v1135
        %vm1769 = vcmp.eq.f32.partialorder %v1768, 8.507059e+37
        %v1770 = vand.u32 %v1135, 2147483648
        %v1771 = vor.u32 1.1754944e-38, %v1770
        %v1772 = vsel %vm1769, %v1771, %v1767
        %v1773 = vmul.f32 1.0, %v1772
        %v1774 = vrcp.pop %v1136
        %v1775 = vmul.f32 %v1136, %v1774
        %v1776 = vsub.f32 1.0, %v1775
        %v1777 = vmul.f32 %v1774, %v1776
        %v1778 = vadd.f32 %v1774, %v1777
        %vm1779 = vweird.f32 %v1136
        %vm1780 = vweird.f32 %v1774
        %vm1781 = vmor %vm1779, %vm1780
        %v1782 = vsel %vm1781, %v1774, %v1778
        %v1783 = vand.u32 2147483647, %v1136
        %vm1784 = vcmp.eq.f32.partialorder %v1783, 8.507059e+37
        %v1785 = vand.u32 %v1136, 2147483648
        %v1786 = vor.u32 1.1754944e-38, %v1785
        %v1787 = vsel %vm1784, %v1786, %v1782
        %v1788 = vmul.f32 1.0, %v1787
        %v1789 = vrcp.pop %v1137
        %v1790 = vmul.f32 %v1137, %v1789
        %v1791 = vsub.f32 1.0, %v1790
        %v1792 = vmul.f32 %v1789, %v1791
        %v1793 = vadd.f32 %v1789, %v1792
        %vm1794 = vweird.f32 %v1137
        %vm1795 = vweird.f32 %v1789
        %vm1796 = vmor %vm1794, %vm1795
        %v1797 = vsel %vm1796, %v1789, %v1793
        %v1798 = vand.u32 2147483647, %v1137
        %vm1799 = vcmp.eq.f32.partialorder %v1798, 8.507059e+37
        %v1800 = vand.u32 %v1137, 2147483648
        %v1801 = vor.u32 1.1754944e-38, %v1800
        %v1802 = vsel %vm1799, %v1801, %v1797
        %v1803 = vmul.f32 1.0, %v1802
        %v1804 = vrcp.pop %v1138
        %v1805 = vmul.f32 %v1138, %v1804
        %v1806 = vsub.f32 1.0, %v1805
        %v1807 = vmul.f32 %v1804, %v1806
        %v1808 = vadd.f32 %v1804, %v1807
        %vm1809 = vweird.f32 %v1138
        %vm1810 = vweird.f32 %v1804
        %vm1811 = vmor %vm1809, %vm1810
        %v1812 = vsel %vm1811, %v1804, %v1808
        %v1813 = vand.u32 2147483647, %v1138
        %vm1814 = vcmp.eq.f32.partialorder %v1813, 8.507059e+37
        %v1815 = vand.u32 %v1138, 2147483648
        %v1816 = vor.u32 1.1754944e-38, %v1815
        %v1817 = vsel %vm1814, %v1816, %v1812
        %v1818 = vmul.f32 1.0, %v1817
        %v1819 = vrcp.pop %v1139
        %v1820 = vmul.f32 %v1139, %v1819
        %v1821 = vsub.f32 1.0, %v1820
        %v1822 = vmul.f32 %v1819, %v1821
        %v1823 = vadd.f32 %v1819, %v1822
        %vm1824 = vweird.f32 %v1139
        %vm1825 = vweird.f32 %v1819
        %vm1826 = vmor %vm1824, %vm1825
        %v1827 = vsel %vm1826, %v1819, %v1823
        %v1828 = vand.u32 2147483647, %v1139
        %vm1829 = vcmp.eq.f32.partialorder %v1828, 8.507059e+37
        %v1830 = vand.u32 %v1139, 2147483648
        %v1831 = vor.u32 1.1754944e-38, %v1830
        %v1832 = vsel %vm1829, %v1831, %v1827
        %v1833 = vmul.f32 1.0, %v1832
        %v1834 = vrcp.pop %v1140
        %v1835 = vmul.f32 %v1140, %v1834
        %v1836 = vsub.f32 1.0, %v1835
        %v1837 = vmul.f32 %v1834, %v1836
        %v1838 = vadd.f32 %v1834, %v1837
        %vm1839 = vweird.f32 %v1140
        %vm1840 = vweird.f32 %v1834
        %vm1841 = vmor %vm1839, %vm1840
        %v1842 = vsel %vm1841, %v1834, %v1838
        %v1843 = vand.u32 2147483647, %v1140
        %vm1844 = vcmp.eq.f32.partialorder %v1843, 8.507059e+37
        %v1845 = vand.u32 %v1140, 2147483648
        %v1846 = vor.u32 1.1754944e-38, %v1845
        %v1847 = vsel %vm1844, %v1846, %v1842
        %v1848 = vmul.f32 1.0, %v1847
        %v1849 = vrcp.pop %v1141
        %v1850 = vmul.f32 %v1141, %v1849
        %v1851 = vsub.f32 1.0, %v1850
        %v1852 = vmul.f32 %v1849, %v1851
        %v1853 = vadd.f32 %v1849, %v1852
        %vm1854 = vweird.f32 %v1141
        %vm1855 = vweird.f32 %v1849
        %vm1856 = vmor %vm1854, %vm1855
        %v1857 = vsel %vm1856, %v1849, %v1853
        %v1858 = vand.u32 2147483647, %v1141
        %vm1859 = vcmp.eq.f32.partialorder %v1858, 8.507059e+37
        %v1860 = vand.u32 %v1141, 2147483648
        %v1861 = vor.u32 1.1754944e-38, %v1860
        %v1862 = vsel %vm1859, %v1861, %v1857
        %v1863 = vmul.f32 1.0, %v1862
        %v1864 = vrcp.pop %v1142
        %v1865 = vmul.f32 %v1142, %v1864
        %v1866 = vsub.f32 1.0, %v1865
        %v1867 = vmul.f32 %v1864, %v1866
        %v1868 = vadd.f32 %v1864, %v1867
        %vm1869 = vweird.f32 %v1142
        %vm1870 = vweird.f32 %v1864
        %vm1871 = vmor %vm1869, %vm1870
        %v1872 = vsel %vm1871, %v1864, %v1868
        %v1873 = vand.u32 2147483647, %v1142
        %vm1874 = vcmp.eq.f32.partialorder %v1873, 8.507059e+37
        %v1875 = vand.u32 %v1142, 2147483648
        %v1876 = vor.u32 1.1754944e-38, %v1875
        %v1877 = vsel %vm1874, %v1876, %v1872
        %v1878 = vmul.f32 1.0, %v1877
        %v1879 = vrcp.pop %v1143
        %v1880 = vmul.f32 %v1143, %v1879
        %v1881 = vsub.f32 1.0, %v1880
        %v1882 = vmul.f32 %v1879, %v1881
        %v1883 = vadd.f32 %v1879, %v1882
        %vm1884 = vweird.f32 %v1143
        %vm1885 = vweird.f32 %v1879
        %vm1886 = vmor %vm1884, %vm1885
        %v1887 = vsel %vm1886, %v1879, %v1883
        %v1888 = vand.u32 2147483647, %v1143
        %vm1889 = vcmp.eq.f32.partialorder %v1888, 8.507059e+37
        %v1890 = vand.u32 %v1143, 2147483648
        %v1891 = vor.u32 1.1754944e-38, %v1890
        %v1892 = vsel %vm1889, %v1891, %v1887
        %v1893 = vmul.f32 1.0, %v1892
        %v1894 = vrcp.pop %v1144
        %v1895 = vmul.f32 %v1144, %v1894
        %v1896 = vsub.f32 1.0, %v1895
        %v1897 = vmul.f32 %v1894, %v1896
        %v1898 = vadd.f32 %v1894, %v1897
        %vm1899 = vweird.f32 %v1144
        %vm1900 = vweird.f32 %v1894
        %vm1901 = vmor %vm1899, %vm1900
        %v1902 = vsel %vm1901, %v1894, %v1898
        %v1903 = vand.u32 2147483647, %v1144
        %vm1904 = vcmp.eq.f32.partialorder %v1903, 8.507059e+37
        %v1905 = vand.u32 %v1144, 2147483648
        %v1906 = vor.u32 1.1754944e-38, %v1905
        %v1907 = vsel %vm1904, %v1906, %v1902
        %v1908 = vmul.f32 1.0, %v1907
        %v1909 = vrcp.pop %v1145
        %v1910 = vmul.f32 %v1145, %v1909
        %v1911 = vsub.f32 1.0, %v1910
        %v1912 = vmul.f32 %v1909, %v1911
        %v1913 = vadd.f32 %v1909, %v1912
        %vm1914 = vweird.f32 %v1145
        %vm1915 = vweird.f32 %v1909
        %vm1916 = vmor %vm1914, %vm1915
        %v1917 = vsel %vm1916, %v1909, %v1913
        %v1918 = vand.u32 2147483647, %v1145
        %vm1919 = vcmp.eq.f32.partialorder %v1918, 8.507059e+37
        %v1920 = vand.u32 %v1145, 2147483648
        %v1921 = vor.u32 1.1754944e-38, %v1920
        %v1922 = vsel %vm1919, %v1921, %v1917
        %v1923 = vmul.f32 1.0, %v1922
        %v1924 = vrcp.pop %v1146
        %v1925 = vmul.f32 %v1146, %v1924
        %v1926 = vsub.f32 1.0, %v1925
        %v1927 = vmul.f32 %v1924, %v1926
        %v1928 = vadd.f32 %v1924, %v1927
        %vm1929 = vweird.f32 %v1146
        %vm1930 = vweird.f32 %v1924
        %vm1931 = vmor %vm1929, %vm1930
        %v1932 = vsel %vm1931, %v1924, %v1928
        %v1933 = vand.u32 2147483647, %v1146
        %vm1934 = vcmp.eq.f32.partialorder %v1933, 8.507059e+37
        %v1935 = vand.u32 %v1146, 2147483648
        %v1936 = vor.u32 1.1754944e-38, %v1935
        %v1937 = vsel %vm1934, %v1936, %v1932
        %v1938 = vmul.f32 1.0, %v1937
        %v1939 = vrcp.pop %v1147
        %v1940 = vmul.f32 %v1147, %v1939
        %v1941 = vsub.f32 1.0, %v1940
        %v1942 = vmul.f32 %v1939, %v1941
        %v1943 = vadd.f32 %v1939, %v1942
        %vm1944 = vweird.f32 %v1147
        %vm1945 = vweird.f32 %v1939
        %vm1946 = vmor %vm1944, %vm1945
        %v1947 = vsel %vm1946, %v1939, %v1943
        %v1948 = vand.u32 2147483647, %v1147
        %vm1949 = vcmp.eq.f32.partialorder %v1948, 8.507059e+37
        %v1950 = vand.u32 %v1147, 2147483648
        %v1951 = vor.u32 1.1754944e-38, %v1950
        %v1952 = vsel %vm1949, %v1951, %v1947
        %v1953 = vmul.f32 1.0, %v1952
        %v1954 = vrcp.pop %v1148
        %v1955 = vmul.f32 %v1148, %v1954
        %v1956 = vsub.f32 1.0, %v1955
        %v1957 = vmul.f32 %v1954, %v1956
        %v1958 = vadd.f32 %v1954, %v1957
        %vm1959 = vweird.f32 %v1148
        %vm1960 = vweird.f32 %v1954
        %vm1961 = vmor %vm1959, %vm1960
        %v1962 = vsel %vm1961, %v1954, %v1958
        %v1963 = vand.u32 2147483647, %v1148
        %vm1964 = vcmp.eq.f32.partialorder %v1963, 8.507059e+37
        %v1965 = vand.u32 %v1148, 2147483648
        %v1966 = vor.u32 1.1754944e-38, %v1965
        %v1967 = vsel %vm1964, %v1966, %v1962
        %v1968 = vmul.f32 1.0, %v1967
        %v1969 = vrcp.pop %v1149
        %v1970 = vmul.f32 %v1149, %v1969
        %v1971 = vsub.f32 1.0, %v1970
        %v1972 = vmul.f32 %v1969, %v1971
        %v1973 = vadd.f32 %v1969, %v1972
        %vm1974 = vweird.f32 %v1149
        %vm1975 = vweird.f32 %v1969
        %vm1976 = vmor %vm1974, %vm1975
        %v1977 = vsel %vm1976, %v1969, %v1973
        %v1978 = vand.u32 2147483647, %v1149
        %vm1979 = vcmp.eq.f32.partialorder %v1978, 8.507059e+37
        %v1980 = vand.u32 %v1149, 2147483648
        %v1981 = vor.u32 1.1754944e-38, %v1980
        %v1982 = vsel %vm1979, %v1981, %v1977
        %v1983 = vmul.f32 1.0, %v1982
        %v1984 = vrcp.pop %v1150
        %v1985 = vmul.f32 %v1150, %v1984
        %v1986 = vsub.f32 1.0, %v1985
        %v1987 = vmul.f32 %v1984, %v1986
        %v1988 = vadd.f32 %v1984, %v1987
        %vm1989 = vweird.f32 %v1150
        %vm1990 = vweird.f32 %v1984
        %vm1991 = vmor %vm1989, %vm1990
        %v1992 = vsel %vm1991, %v1984, %v1988
        %v1993 = vand.u32 2147483647, %v1150
        %vm1994 = vcmp.eq.f32.partialorder %v1993, 8.507059e+37
        %v1995 = vand.u32 %v1150, 2147483648
        %v1996 = vor.u32 1.1754944e-38, %v1995
        %v1997 = vsel %vm1994, %v1996, %v1992
        %v1998 = vmul.f32 1.0, %v1997
        %v1999 = vrcp.pop %v1151
        %v2000 = vmul.f32 %v1151, %v1999
        %v2001 = vsub.f32 1.0, %v2000
        %v2002 = vmul.f32 %v1999, %v2001
        %v2003 = vadd.f32 %v1999, %v2002
        %vm2004 = vweird.f32 %v1151
        %vm2005 = vweird.f32 %v1999
        %vm2006 = vmor %vm2004, %vm2005
        %v2007 = vsel %vm2006, %v1999, %v2003
        %v2008 = vand.u32 2147483647, %v1151
        %vm2009 = vcmp.eq.f32.partialorder %v2008, 8.507059e+37
        %v2010 = vand.u32 %v1151, 2147483648
        %v2011 = vor.u32 1.1754944e-38, %v2010
        %v2012 = vsel %vm2009, %v2011, %v2007
        %v2013 = vmul.f32 1.0, %v2012
        %v2014 = vrcp.pop %v1152
        %v2015 = vmul.f32 %v1152, %v2014
        %v2016 = vsub.f32 1.0, %v2015
        %v2017 = vmul.f32 %v2014, %v2016
        %v2018 = vadd.f32 %v2014, %v2017
        %vm2019 = vweird.f32 %v1152
        %vm2020 = vweird.f32 %v2014
        %vm2021 = vmor %vm2019, %vm2020
        %v2022 = vsel %vm2021, %v2014, %v2018
        %v2023 = vand.u32 2147483647, %v1152
        %vm2024 = vcmp.eq.f32.partialorder %v2023, 8.507059e+37
        %v2025 = vand.u32 %v1152, 2147483648
        %v2026 = vor.u32 1.1754944e-38, %v2025
        %v2027 = vsel %vm2024, %v2026, %v2022
        %v2028 = vmul.f32 1.0, %v2027
        %v2029 = vrcp.pop %v1153
        %v2030 = vmul.f32 %v1153, %v2029
        %v2031 = vsub.f32 1.0, %v2030
        %v2032 = vmul.f32 %v2029, %v2031
        %v2033 = vadd.f32 %v2029, %v2032
        %vm2034 = vweird.f32 %v1153
        %vm2035 = vweird.f32 %v2029
        %vm2036 = vmor %vm2034, %vm2035
        %v2037 = vsel %vm2036, %v2029, %v2033
        %v2038 = vand.u32 2147483647, %v1153
        %vm2039 = vcmp.eq.f32.partialorder %v2038, 8.507059e+37
        %v2040 = vand.u32 %v1153, 2147483648
        %v2041 = vor.u32 1.1754944e-38, %v2040
        %v2042 = vsel %vm2039, %v2041, %v2037
        %v2043 = vmul.f32 1.0, %v2042
        %v2044 = vrcp.pop %v1154
        %v2045 = vmul.f32 %v1154, %v2044
        %v2046 = vsub.f32 1.0, %v2045
        %v2047 = vmul.f32 %v2044, %v2046
        %v2048 = vadd.f32 %v2044, %v2047
        %vm2049 = vweird.f32 %v1154
        %vm2050 = vweird.f32 %v2044
        %vm2051 = vmor %vm2049, %vm2050
        %v2052 = vsel %vm2051, %v2044, %v2048
        %v2053 = vand.u32 2147483647, %v1154
        %vm2054 = vcmp.eq.f32.partialorder %v2053, 8.507059e+37
        %v2055 = vand.u32 %v1154, 2147483648
        %v2056 = vor.u32 1.1754944e-38, %v2055
        %v2057 = vsel %vm2054, %v2056, %v2052
        %v2058 = vmul.f32 1.0, %v2057
        %v2059 = vrcp.pop %v1155
        %v2060 = vmul.f32 %v1155, %v2059
        %v2061 = vsub.f32 1.0, %v2060
        %v2062 = vmul.f32 %v2059, %v2061
        %v2063 = vadd.f32 %v2059, %v2062
        %vm2064 = vweird.f32 %v1155
        %vm2065 = vweird.f32 %v2059
        %vm2066 = vmor %vm2064, %vm2065
        %v2067 = vsel %vm2066, %v2059, %v2063
        %v2068 = vand.u32 2147483647, %v1155
        %vm2069 = vcmp.eq.f32.partialorder %v2068, 8.507059e+37
        %v2070 = vand.u32 %v1155, 2147483648
        %v2071 = vor.u32 1.1754944e-38, %v2070
        %v2072 = vsel %vm2069, %v2071, %v2067
        %v2073 = vmul.f32 1.0, %v2072
        %v2074 = vrcp.pop %v1156
        %v2075 = vmul.f32 %v1156, %v2074
        %v2076 = vsub.f32 1.0, %v2075
        %v2077 = vmul.f32 %v2074, %v2076
        %v2078 = vadd.f32 %v2074, %v2077
        %vm2079 = vweird.f32 %v1156
        %vm2080 = vweird.f32 %v2074
        %vm2081 = vmor %vm2079, %vm2080
        %v2082 = vsel %vm2081, %v2074, %v2078
        %v2083 = vand.u32 2147483647, %v1156
        %vm2084 = vcmp.eq.f32.partialorder %v2083, 8.507059e+37
        %v2085 = vand.u32 %v1156, 2147483648
        %v2086 = vor.u32 1.1754944e-38, %v2085
        %v2087 = vsel %vm2084, %v2086, %v2082
        %v2088 = vmul.f32 1.0, %v2087
        %v2089 = vrcp.pop %v1157
        %v2090 = vmul.f32 %v1157, %v2089
        %v2091 = vsub.f32 1.0, %v2090
        %v2092 = vmul.f32 %v2089, %v2091
        %v2093 = vadd.f32 %v2089, %v2092
        %vm2094 = vweird.f32 %v1157
        %vm2095 = vweird.f32 %v2089
        %vm2096 = vmor %vm2094, %vm2095
        %v2097 = vsel %vm2096, %v2089, %v2093
        %v2098 = vand.u32 2147483647, %v1157
        %vm2099 = vcmp.eq.f32.partialorder %v2098, 8.507059e+37
        %v2100 = vand.u32 %v1157, 2147483648
        %v2101 = vor.u32 1.1754944e-38, %v2100
        %v2102 = vsel %vm2099, %v2101, %v2097
        %v2103 = vmul.f32 1.0, %v2102
        %v2104 = vrcp.pop %v1158
        %v2105 = vmul.f32 %v1158, %v2104
        %v2106 = vsub.f32 1.0, %v2105
        %v2107 = vmul.f32 %v2104, %v2106
        %v2108 = vadd.f32 %v2104, %v2107
        %vm2109 = vweird.f32 %v1158
        %vm2110 = vweird.f32 %v2104
        %vm2111 = vmor %vm2109, %vm2110
        %v2112 = vsel %vm2111, %v2104, %v2108
        %v2113 = vand.u32 2147483647, %v1158
        %vm2114 = vcmp.eq.f32.partialorder %v2113, 8.507059e+37
        %v2115 = vand.u32 %v1158, 2147483648
        %v2116 = vor.u32 1.1754944e-38, %v2115
        %v2117 = vsel %vm2114, %v2116, %v2112
        %v2118 = vmul.f32 1.0, %v2117
        %v2119 = vld [vmem:[%s286] ss:$2 sm:$0x3]
        %s2120 = scalar_lea.vmem %s286, 1
        %v2121 = vld [vmem:[%s2120] ss:$2 sm:$0x3]
        %v2122 = vld [vmem:[%s2] sm:$0xff]
        %v2123 = vld [vmem:[%s2 + $0x8] sm:$0xff]
        %v2124 = vld [vmem:[%s2 + $0x10] sm:$0xff]
        %v2125 = vld [vmem:[%s2 + $0x18] sm:$0xff]
        %v2126 = vld [vmem:[%s2 + $0x20] sm:$0xff]
        %v2127 = vld [vmem:[%s2 + $0x28] sm:$0xff]
        %v2128 = vld [vmem:[%s2 + $0x30] sm:$0xff]
        %v2129 = vld [vmem:[%s2 + $0x38] sm:$0xff]
        %v2130 = vld [vmem:[%s2 + $0x40] sm:$0xff]
        %v2131 = vld [vmem:[%s2 + $0x48] sm:$0xff]
        %v2132 = vld [vmem:[%s2 + $0x50] sm:$0xff]
        %v2133 = vld [vmem:[%s2 + $0x58] sm:$0xff]
        %v2134 = vld [vmem:[%s2 + $0x60] sm:$0xff]
        %v2135 = vld [vmem:[%s2 + $0x68] sm:$0xff]
        %v2136 = vld [vmem:[%s2 + $0x70] sm:$0xff]
        %v2137 = vld [vmem:[%s2 + $0x78] sm:$0xff]
        %v2138 = vld [vmem:[%s2 + $0x80] sm:$0xff]
        %v2139 = vld [vmem:[%s2 + $0x88] sm:$0xff]
        %v2140 = vld [vmem:[%s2 + $0x90] sm:$0xff]
        %v2141 = vld [vmem:[%s2 + $0x98] sm:$0xff]
        %v2142 = vld [vmem:[%s2 + $0xa0] sm:$0xff]
        %v2143 = vld [vmem:[%s2 + $0xa8] sm:$0xff]
        %v2144 = vld [vmem:[%s2 + $0xb0] sm:$0xff]
        %v2145 = vld [vmem:[%s2 + $0xb8] sm:$0xff]
        %v2146 = vld [vmem:[%s2 + $0xc0] sm:$0xff]
        %v2147 = vld [vmem:[%s2 + $0xc8] sm:$0xff]
        %v2148 = vld [vmem:[%s2 + $0xd0] sm:$0xff]
        %v2149 = vld [vmem:[%s2 + $0xd8] sm:$0xff]
        %v2150 = vld [vmem:[%s2 + $0xe0] sm:$0xff]
        %v2151 = vld [vmem:[%s2 + $0xe8] sm:$0xff]
        %v2152 = vld [vmem:[%s2 + $0xf0] sm:$0xff]
        %v2153 = vld [vmem:[%s2 + $0xf8] sm:$0xff]
        %2155 = vset.pattern.permute.xlu0 2
        %2156 = vperm.xlu0 %2155, %v2122
        %v2157 = vpop.permute.xlu0 %2156
        %2160 = vset.pattern.permute.xlu0 2
        %2161 = vperm.xlu0 %2160, %v2123
        %v2162 = vpop.permute.xlu0 %2161
        %2165 = vset.pattern.permute.xlu0 2
        %2166 = vperm.xlu0 %2165, %v2124
        %v2167 = vpop.permute.xlu0 %2166
        %2170 = vset.pattern.permute.xlu0 2
        %2171 = vperm.xlu0 %2170, %v2125
        %v2172 = vpop.permute.xlu0 %2171
        %2175 = vset.pattern.permute.xlu0 2
        %2176 = vperm.xlu0 %2175, %v2126
        %v2177 = vpop.permute.xlu0 %2176
        %2180 = vset.pattern.permute.xlu0 2
        %2181 = vperm.xlu0 %2180, %v2127
        %v2182 = vpop.permute.xlu0 %2181
        %2185 = vset.pattern.permute.xlu0 2
        %2186 = vperm.xlu0 %2185, %v2128
        %v2187 = vpop.permute.xlu0 %2186
        %2190 = vset.pattern.permute.xlu0 2
        %2191 = vperm.xlu0 %2190, %v2129
        %v2192 = vpop.permute.xlu0 %2191
        %2195 = vset.pattern.permute.xlu0 2
        %2196 = vperm.xlu0 %2195, %v2130
        %v2197 = vpop.permute.xlu0 %2196
        %2200 = vset.pattern.permute.xlu0 2
        %2201 = vperm.xlu0 %2200, %v2131
        %v2202 = vpop.permute.xlu0 %2201
        %2205 = vset.pattern.permute.xlu0 2
        %2206 = vperm.xlu0 %2205, %v2132
        %v2207 = vpop.permute.xlu0 %2206
        %2210 = vset.pattern.permute.xlu0 2
        %2211 = vperm.xlu0 %2210, %v2133
        %v2212 = vpop.permute.xlu0 %2211
        %2215 = vset.pattern.permute.xlu0 2
        %2216 = vperm.xlu0 %2215, %v2134
        %v2217 = vpop.permute.xlu0 %2216
        %2220 = vset.pattern.permute.xlu0 2
        %2221 = vperm.xlu0 %2220, %v2135
        %v2222 = vpop.permute.xlu0 %2221
        %2225 = vset.pattern.permute.xlu0 2
        %2226 = vperm.xlu0 %2225, %v2136
        %v2227 = vpop.permute.xlu0 %2226
        %2230 = vset.pattern.permute.xlu0 2
        %2231 = vperm.xlu0 %2230, %v2137
        %v2232 = vpop.permute.xlu0 %2231
        %2235 = vset.pattern.permute.xlu0 2
        %2236 = vperm.xlu0 %2235, %v2138
        %v2237 = vpop.permute.xlu0 %2236
        %2240 = vset.pattern.permute.xlu0 2
        %2241 = vperm.xlu0 %2240, %v2139
        %v2242 = vpop.permute.xlu0 %2241
        %2245 = vset.pattern.permute.xlu0 2
        %2246 = vperm.xlu0 %2245, %v2140
        %v2247 = vpop.permute.xlu0 %2246
        %2250 = vset.pattern.permute.xlu0 2
        %2251 = vperm.xlu0 %2250, %v2141
        %v2252 = vpop.permute.xlu0 %2251
        %2255 = vset.pattern.permute.xlu0 2
        %2256 = vperm.xlu0 %2255, %v2142
        %v2257 = vpop.permute.xlu0 %2256
        %2260 = vset.pattern.permute.xlu0 2
        %2261 = vperm.xlu0 %2260, %v2143
        %v2262 = vpop.permute.xlu0 %2261
        %2265 = vset.pattern.permute.xlu0 2
        %2266 = vperm.xlu0 %2265, %v2144
        %v2267 = vpop.permute.xlu0 %2266
        %2270 = vset.pattern.permute.xlu0 2
        %2271 = vperm.xlu0 %2270, %v2145
        %v2272 = vpop.permute.xlu0 %2271
        %2275 = vset.pattern.permute.xlu0 2
        %2276 = vperm.xlu0 %2275, %v2146
        %v2277 = vpop.permute.xlu0 %2276
        %2280 = vset.pattern.permute.xlu0 2
        %2281 = vperm.xlu0 %2280, %v2147
        %v2282 = vpop.permute.xlu0 %2281
        %2285 = vset.pattern.permute.xlu0 2
        %2286 = vperm.xlu0 %2285, %v2148
        %v2287 = vpop.permute.xlu0 %2286
        %2290 = vset.pattern.permute.xlu0 2
        %2291 = vperm.xlu0 %2290, %v2149
        %v2292 = vpop.permute.xlu0 %2291
        %2295 = vset.pattern.permute.xlu0 2
        %2296 = vperm.xlu0 %2295, %v2150
        %v2297 = vpop.permute.xlu0 %2296
        %2300 = vset.pattern.permute.xlu0 2
        %2301 = vperm.xlu0 %2300, %v2151
        %v2302 = vpop.permute.xlu0 %2301
        %2305 = vset.pattern.permute.xlu0 2
        %2306 = vperm.xlu0 %2305, %v2152
        %v2307 = vpop.permute.xlu0 %2306
        %2310 = vset.pattern.permute.xlu0 2
        %2311 = vperm.xlu0 %2310, %v2153
        %v2312 = vpop.permute.xlu0 %2311
        %v2314 = vmul.f32 %v1173, %v2157
        %v2315 = vmul.f32 %v1188, %v2157
        %v2316 = vmul.f32 %v1203, %v2162
        %v2317 = vmul.f32 %v1218, %v2162
        %v2318 = vmul.f32 %v1233, %v2167
        %v2319 = vmul.f32 %v1248, %v2167
        %v2320 = vmul.f32 %v1263, %v2172
        %v2321 = vmul.f32 %v1278, %v2172
        %v2322 = vmul.f32 %v1293, %v2177
        %v2323 = vmul.f32 %v1308, %v2177
        %v2324 = vmul.f32 %v1323, %v2182
        %v2325 = vmul.f32 %v1338, %v2182
        %v2326 = vmul.f32 %v1353, %v2187
        %v2327 = vmul.f32 %v1368, %v2187
        %v2328 = vmul.f32 %v1383, %v2192
        %v2329 = vmul.f32 %v1398, %v2192
        %v2330 = vmul.f32 %v1413, %v2197
        %v2331 = vmul.f32 %v1428, %v2197
        %v2332 = vmul.f32 %v1443, %v2202
        %v2333 = vmul.f32 %v1458, %v2202
        %v2334 = vmul.f32 %v1473, %v2207
        %v2335 = vmul.f32 %v1488, %v2207
        %v2336 = vmul.f32 %v1503, %v2212
        %v2337 = vmul.f32 %v1518, %v2212
        %v2338 = vmul.f32 %v1533, %v2217
        %v2339 = vmul.f32 %v1548, %v2217
        %v2340 = vmul.f32 %v1563, %v2222
        %v2341 = vmul.f32 %v1578, %v2222
        %v2342 = vmul.f32 %v1593, %v2227
        %v2343 = vmul.f32 %v1608, %v2227
        %v2344 = vmul.f32 %v1623, %v2232
        %v2345 = vmul.f32 %v1638, %v2232
        %v2346 = vmul.f32 %v1653, %v2237
        %v2347 = vmul.f32 %v1668, %v2237
        %v2348 = vmul.f32 %v1683, %v2242
        %v2349 = vmul.f32 %v1698, %v2242
        %v2350 = vmul.f32 %v1713, %v2247
        %v2351 = vmul.f32 %v1728, %v2247
        %v2352 = vmul.f32 %v1743, %v2252
        %v2353 = vmul.f32 %v1758, %v2252
        %v2354 = vmul.f32 %v1773, %v2257
        %v2355 = vmul.f32 %v1788, %v2257
        %v2356 = vmul.f32 %v1803, %v2262
        %v2357 = vmul.f32 %v1818, %v2262
        %v2358 = vmul.f32 %v1833, %v2267
        %v2359 = vmul.f32 %v1848, %v2267
        %v2360 = vmul.f32 %v1863, %v2272
        %v2361 = vmul.f32 %v1878, %v2272
        %v2362 = vmul.f32 %v1893, %v2277
        %v2363 = vmul.f32 %v1908, %v2277
        %v2364 = vmul.f32 %v1923, %v2282
        %v2365 = vmul.f32 %v1938, %v2282
        %v2366 = vmul.f32 %v1953, %v2287
        %v2367 = vmul.f32 %v1968, %v2287
        %v2368 = vmul.f32 %v1983, %v2292
        %v2369 = vmul.f32 %v1998, %v2292
        %v2370 = vmul.f32 %v2013, %v2297
        %v2371 = vmul.f32 %v2028, %v2297
        %v2372 = vmul.f32 %v2043, %v2302
        %v2373 = vmul.f32 %v2058, %v2302
        %v2374 = vmul.f32 %v2073, %v2307
        %v2375 = vmul.f32 %v2088, %v2307
        %v2376 = vmul.f32 %v2103, %v2312
        %v2377 = vmul.f32 %v2118, %v2312
        %2378 = vset.pattern.permute.xlu0 1
        %2379 = vperm.xlu0 %2378, %v2122
        %v2380 = vpop.permute.xlu0 %2379
        %2382 = vset.pattern.permute.xlu0 1
        %2383 = vperm.xlu0 %2382, %v2123
        %v2384 = vpop.permute.xlu0 %2383
        %2386 = vset.pattern.permute.xlu0 1
        %2387 = vperm.xlu0 %2386, %v2124
        %v2388 = vpop.permute.xlu0 %2387
        %2390 = vset.pattern.permute.xlu0 1
        %2391 = vperm.xlu0 %2390, %v2125
        %v2392 = vpop.permute.xlu0 %2391
        %2394 = vset.pattern.permute.xlu0 1
        %2395 = vperm.xlu0 %2394, %v2126
        %v2396 = vpop.permute.xlu0 %2395
        %2398 = vset.pattern.permute.xlu0 1
        %2399 = vperm.xlu0 %2398, %v2127
        %v2400 = vpop.permute.xlu0 %2399
        %2402 = vset.pattern.permute.xlu0 1
        %2403 = vperm.xlu0 %2402, %v2128
        %v2404 = vpop.permute.xlu0 %2403
        %2406 = vset.pattern.permute.xlu0 1
        %2407 = vperm.xlu0 %2406, %v2129
        %v2408 = vpop.permute.xlu0 %2407
        %2410 = vset.pattern.permute.xlu0 1
        %2411 = vperm.xlu0 %2410, %v2130
        %v2412 = vpop.permute.xlu0 %2411
        %2414 = vset.pattern.permute.xlu0 1
        %2415 = vperm.xlu0 %2414, %v2131
        %v2416 = vpop.permute.xlu0 %2415
        %2418 = vset.pattern.permute.xlu0 1
        %2419 = vperm.xlu0 %2418, %v2132
        %v2420 = vpop.permute.xlu0 %2419
        %2422 = vset.pattern.permute.xlu0 1
        %2423 = vperm.xlu0 %2422, %v2133
        %v2424 = vpop.permute.xlu0 %2423
        %2426 = vset.pattern.permute.xlu0 1
        %2427 = vperm.xlu0 %2426, %v2134
        %v2428 = vpop.permute.xlu0 %2427
        %2430 = vset.pattern.permute.xlu0 1
        %2431 = vperm.xlu0 %2430, %v2135
        %v2432 = vpop.permute.xlu0 %2431
        %2434 = vset.pattern.permute.xlu0 1
        %2435 = vperm.xlu0 %2434, %v2136
        %v2436 = vpop.permute.xlu0 %2435
        %2438 = vset.pattern.permute.xlu0 1
        %2439 = vperm.xlu0 %2438, %v2137
        %v2440 = vpop.permute.xlu0 %2439
        %2442 = vset.pattern.permute.xlu0 1
        %2443 = vperm.xlu0 %2442, %v2138
        %v2444 = vpop.permute.xlu0 %2443
        %2446 = vset.pattern.permute.xlu0 1
        %2447 = vperm.xlu0 %2446, %v2139
        %v2448 = vpop.permute.xlu0 %2447
        %2450 = vset.pattern.permute.xlu0 1
        %2451 = vperm.xlu0 %2450, %v2140
        %v2452 = vpop.permute.xlu0 %2451
        %2454 = vset.pattern.permute.xlu0 1
        %2455 = vperm.xlu0 %2454, %v2141
        %v2456 = vpop.permute.xlu0 %2455
        %2458 = vset.pattern.permute.xlu0 1
        %2459 = vperm.xlu0 %2458, %v2142
        %v2460 = vpop.permute.xlu0 %2459
        %2462 = vset.pattern.permute.xlu0 1
        %2463 = vperm.xlu0 %2462, %v2143
        %v2464 = vpop.permute.xlu0 %2463
        %2466 = vset.pattern.permute.xlu0 1
        %2467 = vperm.xlu0 %2466, %v2144
        %v2468 = vpop.permute.xlu0 %2467
        %2470 = vset.pattern.permute.xlu0 1
        %2471 = vperm.xlu0 %2470, %v2145
        %v2472 = vpop.permute.xlu0 %2471
        %2474 = vset.pattern.permute.xlu0 1
        %2475 = vperm.xlu0 %2474, %v2146
        %v2476 = vpop.permute.xlu0 %2475
        %2478 = vset.pattern.permute.xlu0 1
        %2479 = vperm.xlu0 %2478, %v2147
        %v2480 = vpop.permute.xlu0 %2479
        %2482 = vset.pattern.permute.xlu0 1
        %2483 = vperm.xlu0 %2482, %v2148
        %v2484 = vpop.permute.xlu0 %2483
        %2486 = vset.pattern.permute.xlu0 1
        %2487 = vperm.xlu0 %2486, %v2149
        %v2488 = vpop.permute.xlu0 %2487
        %2490 = vset.pattern.permute.xlu0 1
        %2491 = vperm.xlu0 %2490, %v2150
        %v2492 = vpop.permute.xlu0 %2491
        %2494 = vset.pattern.permute.xlu0 1
        %2495 = vperm.xlu0 %2494, %v2151
        %v2496 = vpop.permute.xlu0 %2495
        %2498 = vset.pattern.permute.xlu0 1
        %2499 = vperm.xlu0 %2498, %v2152
        %v2500 = vpop.permute.xlu0 %2499
        %2502 = vset.pattern.permute.xlu0 1
        %2503 = vperm.xlu0 %2502, %v2153
        %v2504 = vpop.permute.xlu0 %2503
        %v2506 = vadd.f32 %v2380, %v2314
        %v2507 = vadd.f32 %v2380, %v2315
        %v2508 = vadd.f32 %v2384, %v2316
        %v2509 = vadd.f32 %v2384, %v2317
        %v2510 = vadd.f32 %v2388, %v2318
        %v2511 = vadd.f32 %v2388, %v2319
        %v2512 = vadd.f32 %v2392, %v2320
        %v2513 = vadd.f32 %v2392, %v2321
        %v2514 = vadd.f32 %v2396, %v2322
        %v2515 = vadd.f32 %v2396, %v2323
        %v2516 = vadd.f32 %v2400, %v2324
        %v2517 = vadd.f32 %v2400, %v2325
        %v2518 = vadd.f32 %v2404, %v2326
        %v2519 = vadd.f32 %v2404, %v2327
        %v2520 = vadd.f32 %v2408, %v2328
        %v2521 = vadd.f32 %v2408, %v2329
        %v2522 = vadd.f32 %v2412, %v2330
        %v2523 = vadd.f32 %v2412, %v2331
        %v2524 = vadd.f32 %v2416, %v2332
        %v2525 = vadd.f32 %v2416, %v2333
        %v2526 = vadd.f32 %v2420, %v2334
        %v2527 = vadd.f32 %v2420, %v2335
        %v2528 = vadd.f32 %v2424, %v2336
        %v2529 = vadd.f32 %v2424, %v2337
        %v2530 = vadd.f32 %v2428, %v2338
        %v2531 = vadd.f32 %v2428, %v2339
        %v2532 = vadd.f32 %v2432, %v2340
        %v2533 = vadd.f32 %v2432, %v2341
        %v2534 = vadd.f32 %v2436, %v2342
        %v2535 = vadd.f32 %v2436, %v2343
        %v2536 = vadd.f32 %v2440, %v2344
        %v2537 = vadd.f32 %v2440, %v2345
        %v2538 = vadd.f32 %v2444, %v2346
        %v2539 = vadd.f32 %v2444, %v2347
        %v2540 = vadd.f32 %v2448, %v2348
        %v2541 = vadd.f32 %v2448, %v2349
        %v2542 = vadd.f32 %v2452, %v2350
        %v2543 = vadd.f32 %v2452, %v2351
        %v2544 = vadd.f32 %v2456, %v2352
        %v2545 = vadd.f32 %v2456, %v2353
        %v2546 = vadd.f32 %v2460, %v2354
        %v2547 = vadd.f32 %v2460, %v2355
        %v2548 = vadd.f32 %v2464, %v2356
        %v2549 = vadd.f32 %v2464, %v2357
        %v2550 = vadd.f32 %v2468, %v2358
        %v2551 = vadd.f32 %v2468, %v2359
        %v2552 = vadd.f32 %v2472, %v2360
        %v2553 = vadd.f32 %v2472, %v2361
        %v2554 = vadd.f32 %v2476, %v2362
        %v2555 = vadd.f32 %v2476, %v2363
        %v2556 = vadd.f32 %v2480, %v2364
        %v2557 = vadd.f32 %v2480, %v2365
        %v2558 = vadd.f32 %v2484, %v2366
        %v2559 = vadd.f32 %v2484, %v2367
        %v2560 = vadd.f32 %v2488, %v2368
        %v2561 = vadd.f32 %v2488, %v2369
        %v2562 = vadd.f32 %v2492, %v2370
        %v2563 = vadd.f32 %v2492, %v2371
        %v2564 = vadd.f32 %v2496, %v2372
        %v2565 = vadd.f32 %v2496, %v2373
        %v2566 = vadd.f32 %v2500, %v2374
        %v2567 = vadd.f32 %v2500, %v2375
        %v2568 = vadd.f32 %v2504, %v2376
        %v2569 = vadd.f32 %v2504, %v2377
        %v2570 = vmul.f32 %v1173, %v2506
        %v2571 = vmul.f32 %v1188, %v2507
        %v2572 = vmul.f32 %v1203, %v2508
        %v2573 = vmul.f32 %v1218, %v2509
        %v2574 = vmul.f32 %v1233, %v2510
        %v2575 = vmul.f32 %v1248, %v2511
        %v2576 = vmul.f32 %v1263, %v2512
        %v2577 = vmul.f32 %v1278, %v2513
        %v2578 = vmul.f32 %v1293, %v2514
        %v2579 = vmul.f32 %v1308, %v2515
        %v2580 = vmul.f32 %v1323, %v2516
        %v2581 = vmul.f32 %v1338, %v2517
        %v2582 = vmul.f32 %v1353, %v2518
        %v2583 = vmul.f32 %v1368, %v2519
        %v2584 = vmul.f32 %v1383, %v2520
        %v2585 = vmul.f32 %v1398, %v2521
        %v2586 = vmul.f32 %v1413, %v2522
        %v2587 = vmul.f32 %v1428, %v2523
        %v2588 = vmul.f32 %v1443, %v2524
        %v2589 = vmul.f32 %v1458, %v2525
        %v2590 = vmul.f32 %v1473, %v2526
        %v2591 = vmul.f32 %v1488, %v2527
        %v2592 = vmul.f32 %v1503, %v2528
        %v2593 = vmul.f32 %v1518, %v2529
        %v2594 = vmul.f32 %v1533, %v2530
        %v2595 = vmul.f32 %v1548, %v2531
        %v2596 = vmul.f32 %v1563, %v2532
        %v2597 = vmul.f32 %v1578, %v2533
        %v2598 = vmul.f32 %v1593, %v2534
        %v2599 = vmul.f32 %v1608, %v2535
        %v2600 = vmul.f32 %v1623, %v2536
        %v2601 = vmul.f32 %v1638, %v2537
        %v2602 = vmul.f32 %v1653, %v2538
        %v2603 = vmul.f32 %v1668, %v2539
        %v2604 = vmul.f32 %v1683, %v2540
        %v2605 = vmul.f32 %v1698, %v2541
        %v2606 = vmul.f32 %v1713, %v2542
        %v2607 = vmul.f32 %v1728, %v2543
        %v2608 = vmul.f32 %v1743, %v2544
        %v2609 = vmul.f32 %v1758, %v2545
        %v2610 = vmul.f32 %v1773, %v2546
        %v2611 = vmul.f32 %v1788, %v2547
        %v2612 = vmul.f32 %v1803, %v2548
        %v2613 = vmul.f32 %v1818, %v2549
        %v2614 = vmul.f32 %v1833, %v2550
        %v2615 = vmul.f32 %v1848, %v2551
        %v2616 = vmul.f32 %v1863, %v2552
        %v2617 = vmul.f32 %v1878, %v2553
        %v2618 = vmul.f32 %v1893, %v2554
        %v2619 = vmul.f32 %v1908, %v2555
        %v2620 = vmul.f32 %v1923, %v2556
        %v2621 = vmul.f32 %v1938, %v2557
        %v2622 = vmul.f32 %v1953, %v2558
        %v2623 = vmul.f32 %v1968, %v2559
        %v2624 = vmul.f32 %v1983, %v2560
        %v2625 = vmul.f32 %v1998, %v2561
        %v2626 = vmul.f32 %v2013, %v2562
        %v2627 = vmul.f32 %v2028, %v2563
        %v2628 = vmul.f32 %v2043, %v2564
        %v2629 = vmul.f32 %v2058, %v2565
        %v2630 = vmul.f32 %v2073, %v2566
        %v2631 = vmul.f32 %v2088, %v2567
        %v2632 = vmul.f32 %v2103, %v2568
        %v2633 = vmul.f32 %v2118, %v2569
        %2634 = vset.pattern.permute.xlu0 4
        %2635 = vperm.xlu0 %2634, %v2122
        %v2636 = vpop.permute.xlu0 %2635
        %2638 = vset.pattern.permute.xlu0 4
        %2639 = vperm.xlu0 %2638, %v2123
        %v2640 = vpop.permute.xlu0 %2639
        %2642 = vset.pattern.permute.xlu0 4
        %2643 = vperm.xlu0 %2642, %v2124
        %v2644 = vpop.permute.xlu0 %2643
        %2646 = vset.pattern.permute.xlu0 4
        %2647 = vperm.xlu0 %2646, %v2125
        %v2648 = vpop.permute.xlu0 %2647
        %2650 = vset.pattern.permute.xlu0 4
        %2651 = vperm.xlu0 %2650, %v2126
        %v2652 = vpop.permute.xlu0 %2651
        %2654 = vset.pattern.permute.xlu0 4
        %2655 = vperm.xlu0 %2654, %v2127
        %v2656 = vpop.permute.xlu0 %2655
        %2658 = vset.pattern.permute.xlu0 4
        %2659 = vperm.xlu0 %2658, %v2128
        %v2660 = vpop.permute.xlu0 %2659
        %2662 = vset.pattern.permute.xlu0 4
        %2663 = vperm.xlu0 %2662, %v2129
        %v2664 = vpop.permute.xlu0 %2663
        %2666 = vset.pattern.permute.xlu0 4
        %2667 = vperm.xlu0 %2666, %v2130
        %v2668 = vpop.permute.xlu0 %2667
        %2670 = vset.pattern.permute.xlu0 4
        %2671 = vperm.xlu0 %2670, %v2131
        %v2672 = vpop.permute.xlu0 %2671
        %2674 = vset.pattern.permute.xlu0 4
        %2675 = vperm.xlu0 %2674, %v2132
        %v2676 = vpop.permute.xlu0 %2675
        %2678 = vset.pattern.permute.xlu0 4
        %2679 = vperm.xlu0 %2678, %v2133
        %v2680 = vpop.permute.xlu0 %2679
        %2682 = vset.pattern.permute.xlu0 4
        %2683 = vperm.xlu0 %2682, %v2134
        %v2684 = vpop.permute.xlu0 %2683
        %2686 = vset.pattern.permute.xlu0 4
        %2687 = vperm.xlu0 %2686, %v2135
        %v2688 = vpop.permute.xlu0 %2687
        %2690 = vset.pattern.permute.xlu0 4
        %2691 = vperm.xlu0 %2690, %v2136
        %v2692 = vpop.permute.xlu0 %2691
        %2694 = vset.pattern.permute.xlu0 4
        %2695 = vperm.xlu0 %2694, %v2137
        %v2696 = vpop.permute.xlu0 %2695
        %2698 = vset.pattern.permute.xlu0 4
        %2699 = vperm.xlu0 %2698, %v2138
        %v2700 = vpop.permute.xlu0 %2699
        %2702 = vset.pattern.permute.xlu0 4
        %2703 = vperm.xlu0 %2702, %v2139
        %v2704 = vpop.permute.xlu0 %2703
        %2706 = vset.pattern.permute.xlu0 4
        %2707 = vperm.xlu0 %2706, %v2140
        %v2708 = vpop.permute.xlu0 %2707
        %2710 = vset.pattern.permute.xlu0 4
        %2711 = vperm.xlu0 %2710, %v2141
        %v2712 = vpop.permute.xlu0 %2711
        %2714 = vset.pattern.permute.xlu0 4
        %2715 = vperm.xlu0 %2714, %v2142
        %v2716 = vpop.permute.xlu0 %2715
        %2718 = vset.pattern.permute.xlu0 4
        %2719 = vperm.xlu0 %2718, %v2143
        %v2720 = vpop.permute.xlu0 %2719
        %2722 = vset.pattern.permute.xlu0 4
        %2723 = vperm.xlu0 %2722, %v2144
        %v2724 = vpop.permute.xlu0 %2723
        %2726 = vset.pattern.permute.xlu0 4
        %2727 = vperm.xlu0 %2726, %v2145
        %v2728 = vpop.permute.xlu0 %2727
        %2730 = vset.pattern.permute.xlu0 4
        %2731 = vperm.xlu0 %2730, %v2146
        %v2732 = vpop.permute.xlu0 %2731
        %2734 = vset.pattern.permute.xlu0 4
        %2735 = vperm.xlu0 %2734, %v2147
        %v2736 = vpop.permute.xlu0 %2735
        %2738 = vset.pattern.permute.xlu0 4
        %2739 = vperm.xlu0 %2738, %v2148
        %v2740 = vpop.permute.xlu0 %2739
        %2742 = vset.pattern.permute.xlu0 4
        %2743 = vperm.xlu0 %2742, %v2149
        %v2744 = vpop.permute.xlu0 %2743
        %2746 = vset.pattern.permute.xlu0 4
        %2747 = vperm.xlu0 %2746, %v2150
        %v2748 = vpop.permute.xlu0 %2747
        %2750 = vset.pattern.permute.xlu0 4
        %2751 = vperm.xlu0 %2750, %v2151
        %v2752 = vpop.permute.xlu0 %2751
        %2754 = vset.pattern.permute.xlu0 4
        %2755 = vperm.xlu0 %2754, %v2152
        %v2756 = vpop.permute.xlu0 %2755
        %2758 = vset.pattern.permute.xlu0 4
        %2759 = vperm.xlu0 %2758, %v2153
        %v2760 = vpop.permute.xlu0 %2759
        %v2763 = vperm.slane %v2119, 0
        %v2764 = vperm.slane %v2119, 1
        %v2767 = vmul.f32 %v2636, %v2763
        %v2768 = vmul.f32 %v2636, %v2764
        %v2769 = vmul.f32 %v2640, %v2763
        %v2770 = vmul.f32 %v2640, %v2764
        %v2771 = vmul.f32 %v2644, %v2763
        %v2772 = vmul.f32 %v2644, %v2764
        %v2773 = vmul.f32 %v2648, %v2763
        %v2774 = vmul.f32 %v2648, %v2764
        %v2775 = vmul.f32 %v2652, %v2763
        %v2776 = vmul.f32 %v2652, %v2764
        %v2777 = vmul.f32 %v2656, %v2763
        %v2778 = vmul.f32 %v2656, %v2764
        %v2779 = vmul.f32 %v2660, %v2763
        %v2780 = vmul.f32 %v2660, %v2764
        %v2781 = vmul.f32 %v2664, %v2763
        %v2782 = vmul.f32 %v2664, %v2764
        %v2783 = vmul.f32 %v2668, %v2763
        %v2784 = vmul.f32 %v2668, %v2764
        %v2785 = vmul.f32 %v2672, %v2763
        %v2786 = vmul.f32 %v2672, %v2764
        %v2787 = vmul.f32 %v2676, %v2763
        %v2788 = vmul.f32 %v2676, %v2764
        %v2789 = vmul.f32 %v2680, %v2763
        %v2790 = vmul.f32 %v2680, %v2764
        %v2791 = vmul.f32 %v2684, %v2763
        %v2792 = vmul.f32 %v2684, %v2764
        %v2793 = vmul.f32 %v2688, %v2763
        %v2794 = vmul.f32 %v2688, %v2764
        %v2795 = vmul.f32 %v2692, %v2763
        %v2796 = vmul.f32 %v2692, %v2764
        %v2797 = vmul.f32 %v2696, %v2763
        %v2798 = vmul.f32 %v2696, %v2764
        %v2799 = vmul.f32 %v2700, %v2763
        %v2800 = vmul.f32 %v2700, %v2764
        %v2801 = vmul.f32 %v2704, %v2763
        %v2802 = vmul.f32 %v2704, %v2764
        %v2803 = vmul.f32 %v2708, %v2763
        %v2804 = vmul.f32 %v2708, %v2764
        %v2805 = vmul.f32 %v2712, %v2763
        %v2806 = vmul.f32 %v2712, %v2764
        %v2807 = vmul.f32 %v2716, %v2763
        %v2808 = vmul.f32 %v2716, %v2764
        %v2809 = vmul.f32 %v2720, %v2763
        %v2810 = vmul.f32 %v2720, %v2764
        %v2811 = vmul.f32 %v2724, %v2763
        %v2812 = vmul.f32 %v2724, %v2764
        %v2813 = vmul.f32 %v2728, %v2763
        %v2814 = vmul.f32 %v2728, %v2764
        %v2815 = vmul.f32 %v2732, %v2763
        %v2816 = vmul.f32 %v2732, %v2764
        %v2817 = vmul.f32 %v2736, %v2763
        %v2818 = vmul.f32 %v2736, %v2764
        %v2819 = vmul.f32 %v2740, %v2763
        %v2820 = vmul.f32 %v2740, %v2764
        %v2821 = vmul.f32 %v2744, %v2763
        %v2822 = vmul.f32 %v2744, %v2764
        %v2823 = vmul.f32 %v2748, %v2763
        %v2824 = vmul.f32 %v2748, %v2764
        %v2825 = vmul.f32 %v2752, %v2763
        %v2826 = vmul.f32 %v2752, %v2764
        %v2827 = vmul.f32 %v2756, %v2763
        %v2828 = vmul.f32 %v2756, %v2764
        %v2829 = vmul.f32 %v2760, %v2763
        %v2830 = vmul.f32 %v2760, %v2764
        %2831 = vset.pattern.permute.xlu0 5
        %2832 = vperm.xlu0 %2831, %v2122
        %v2833 = vpop.permute.xlu0 %2832
        %2835 = vset.pattern.permute.xlu0 5
        %2836 = vperm.xlu0 %2835, %v2123
        %v2837 = vpop.permute.xlu0 %2836
        %2839 = vset.pattern.permute.xlu0 5
        %2840 = vperm.xlu0 %2839, %v2124
        %v2841 = vpop.permute.xlu0 %2840
        %2843 = vset.pattern.permute.xlu0 5
        %2844 = vperm.xlu0 %2843, %v2125
        %v2845 = vpop.permute.xlu0 %2844
        %2847 = vset.pattern.permute.xlu0 5
        %2848 = vperm.xlu0 %2847, %v2126
        %v2849 = vpop.permute.xlu0 %2848
        %2851 = vset.pattern.permute.xlu0 5
        %2852 = vperm.xlu0 %2851, %v2127
        %v2853 = vpop.permute.xlu0 %2852
        %2855 = vset.pattern.permute.xlu0 5
        %2856 = vperm.xlu0 %2855, %v2128
        %v2857 = vpop.permute.xlu0 %2856
        %2859 = vset.pattern.permute.xlu0 5
        %2860 = vperm.xlu0 %2859, %v2129
        %v2861 = vpop.permute.xlu0 %2860
        %2863 = vset.pattern.permute.xlu0 5
        %2864 = vperm.xlu0 %2863, %v2130
        %v2865 = vpop.permute.xlu0 %2864
        %2867 = vset.pattern.permute.xlu0 5
        %2868 = vperm.xlu0 %2867, %v2131
        %v2869 = vpop.permute.xlu0 %2868
        %2871 = vset.pattern.permute.xlu0 5
        %2872 = vperm.xlu0 %2871, %v2132
        %v2873 = vpop.permute.xlu0 %2872
        %2875 = vset.pattern.permute.xlu0 5
        %2876 = vperm.xlu0 %2875, %v2133
        %v2877 = vpop.permute.xlu0 %2876
        %2879 = vset.pattern.permute.xlu0 5
        %2880 = vperm.xlu0 %2879, %v2134
        %v2881 = vpop.permute.xlu0 %2880
        %2883 = vset.pattern.permute.xlu0 5
        %2884 = vperm.xlu0 %2883, %v2135
        %v2885 = vpop.permute.xlu0 %2884
        %2887 = vset.pattern.permute.xlu0 5
        %2888 = vperm.xlu0 %2887, %v2136
        %v2889 = vpop.permute.xlu0 %2888
        %2891 = vset.pattern.permute.xlu0 5
        %2892 = vperm.xlu0 %2891, %v2137
        %v2893 = vpop.permute.xlu0 %2892
        %2895 = vset.pattern.permute.xlu0 5
        %2896 = vperm.xlu0 %2895, %v2138
        %v2897 = vpop.permute.xlu0 %2896
        %2899 = vset.pattern.permute.xlu0 5
        %2900 = vperm.xlu0 %2899, %v2139
        %v2901 = vpop.permute.xlu0 %2900
        %2903 = vset.pattern.permute.xlu0 5
        %2904 = vperm.xlu0 %2903, %v2140
        %v2905 = vpop.permute.xlu0 %2904
        %2907 = vset.pattern.permute.xlu0 5
        %2908 = vperm.xlu0 %2907, %v2141
        %v2909 = vpop.permute.xlu0 %2908
        %2911 = vset.pattern.permute.xlu0 5
        %2912 = vperm.xlu0 %2911, %v2142
        %v2913 = vpop.permute.xlu0 %2912
        %2915 = vset.pattern.permute.xlu0 5
        %2916 = vperm.xlu0 %2915, %v2143
        %v2917 = vpop.permute.xlu0 %2916
        %2919 = vset.pattern.permute.xlu0 5
        %2920 = vperm.xlu0 %2919, %v2144
        %v2921 = vpop.permute.xlu0 %2920
        %2923 = vset.pattern.permute.xlu0 5
        %2924 = vperm.xlu0 %2923, %v2145
        %v2925 = vpop.permute.xlu0 %2924
        %2927 = vset.pattern.permute.xlu0 5
        %2928 = vperm.xlu0 %2927, %v2146
        %v2929 = vpop.permute.xlu0 %2928
        %2931 = vset.pattern.permute.xlu0 5
        %2932 = vperm.xlu0 %2931, %v2147
        %v2933 = vpop.permute.xlu0 %2932
        %2935 = vset.pattern.permute.xlu0 5
        %2936 = vperm.xlu0 %2935, %v2148
        %v2937 = vpop.permute.xlu0 %2936
        %2939 = vset.pattern.permute.xlu0 5
        %2940 = vperm.xlu0 %2939, %v2149
        %v2941 = vpop.permute.xlu0 %2940
        %2943 = vset.pattern.permute.xlu0 5
        %2944 = vperm.xlu0 %2943, %v2150
        %v2945 = vpop.permute.xlu0 %2944
        %2947 = vset.pattern.permute.xlu0 5
        %2948 = vperm.xlu0 %2947, %v2151
        %v2949 = vpop.permute.xlu0 %2948
        %2951 = vset.pattern.permute.xlu0 5
        %2952 = vperm.xlu0 %2951, %v2152
        %v2953 = vpop.permute.xlu0 %2952
        %2955 = vset.pattern.permute.xlu0 5
        %2956 = vperm.xlu0 %2955, %v2153
        %v2957 = vpop.permute.xlu0 %2956
        %v2960 = vperm.slane %v2121, 0
        %v2961 = vperm.slane %v2121, 1
        %v2964 = vmul.f32 %v2833, %v2960
        %v2965 = vmul.f32 %v2833, %v2961
        %v2966 = vmul.f32 %v2837, %v2960
        %v2967 = vmul.f32 %v2837, %v2961
        %v2968 = vmul.f32 %v2841, %v2960
        %v2969 = vmul.f32 %v2841, %v2961
        %v2970 = vmul.f32 %v2845, %v2960
        %v2971 = vmul.f32 %v2845, %v2961
        %v2972 = vmul.f32 %v2849, %v2960
        %v2973 = vmul.f32 %v2849, %v2961
        %v2974 = vmul.f32 %v2853, %v2960
        %v2975 = vmul.f32 %v2853, %v2961
        %v2976 = vmul.f32 %v2857, %v2960
        %v2977 = vmul.f32 %v2857, %v2961
        %v2978 = vmul.f32 %v2861, %v2960
        %v2979 = vmul.f32 %v2861, %v2961
        %v2980 = vmul.f32 %v2865, %v2960
        %v2981 = vmul.f32 %v2865, %v2961
        %v2982 = vmul.f32 %v2869, %v2960
        %v2983 = vmul.f32 %v2869, %v2961
        %v2984 = vmul.f32 %v2873, %v2960
        %v2985 = vmul.f32 %v2873, %v2961
        %v2986 = vmul.f32 %v2877, %v2960
        %v2987 = vmul.f32 %v2877, %v2961
        %v2988 = vmul.f32 %v2881, %v2960
        %v2989 = vmul.f32 %v2881, %v2961
        %v2990 = vmul.f32 %v2885, %v2960
        %v2991 = vmul.f32 %v2885, %v2961
        %v2992 = vmul.f32 %v2889, %v2960
        %v2993 = vmul.f32 %v2889, %v2961
        %v2994 = vmul.f32 %v2893, %v2960
        %v2995 = vmul.f32 %v2893, %v2961
        %v2996 = vmul.f32 %v2897, %v2960
        %v2997 = vmul.f32 %v2897, %v2961
        %v2998 = vmul.f32 %v2901, %v2960
        %v2999 = vmul.f32 %v2901, %v2961
        %v3000 = vmul.f32 %v2905, %v2960
        %v3001 = vmul.f32 %v2905, %v2961
        %v3002 = vmul.f32 %v2909, %v2960
        %v3003 = vmul.f32 %v2909, %v2961
        %v3004 = vmul.f32 %v2913, %v2960
        %v3005 = vmul.f32 %v2913, %v2961
        %v3006 = vmul.f32 %v2917, %v2960
        %v3007 = vmul.f32 %v2917, %v2961
        %v3008 = vmul.f32 %v2921, %v2960
        %v3009 = vmul.f32 %v2921, %v2961
        %v3010 = vmul.f32 %v2925, %v2960
        %v3011 = vmul.f32 %v2925, %v2961
        %v3012 = vmul.f32 %v2929, %v2960
        %v3013 = vmul.f32 %v2929, %v2961
        %v3014 = vmul.f32 %v2933, %v2960
        %v3015 = vmul.f32 %v2933, %v2961
        %v3016 = vmul.f32 %v2937, %v2960
        %v3017 = vmul.f32 %v2937, %v2961
        %v3018 = vmul.f32 %v2941, %v2960
        %v3019 = vmul.f32 %v2941, %v2961
        %v3020 = vmul.f32 %v2945, %v2960
        %v3021 = vmul.f32 %v2945, %v2961
        %v3022 = vmul.f32 %v2949, %v2960
        %v3023 = vmul.f32 %v2949, %v2961
        %v3024 = vmul.f32 %v2953, %v2960
        %v3025 = vmul.f32 %v2953, %v2961
        %v3026 = vmul.f32 %v2957, %v2960
        %v3027 = vmul.f32 %v2957, %v2961
        %v3028 = vadd.f32 %v2767, %v2964
        %v3029 = vadd.f32 %v2768, %v2965
        %v3030 = vadd.f32 %v2769, %v2966
        %v3031 = vadd.f32 %v2770, %v2967
        %v3032 = vadd.f32 %v2771, %v2968
        %v3033 = vadd.f32 %v2772, %v2969
        %v3034 = vadd.f32 %v2773, %v2970
        %v3035 = vadd.f32 %v2774, %v2971
        %v3036 = vadd.f32 %v2775, %v2972
        %v3037 = vadd.f32 %v2776, %v2973
        %v3038 = vadd.f32 %v2777, %v2974
        %v3039 = vadd.f32 %v2778, %v2975
        %v3040 = vadd.f32 %v2779, %v2976
        %v3041 = vadd.f32 %v2780, %v2977
        %v3042 = vadd.f32 %v2781, %v2978
        %v3043 = vadd.f32 %v2782, %v2979
        %v3044 = vadd.f32 %v2783, %v2980
        %v3045 = vadd.f32 %v2784, %v2981
        %v3046 = vadd.f32 %v2785, %v2982
        %v3047 = vadd.f32 %v2786, %v2983
        %v3048 = vadd.f32 %v2787, %v2984
        %v3049 = vadd.f32 %v2788, %v2985
        %v3050 = vadd.f32 %v2789, %v2986
        %v3051 = vadd.f32 %v2790, %v2987
        %v3052 = vadd.f32 %v2791, %v2988
        %v3053 = vadd.f32 %v2792, %v2989
        %v3054 = vadd.f32 %v2793, %v2990
        %v3055 = vadd.f32 %v2794, %v2991
        %v3056 = vadd.f32 %v2795, %v2992
        %v3057 = vadd.f32 %v2796, %v2993
        %v3058 = vadd.f32 %v2797, %v2994
        %v3059 = vadd.f32 %v2798, %v2995
        %v3060 = vadd.f32 %v2799, %v2996
        %v3061 = vadd.f32 %v2800, %v2997
        %v3062 = vadd.f32 %v2801, %v2998
        %v3063 = vadd.f32 %v2802, %v2999
        %v3064 = vadd.f32 %v2803, %v3000
        %v3065 = vadd.f32 %v2804, %v3001
        %v3066 = vadd.f32 %v2805, %v3002
        %v3067 = vadd.f32 %v2806, %v3003
        %v3068 = vadd.f32 %v2807, %v3004
        %v3069 = vadd.f32 %v2808, %v3005
        %v3070 = vadd.f32 %v2809, %v3006
        %v3071 = vadd.f32 %v2810, %v3007
        %v3072 = vadd.f32 %v2811, %v3008
        %v3073 = vadd.f32 %v2812, %v3009
        %v3074 = vadd.f32 %v2813, %v3010
        %v3075 = vadd.f32 %v2814, %v3011
        %v3076 = vadd.f32 %v2815, %v3012
        %v3077 = vadd.f32 %v2816, %v3013
        %v3078 = vadd.f32 %v2817, %v3014
        %v3079 = vadd.f32 %v2818, %v3015
        %v3080 = vadd.f32 %v2819, %v3016
        %v3081 = vadd.f32 %v2820, %v3017
        %v3082 = vadd.f32 %v2821, %v3018
        %v3083 = vadd.f32 %v2822, %v3019
        %v3084 = vadd.f32 %v2823, %v3020
        %v3085 = vadd.f32 %v2824, %v3021
        %v3086 = vadd.f32 %v2825, %v3022
        %v3087 = vadd.f32 %v2826, %v3023
        %v3088 = vadd.f32 %v2827, %v3024
        %v3089 = vadd.f32 %v2828, %v3025
        %v3090 = vadd.f32 %v2829, %v3026
        %v3091 = vadd.f32 %v2830, %v3027
        %3092 = vset.pattern.permute.xlu0 3
        %3093 = vperm.xlu0 %3092, %v2122
        %v3094 = vpop.permute.xlu0 %3093
        %3096 = vset.pattern.permute.xlu0 3
        %3097 = vperm.xlu0 %3096, %v2123
        %v3098 = vpop.permute.xlu0 %3097
        %3100 = vset.pattern.permute.xlu0 3
        %3101 = vperm.xlu0 %3100, %v2124
        %v3102 = vpop.permute.xlu0 %3101
        %3104 = vset.pattern.permute.xlu0 3
        %3105 = vperm.xlu0 %3104, %v2125
        %v3106 = vpop.permute.xlu0 %3105
        %3108 = vset.pattern.permute.xlu0 3
        %3109 = vperm.xlu0 %3108, %v2126
        %v3110 = vpop.permute.xlu0 %3109
        %3112 = vset.pattern.permute.xlu0 3
        %3113 = vperm.xlu0 %3112, %v2127
        %v3114 = vpop.permute.xlu0 %3113
        %3116 = vset.pattern.permute.xlu0 3
        %3117 = vperm.xlu0 %3116, %v2128
        %v3118 = vpop.permute.xlu0 %3117
        %3120 = vset.pattern.permute.xlu0 3
        %3121 = vperm.xlu0 %3120, %v2129
        %v3122 = vpop.permute.xlu0 %3121
        %3124 = vset.pattern.permute.xlu0 3
        %3125 = vperm.xlu0 %3124, %v2130
        %v3126 = vpop.permute.xlu0 %3125
        %3128 = vset.pattern.permute.xlu0 3
        %3129 = vperm.xlu0 %3128, %v2131
        %v3130 = vpop.permute.xlu0 %3129
        %3132 = vset.pattern.permute.xlu0 3
        %3133 = vperm.xlu0 %3132, %v2132
        %v3134 = vpop.permute.xlu0 %3133
        %3136 = vset.pattern.permute.xlu0 3
        %3137 = vperm.xlu0 %3136, %v2133
        %v3138 = vpop.permute.xlu0 %3137
        %3140 = vset.pattern.permute.xlu0 3
        %3141 = vperm.xlu0 %3140, %v2134
        %v3142 = vpop.permute.xlu0 %3141
        %3144 = vset.pattern.permute.xlu0 3
        %3145 = vperm.xlu0 %3144, %v2135
        %v3146 = vpop.permute.xlu0 %3145
        %3148 = vset.pattern.permute.xlu0 3
        %3149 = vperm.xlu0 %3148, %v2136
        %v3150 = vpop.permute.xlu0 %3149
        %3152 = vset.pattern.permute.xlu0 3
        %3153 = vperm.xlu0 %3152, %v2137
        %v3154 = vpop.permute.xlu0 %3153
        %3156 = vset.pattern.permute.xlu0 3
        %3157 = vperm.xlu0 %3156, %v2138
        %v3158 = vpop.permute.xlu0 %3157
        %3160 = vset.pattern.permute.xlu0 3
        %3161 = vperm.xlu0 %3160, %v2139
        %v3162 = vpop.permute.xlu0 %3161
        %3164 = vset.pattern.permute.xlu0 3
        %3165 = vperm.xlu0 %3164, %v2140
        %v3166 = vpop.permute.xlu0 %3165
        %3168 = vset.pattern.permute.xlu0 3
        %3169 = vperm.xlu0 %3168, %v2141
        %v3170 = vpop.permute.xlu0 %3169
        %3172 = vset.pattern.permute.xlu0 3
        %3173 = vperm.xlu0 %3172, %v2142
        %v3174 = vpop.permute.xlu0 %3173
        %3176 = vset.pattern.permute.xlu0 3
        %3177 = vperm.xlu0 %3176, %v2143
        %v3178 = vpop.permute.xlu0 %3177
        %3180 = vset.pattern.permute.xlu0 3
        %3181 = vperm.xlu0 %3180, %v2144
        %v3182 = vpop.permute.xlu0 %3181
        %3184 = vset.pattern.permute.xlu0 3
        %3185 = vperm.xlu0 %3184, %v2145
        %v3186 = vpop.permute.xlu0 %3185
        %3188 = vset.pattern.permute.xlu0 3
        %3189 = vperm.xlu0 %3188, %v2146
        %v3190 = vpop.permute.xlu0 %3189
        %3192 = vset.pattern.permute.xlu0 3
        %3193 = vperm.xlu0 %3192, %v2147
        %v3194 = vpop.permute.xlu0 %3193
        %3196 = vset.pattern.permute.xlu0 3
        %3197 = vperm.xlu0 %3196, %v2148
        %v3198 = vpop.permute.xlu0 %3197
        %3200 = vset.pattern.permute.xlu0 3
        %3201 = vperm.xlu0 %3200, %v2149
        %v3202 = vpop.permute.xlu0 %3201
        %3204 = vset.pattern.permute.xlu0 3
        %3205 = vperm.xlu0 %3204, %v2150
        %v3206 = vpop.permute.xlu0 %3205
        %3208 = vset.pattern.permute.xlu0 3
        %3209 = vperm.xlu0 %3208, %v2151
        %v3210 = vpop.permute.xlu0 %3209
        %3212 = vset.pattern.permute.xlu0 3
        %3213 = vperm.xlu0 %3212, %v2152
        %v3214 = vpop.permute.xlu0 %3213
        %3216 = vset.pattern.permute.xlu0 3
        %3217 = vperm.xlu0 %3216, %v2153
        %v3218 = vpop.permute.xlu0 %3217
        %v3220 = vadd.f32 %v3028, %v3094
        %v3221 = vadd.f32 %v3029, %v3094
        %v3222 = vadd.f32 %v3030, %v3098
        %v3223 = vadd.f32 %v3031, %v3098
        %v3224 = vadd.f32 %v3032, %v3102
        %v3225 = vadd.f32 %v3033, %v3102
        %v3226 = vadd.f32 %v3034, %v3106
        %v3227 = vadd.f32 %v3035, %v3106
        %v3228 = vadd.f32 %v3036, %v3110
        %v3229 = vadd.f32 %v3037, %v3110
        %v3230 = vadd.f32 %v3038, %v3114
        %v3231 = vadd.f32 %v3039, %v3114
        %v3232 = vadd.f32 %v3040, %v3118
        %v3233 = vadd.f32 %v3041, %v3118
        %v3234 = vadd.f32 %v3042, %v3122
        %v3235 = vadd.f32 %v3043, %v3122
        %v3236 = vadd.f32 %v3044, %v3126
        %v3237 = vadd.f32 %v3045, %v3126
        %v3238 = vadd.f32 %v3046, %v3130
        %v3239 = vadd.f32 %v3047, %v3130
        %v3240 = vadd.f32 %v3048, %v3134
        %v3241 = vadd.f32 %v3049, %v3134
        %v3242 = vadd.f32 %v3050, %v3138
        %v3243 = vadd.f32 %v3051, %v3138
        %v3244 = vadd.f32 %v3052, %v3142
        %v3245 = vadd.f32 %v3053, %v3142
        %v3246 = vadd.f32 %v3054, %v3146
        %v3247 = vadd.f32 %v3055, %v3146
        %v3248 = vadd.f32 %v3056, %v3150
        %v3249 = vadd.f32 %v3057, %v3150
        %v3250 = vadd.f32 %v3058, %v3154
        %v3251 = vadd.f32 %v3059, %v3154
        %v3252 = vadd.f32 %v3060, %v3158
        %v3253 = vadd.f32 %v3061, %v3158
        %v3254 = vadd.f32 %v3062, %v3162
        %v3255 = vadd.f32 %v3063, %v3162
        %v3256 = vadd.f32 %v3064, %v3166
        %v3257 = vadd.f32 %v3065, %v3166
        %v3258 = vadd.f32 %v3066, %v3170
        %v3259 = vadd.f32 %v3067, %v3170
        %v3260 = vadd.f32 %v3068, %v3174
        %v3261 = vadd.f32 %v3069, %v3174
        %v3262 = vadd.f32 %v3070, %v3178
        %v3263 = vadd.f32 %v3071, %v3178
        %v3264 = vadd.f32 %v3072, %v3182
        %v3265 = vadd.f32 %v3073, %v3182
        %v3266 = vadd.f32 %v3074, %v3186
        %v3267 = vadd.f32 %v3075, %v3186
        %v3268 = vadd.f32 %v3076, %v3190
        %v3269 = vadd.f32 %v3077, %v3190
        %v3270 = vadd.f32 %v3078, %v3194
        %v3271 = vadd.f32 %v3079, %v3194
        %v3272 = vadd.f32 %v3080, %v3198
        %v3273 = vadd.f32 %v3081, %v3198
        %v3274 = vadd.f32 %v3082, %v3202
        %v3275 = vadd.f32 %v3083, %v3202
        %v3276 = vadd.f32 %v3084, %v3206
        %v3277 = vadd.f32 %v3085, %v3206
        %v3278 = vadd.f32 %v3086, %v3210
        %v3279 = vadd.f32 %v3087, %v3210
        %v3280 = vadd.f32 %v3088, %v3214
        %v3281 = vadd.f32 %v3089, %v3214
        %v3282 = vadd.f32 %v3090, %v3218
        %v3283 = vadd.f32 %v3091, %v3218
        %v3284 = vadd.f32 %v2570, %v3220
        %v3285 = vadd.f32 %v2571, %v3221
        %v3286 = vadd.f32 %v2572, %v3222
        %v3287 = vadd.f32 %v2573, %v3223
        %v3288 = vadd.f32 %v2574, %v3224
        %v3289 = vadd.f32 %v2575, %v3225
        %v3290 = vadd.f32 %v2576, %v3226
        %v3291 = vadd.f32 %v2577, %v3227
        %v3292 = vadd.f32 %v2578, %v3228
        %v3293 = vadd.f32 %v2579, %v3229
        %v3294 = vadd.f32 %v2580, %v3230
        %v3295 = vadd.f32 %v2581, %v3231
        %v3296 = vadd.f32 %v2582, %v3232
        %v3297 = vadd.f32 %v2583, %v3233
        %v3298 = vadd.f32 %v2584, %v3234
        %v3299 = vadd.f32 %v2585, %v3235
        %v3300 = vadd.f32 %v2586, %v3236
        %v3301 = vadd.f32 %v2587, %v3237
        %v3302 = vadd.f32 %v2588, %v3238
        %v3303 = vadd.f32 %v2589, %v3239
        %v3304 = vadd.f32 %v2590, %v3240
        %v3305 = vadd.f32 %v2591, %v3241
        %v3306 = vadd.f32 %v2592, %v3242
        %v3307 = vadd.f32 %v2593, %v3243
        %v3308 = vadd.f32 %v2594, %v3244
        %v3309 = vadd.f32 %v2595, %v3245
        %v3310 = vadd.f32 %v2596, %v3246
        %v3311 = vadd.f32 %v2597, %v3247
        %v3312 = vadd.f32 %v2598, %v3248
        %v3313 = vadd.f32 %v2599, %v3249
        %v3314 = vadd.f32 %v2600, %v3250
        %v3315 = vadd.f32 %v2601, %v3251
        %v3316 = vadd.f32 %v2602, %v3252
        %v3317 = vadd.f32 %v2603, %v3253
        %v3318 = vadd.f32 %v2604, %v3254
        %v3319 = vadd.f32 %v2605, %v3255
        %v3320 = vadd.f32 %v2606, %v3256
        %v3321 = vadd.f32 %v2607, %v3257
        %v3322 = vadd.f32 %v2608, %v3258
        %v3323 = vadd.f32 %v2609, %v3259
        %v3324 = vadd.f32 %v2610, %v3260
        %v3325 = vadd.f32 %v2611, %v3261
        %v3326 = vadd.f32 %v2612, %v3262
        %v3327 = vadd.f32 %v2613, %v3263
        %v3328 = vadd.f32 %v2614, %v3264
        %v3329 = vadd.f32 %v2615, %v3265
        %v3330 = vadd.f32 %v2616, %v3266
        %v3331 = vadd.f32 %v2617, %v3267
        %v3332 = vadd.f32 %v2618, %v3268
        %v3333 = vadd.f32 %v2619, %v3269
        %v3334 = vadd.f32 %v2620, %v3270
        %v3335 = vadd.f32 %v2621, %v3271
        %v3336 = vadd.f32 %v2622, %v3272
        %v3337 = vadd.f32 %v2623, %v3273
        %v3338 = vadd.f32 %v2624, %v3274
        %v3339 = vadd.f32 %v2625, %v3275
        %v3340 = vadd.f32 %v2626, %v3276
        %v3341 = vadd.f32 %v2627, %v3277
        %v3342 = vadd.f32 %v2628, %v3278
        %v3343 = vadd.f32 %v2629, %v3279
        %v3344 = vadd.f32 %v2630, %v3280
        %v3345 = vadd.f32 %v2631, %v3281
        %v3346 = vadd.f32 %v2632, %v3282
        %v3347 = vadd.f32 %v2633, %v3283
        %3348 = vst [vmem:[%s271] sm:$0xff] %v3284
        %3349 = vst [vmem:[%s271 + $0x8] sm:$0xff] %v3285
        %3350 = vst [vmem:[%s271 + $0x10] sm:$0xff] %v3286
        %3351 = vst [vmem:[%s271 + $0x18] sm:$0xff] %v3287
        %3352 = vst [vmem:[%s271 + $0x20] sm:$0xff] %v3288
        %3353 = vst [vmem:[%s271 + $0x28] sm:$0xff] %v3289
        %3354 = vst [vmem:[%s271 + $0x30] sm:$0xff] %v3290
        %3355 = vst [vmem:[%s271 + $0x38] sm:$0xff] %v3291
        %3356 = vst [vmem:[%s271 + $0x40] sm:$0xff] %v3292
        %3357 = vst [vmem:[%s271 + $0x48] sm:$0xff] %v3293
        %3358 = vst [vmem:[%s271 + $0x50] sm:$0xff] %v3294
        %3359 = vst [vmem:[%s271 + $0x58] sm:$0xff] %v3295
        %3360 = vst [vmem:[%s271 + $0x60] sm:$0xff] %v3296
        %3361 = vst [vmem:[%s271 + $0x68] sm:$0xff] %v3297
        %3362 = vst [vmem:[%s271 + $0x70] sm:$0xff] %v3298
        %3363 = vst [vmem:[%s271 + $0x78] sm:$0xff] %v3299
        %3364 = vst [vmem:[%s271 + $0x80] sm:$0xff] %v3300
        %3365 = vst [vmem:[%s271 + $0x88] sm:$0xff] %v3301
        %3366 = vst [vmem:[%s271 + $0x90] sm:$0xff] %v3302
        %3367 = vst [vmem:[%s271 + $0x98] sm:$0xff] %v3303
        %3368 = vst [vmem:[%s271 + $0xa0] sm:$0xff] %v3304
        %3369 = vst [vmem:[%s271 + $0xa8] sm:$0xff] %v3305
        %3370 = vst [vmem:[%s271 + $0xb0] sm:$0xff] %v3306
        %3371 = vst [vmem:[%s271 + $0xb8] sm:$0xff] %v3307
        %3372 = vst [vmem:[%s271 + $0xc0] sm:$0xff] %v3308
        %3373 = vst [vmem:[%s271 + $0xc8] sm:$0xff] %v3309
        %3374 = vst [vmem:[%s271 + $0xd0] sm:$0xff] %v3310
        %3375 = vst [vmem:[%s271 + $0xd8] sm:$0xff] %v3311
        %3376 = vst [vmem:[%s271 + $0xe0] sm:$0xff] %v3312
        %3377 = vst [vmem:[%s271 + $0xe8] sm:$0xff] %v3313
        %3378 = vst [vmem:[%s271 + $0xf0] sm:$0xff] %v3314
        %3379 = vst [vmem:[%s271 + $0xf8] sm:$0xff] %v3315
        %3380 = vst [vmem:[%s271 + $0x100] sm:$0xff] %v3316
        %3381 = vst [vmem:[%s271 + $0x108] sm:$0xff] %v3317
        %3382 = vst [vmem:[%s271 + $0x110] sm:$0xff] %v3318
        %3383 = vst [vmem:[%s271 + $0x118] sm:$0xff] %v3319
        %3384 = vst [vmem:[%s271 + $0x120] sm:$0xff] %v3320
        %3385 = vst [vmem:[%s271 + $0x128] sm:$0xff] %v3321
        %3386 = vst [vmem:[%s271 + $0x130] sm:$0xff] %v3322
        %3387 = vst [vmem:[%s271 + $0x138] sm:$0xff] %v3323
        %3388 = vst [vmem:[%s271 + $0x140] sm:$0xff] %v3324
        %3389 = vst [vmem:[%s271 + $0x148] sm:$0xff] %v3325
        %3390 = vst [vmem:[%s271 + $0x150] sm:$0xff] %v3326
        %3391 = vst [vmem:[%s271 + $0x158] sm:$0xff] %v3327
        %3392 = vst [vmem:[%s271 + $0x160] sm:$0xff] %v3328
        %3393 = vst [vmem:[%s271 + $0x168] sm:$0xff] %v3329
        %3394 = vst [vmem:[%s271 + $0x170] sm:$0xff] %v3330
        %3395 = vst [vmem:[%s271 + $0x178] sm:$0xff] %v3331
        %3396 = vst [vmem:[%s271 + $0x180] sm:$0xff] %v3332
        %3397 = vst [vmem:[%s271 + $0x188] sm:$0xff] %v3333
        %3398 = vst [vmem:[%s271 + $0x190] sm:$0xff] %v3334
        %3399 = vst [vmem:[%s271 + $0x198] sm:$0xff] %v3335
        %3400 = vst [vmem:[%s271 + $0x1a0] sm:$0xff] %v3336
        %3401 = vst [vmem:[%s271 + $0x1a8] sm:$0xff] %v3337
        %3402 = vst [vmem:[%s271 + $0x1b0] sm:$0xff] %v3338
        %3403 = vst [vmem:[%s271 + $0x1b8] sm:$0xff] %v3339
        %3404 = vst [vmem:[%s271 + $0x1c0] sm:$0xff] %v3340
        %3405 = vst [vmem:[%s271 + $0x1c8] sm:$0xff] %v3341
        %3406 = vst [vmem:[%s271 + $0x1d0] sm:$0xff] %v3342
        %3407 = vst [vmem:[%s271 + $0x1d8] sm:$0xff] %v3343
        %3408 = vst [vmem:[%s271 + $0x1e0] sm:$0xff] %v3344
        %3409 = vst [vmem:[%s271 + $0x1e8] sm:$0xff] %v3345
        %3410 = vst [vmem:[%s271 + $0x1f0] sm:$0xff] %v3346
        %3411 = vst [vmem:[%s271 + $0x1f8] sm:$0xff] %v3347
        %s3412 = sand.u32 %s141, 1
        %s3413 = scalar_lea.sflag [#allocation3], %s3412
        %s3414 = sand.u32 %s141, 1
        %s3415 = smul.addr %s3414, 512
        %s3416 = scalar_lea.vmem [#allocation2], %s3415
        %s3417 = sand.u32 %s169, 1
        %s3418 = scalar_lea.sflag [#allocation5], %s3417
        %s3419 = sand.u32 %s169, 1
        %s3420 = smul.addr %s3419, 512
        %s3421 = scalar_lea.vmem [#allocation4], %s3420
        // Predicated region
        $region37: #{tpu_custom_call.1} parent=35 // pred_check
          %p3422 = pneg %p151
        $region38: #{tpu_custom_call.1} parent=35 // pred_check_branch
          %3424 = sbr.rel (%p3422) target = $region40
        $region39: #{tpu_custom_call.1} parent=35 // pred_region
          %s3425 = smul.u32 2, %s28
          %3427 = vsyncadd %s3413, 0
          %s3428 = smul.addr %s27, 64
          %s3429 = sadd.s32 %s3425, %s3428
          %s3430 = smul.addr %s3429, 8
          %s3431 = scalar_lea.hbm %s4, %s3430
          %s3432 = sshll.u32 %s3416, 4
          %s3433 = int_to_ptr.vmem [resolvable:$true] %s3432
          %s3434 = sshll.u32 %s3431, 4
          %s3435 = int_to_ptr.hbm [resolvable:$true] %s3434
          %3440 = dma.vmem_to_hbm [thread:$0]  %s3433, 8192, %s3435, %s3413, 256, 256, 16
        $region40: #{tpu_custom_call.1} parent=35 // pred_fallthru
          _
        // Predicated region
        $region41: #{tpu_custom_call.1} parent=35 // pred_check
          %p3441 = pneg %p179
        $region42: #{tpu_custom_call.1} parent=35 // pred_check_branch
          %3443 = sbr.rel (%p3441) target = $region44
        $region43: #{tpu_custom_call.1} parent=35 // pred_region
          %s3444 = smul.u32 2, %s28
          %3446 = vsyncadd %s3418, 0
          %s3447 = smul.addr %s27, 64
          %s3448 = sadd.s32 %s3444, %s3447
          %s3449 = smul.addr %s3448, 8
          %s3450 = scalar_lea.hbm %s5, %s3449
          %s3451 = sshll.u32 %s3421, 4
          %s3452 = int_to_ptr.vmem [resolvable:$true] %s3451
          %s3453 = sshll.u32 %s3450, 4
          %s3454 = int_to_ptr.hbm [resolvable:$true] %s3453
          %3459 = dma.vmem_to_hbm [thread:$0]  %s3452, 8192, %s3454, %s3418, 256, 256, 16
        $region44: #{tpu_custom_call.1} parent=35 // pred_fallthru
          _
      $region36: #{tpu_custom_call.1} parent=5 // pred_fallthru
        _
      %p3460 = scmp.le.s32.totalorder 2, %s18
      // Predicated region
      $region45: #{tpu_custom_call.1} parent=5 // pred_check
        %p3461 = pneg %p3460
      $region46: #{tpu_custom_call.1} parent=5 // pred_check_branch
        %3463 = sbr.rel (%p3461) target = $region48
      $region47: #{tpu_custom_call.1} parent=5 // pred_region
        %s3464 = ssub.s32 %s18, 2
        // Predicated region
        $region49: #{tpu_custom_call.1} parent=47 // pred_check
          %p3465 = pneg %p157
        $region50: #{tpu_custom_call.1} parent=47 // pred_check_branch
          %3467 = sbr.rel (%p3465) target = $region52
        $region51: #{tpu_custom_call.1} parent=47 // pred_region
          %s3468 = sand.u32 %s142, 1
          %s3469 = scalar_lea.sflag [#allocation3], %s3468
          %s3470 = sand.u32 %s142, 1
          %s3471 = smul.addr %s3470, 512
          %s3472 = scalar_lea.vmem [#allocation2], %s3471
          %3474 = dma.done %s3469, 8192
        $region52: #{tpu_custom_call.1} parent=47 // pred_fallthru
          _
        // Predicated region
        $region53: #{tpu_custom_call.1} parent=47 // pred_check
          %p3475 = pneg %p185
        $region54: #{tpu_custom_call.1} parent=47 // pred_check_branch
          %3477 = sbr.rel (%p3475) target = $region56
        $region55: #{tpu_custom_call.1} parent=47 // pred_region
          %s3478 = sand.u32 %s170, 1
          %s3479 = scalar_lea.sflag [#allocation5], %s3478
          %s3480 = sand.u32 %s170, 1
          %s3481 = smul.addr %s3480, 512
          %s3482 = scalar_lea.vmem [#allocation4], %s3481
          %3484 = dma.done %s3479, 8192
        $region56: #{tpu_custom_call.1} parent=47 // pred_fallthru
          _
      $region48: #{tpu_custom_call.1} parent=5 // pred_fallthru
        _
    $region6: #{tpu_custom_call.1} parent=1 // loop_footer
      %s22 = sadd.s32 1, %s18
    $region7: #{tpu_custom_call.1} parent=1 // loop_footer_branch
      %17 = sbr.rel target = $region3
    $region8: #{tpu_custom_call.1} parent=1 // loop_exit
      _
    %3485 = vsyncpa [#allocation3], 1
    %s3486 = scalar_lea.sflag [#allocation3], 1
    %3487 = vsyncpa %s3486, 1
    %3488 = vsyncpa [#allocation5], 1
    %s3489 = scalar_lea.sflag [#allocation5], 1
    %3490 = vsyncpa %s3489, 1

</llo_original>
